<compile_context>
chip_gen: v7x
topology: tpu7x:2x2x1
jax: 0.10.0
libtpu: 0.0.40
codegen_flags: <defaults>
</compile_context>

<pallas_src>
import functools
import math

import jax
import jax.numpy as jnp
from jax import lax
from jax.experimental import pallas as pl
from jax.experimental.pallas import tpu as pltpu

EPS = 1e-5


def _layer_norm(v, g, b):
    mu = jnp.mean(v, axis=-1, keepdims=True)
    var = jnp.mean((v - mu) ** 2, axis=-1, keepdims=True)
    return (v - mu) * lax.rsqrt(var + EPS) * g + b


# ----------------------------------------------------------------------------
# Fully fused encoder kernel: grid = (num_blocks,)
# ----------------------------------------------------------------------------
def encoder_fused_kernel(
    # inputs
    x_ref, pos_ref,
    g1_ref, b1_ref, wqkv_ref, bqkv_ref, wo_ref, bo_ref,
    g2_ref, b2_ref, w1_ref, bf1_ref, w2_ref, bf2_ref,
    gn_ref, bn_ref,
    # outputs
    out_ref, attn_ref,
    # scratch (persistent across grid iterations)
    x_sc, ctx_sc,
    *, batch, patch_len, num_heads,
):
    layer = pl.program_id(0)
    n_layers = pl.num_programs(0)
    B, L, H = batch, patch_len, num_heads
    D = x_sc.shape[-1]
    dh = D // H
    scale = 1.0 / math.sqrt(dh)

    # ---- layer-0 prologue: fused positional-embedding add, x -> VMEM resident ----
    @pl.when(layer == 0)
    def _init():
        pos = pos_ref[...].astype(jnp.float32)                 # (L, D)
        for b in range(B):
            x_sc[b * L:(b + 1) * L, :] = x_ref[b].astype(jnp.float32) + pos
        # dropout on embeddings: identity at inference

    x = x_sc[...]                                              # (B*L, D) f32

    # ---- pre-norm + fused QKV projection over the whole (B*L, D) slab ----
    normed = _layer_norm(x, g1_ref[0], b1_ref[0])
    qkv = jnp.dot(normed, wqkv_ref[0], preferred_element_type=jnp.float32) + bqkv_ref[0]
    q = qkv[:, 0:D]
    k = qkv[:, D:2 * D]
    v = qkv[:, 2 * D:3 * D]

    # ---- per (batch, head) scaled dot-product attention (static unrolled) ----
    for b in range(B):
        r0 = b * L
        for h in range(H):
            c0 = h * dh
            qh = q[r0:r0 + L, c0:c0 + dh]                      # (L, dh)
            kh = k[r0:r0 + L, c0:c0 + dh]
            vh = v[r0:r0 + L, c0:c0 + dh]
            # q @ k^T expressed as an NT contraction (no materialized transpose)
            s = lax.dot_general(qh, kh, (((1,), (1,)), ((), ())),
                                preferred_element_type=jnp.float32) * scale
            s = s - jnp.max(s, axis=-1, keepdims=True)
            p = jnp.exp(s)
            p = p * pl.reciprocal(jnp.sum(p, axis=-1, keepdims=True), approx=True)
            if b == 0:
                # only batch element 0 is consumed by the reference module
                attn_ref[0, h] = p.astype(attn_ref.dtype)
            # write head context directly into the VMEM scratch slab (no concat)
            ctx_sc[r0:r0 + L, c0:c0 + dh] = jnp.dot(
                p, vh, preferred_element_type=jnp.float32)

    attn_out = jnp.dot(ctx_sc[...], wo_ref[0],
                       preferred_element_type=jnp.float32) + bo_ref[0]
    x = x + attn_out                                           # dropout1: identity

    # ---- pre-norm FFN ----
    normed2 = _layer_norm(x, g2_ref[0], b2_ref[0])
    hid = jnp.dot(normed2, w1_ref[0], preferred_element_type=jnp.float32) + bf1_ref[0]
    hid = jnp.maximum(hid, 0.0)                                # ReLU
    ffn = jnp.dot(hid, w2_ref[0], preferred_element_type=jnp.float32) + bf2_ref[0]
    x = x + ffn                                                # dropout2: identity

    x_sc[...] = x

    # ---- last-layer epilogue: CLS-token LayerNorm fused here (no extra launch) ----
    @pl.when(layer == n_layers - 1)
    def _final():
        for b in range(B):
            cls = x[b * L:b * L + 1, :]                        # (1, D) CLS token
            out_ref[b:b + 1, :] = _layer_norm(
                cls, gn_ref[...], bn_ref[...]).astype(out_ref.dtype)


# ----------------------------------------------------------------------------
# Wrapper: one pallas_call for the whole encoder
# ----------------------------------------------------------------------------
def encoder_forward(x, params, num_heads, save_attn_pattern=False):
    B, L, D = x.shape
    nb = params["wqkv"].shape[0]
    d_ffn = params["w_ffn1"].shape[-1]

    def full(shape):
        rank = len(shape)
        return pl.BlockSpec(shape, lambda l, _r=rank: (0,) * _r)

    def per_layer(shape):
        rank = len(shape)
        return pl.BlockSpec((1,) + shape, lambda l, _r=rank: (l,) + (0,) * _r)

    in_specs = [
        full((B, L, D)),                 # x (read at layer 0 only)
        full((L, D)),                    # pos embedding
        per_layer((1, D)),               # ln1 gamma   (nb, 1, D)
        per_layer((1, D)),               # ln1 beta
        per_layer((D, 3 * D)),           # fused Wqkv  (nb, D, 3D)
        per_layer((1, 3 * D)),           # fused bqkv
        per_layer((D, D)),               # Wo
        per_layer((1, D)),               # bo
        per_layer((1, D)),               # ln2 gamma
        per_layer((1, D)),               # ln2 beta
        per_layer((D, d_ffn)),           # FFN W1
        per_layer((1, d_ffn)),           # FFN b1
        per_layer((d_ffn, D)),           # FFN W2
        per_layer((1, D)),               # FFN b2
        full((1, D)),                    # final norm gamma
        full((1, D)),                    # final norm beta
    ]
    out_specs = (
        pl.BlockSpec((B, D), lambda l: (0, 0)),                       # CLS output (resident)
        pl.BlockSpec((1, num_heads, L, L), lambda l: (l, 0, 0, 0)),   # attn[block]
    )
    out_shape = (
        jax.ShapeDtypeStruct((B, D), x.dtype),
        jax.ShapeDtypeStruct((nb, num_heads, L, L), jnp.float32),
    )
    kernel = functools.partial(
        encoder_fused_kernel, batch=B, patch_len=L, num_heads=num_heads)

    out, attn = pl.pallas_call(
        kernel,
        grid=(nb,),
        in_specs=in_specs,
        out_specs=out_specs,
        out_shape=out_shape,
        scratch_shapes=[
            pltpu.VMEM((B * L, D), jnp.float32),   # resident activations x
            pltpu.VMEM((B * L, D), jnp.float32),   # attention context slab
        ],
        compiler_params=pltpu.CompilerParams(dimension_semantics=("arbitrary",)),
    )(
        x, params["pos_embedding"],
        params["ln1_g"], params["ln1_b"],
        params["wqkv"], params["bqkv"],
        params["wo"], params["bo"],
        params["ln2_g"], params["ln2_b"],
        params["w_ffn1"], params["b_ffn1"],
        params["w_ffn2"], params["b_ffn2"],
        params["norm_g"], params["norm_b"],
    )

    if save_attn_pattern:
        return out, attn
    # reference returns an empty tensor when save_attn_pattern=False
    return out, jnp.zeros((0,), jnp.float32)


# ----------------------------------------------------------------------------
# Parameter init (deterministic, synthetic) — weights stacked along a layer axis
# ----------------------------------------------------------------------------
def init_params(key, patch_len, num_blocks, d_model, d_ffn):
    keys = jax.random.split(key, 1 + num_blocks)
    s_d = 1.0 / math.sqrt(d_model)
    s_f = 1.0 / math.sqrt(d_ffn)

    wqkv, wo, w1, w2 = [], [], [], []
    for i in range(num_blocks):
        ks = jax.random.split(keys[1 + i], 6)
        wq = s_d * jax.random.normal(ks[0], (d_model, d_model), jnp.float32)
        wk = s_d * jax.random.normal(ks[1], (d_model, d_model), jnp.float32)
        wv = s_d * jax.random.normal(ks[2], (d_model, d_model), jnp.float32)
        wqkv.append(jnp.concatenate([wq, wk, wv], axis=1))                 # (D, 3D)
        wo.append(s_d * jax.random.normal(ks[3], (d_model, d_model), jnp.float32))
        w1.append(s_d * jax.random.normal(ks[4], (d_model, d_ffn), jnp.float32))
        w2.append(s_f * jax.random.normal(ks[5], (d_ffn, d_model), jnp.float32))

    nb = num_blocks
    return {
        "pos_embedding": 0.02 * jax.random.normal(keys[0], (patch_len, d_model), jnp.float32),
        "ln1_g": jnp.ones((nb, 1, d_model), jnp.float32),
        "ln1_b": jnp.zeros((nb, 1, d_model), jnp.float32),
        "wqkv": jnp.stack(wqkv, axis=0),                                   # (nb, D, 3D)
        "bqkv": jnp.zeros((nb, 1, 3 * d_model), jnp.float32),
        "wo": jnp.stack(wo, axis=0),                                       # (nb, D, D)
        "bo": jnp.zeros((nb, 1, d_model), jnp.float32),
        "ln2_g": jnp.ones((nb, 1, d_model), jnp.float32),
        "ln2_b": jnp.zeros((nb, 1, d_model), jnp.float32),
        "w_ffn1": jnp.stack(w1, axis=0),                                   # (nb, D, d_ffn)
        "b_ffn1": jnp.zeros((nb, 1, d_ffn), jnp.float32),
        "w_ffn2": jnp.stack(w2, axis=0),                                   # (nb, d_ffn, D)
        "b_ffn2": jnp.zeros((nb, 1, d_model), jnp.float32),
        "norm_g": jnp.ones((1, d_model), jnp.float32),
        "norm_b": jnp.zeros((1, d_model), jnp.float32),
    }


if __name__ == "__main__":
    # small shapes consistent with the module
    batch, patch_len, d_model, d_ffn, num_heads, num_blocks = 2, 8, 32, 64, 4, 2

    key = jax.random.PRNGKey(0)
    k_param, k_x = jax.random.split(key)
    params = init_params(k_param, patch_len, num_blocks, d_model, d_ffn)
    x = jax.random.normal(k_x, (batch, patch_len, d_model), jnp.float32)

    out, attn_patterns = encoder_forward(x, params, num_heads, save_attn_pattern=True)
    jax.block_until_ready(out)
    jax.block_until_ready(attn_patterns)

    assert out.shape == (batch, d_model)
    assert attn_patterns.shape == (num_blocks, num_heads, patch_len, patch_len)
    assert bool(jnp.all(jnp.isfinite(out)))
    assert bool(jnp.all(jnp.isfinite(attn_patterns)))
    print("KERNEL_OK")
</pallas_src>

<mosaic_0001>
module attributes {stable_mosaic.version = 11 : i64} {
  func.func @encoder_fused_kernel(%arg0: i32, %arg1: memref<2x8x32xf32, #tpu.memory_space<vmem>>, %arg2: memref<8x32xf32, #tpu.memory_space<vmem>>, %arg3: memref<1x1x32xf32, #tpu.memory_space<vmem>>, %arg4: memref<1x1x32xf32, #tpu.memory_space<vmem>>, %arg5: memref<1x32x96xf32, #tpu.memory_space<vmem>>, %arg6: memref<1x1x96xf32, #tpu.memory_space<vmem>>, %arg7: memref<1x32x32xf32, #tpu.memory_space<vmem>>, %arg8: memref<1x1x32xf32, #tpu.memory_space<vmem>>, %arg9: memref<1x1x32xf32, #tpu.memory_space<vmem>>, %arg10: memref<1x1x32xf32, #tpu.memory_space<vmem>>, %arg11: memref<1x32x64xf32, #tpu.memory_space<vmem>>, %arg12: memref<1x1x64xf32, #tpu.memory_space<vmem>>, %arg13: memref<1x64x32xf32, #tpu.memory_space<vmem>>, %arg14: memref<1x1x32xf32, #tpu.memory_space<vmem>>, %arg15: memref<1x32xf32, #tpu.memory_space<vmem>>, %arg16: memref<1x32xf32, #tpu.memory_space<vmem>>, %arg17: memref<2x32xf32, #tpu.memory_space<vmem>>, %arg18: memref<1x4x8x8xf32, #tpu.memory_space<vmem>>, %arg19: memref<16x32xf32, #tpu.memory_space<vmem>>, %arg20: memref<16x32xf32, #tpu.memory_space<vmem>>) attributes {dimension_semantics = [#tpu.dimension_semantics<arbitrary>], iteration_bounds = array<i64: 2>, scalar_prefetch = 0 : i64, scratch_operands = 2 : i64, tpu.core_type = #tpu.core_type<tc>, window_params = [{pipeline_mode = #tpu.pipeline_mode<synchronous>, transform_indices = @transform_0, window_bounds = array<i64: 2, 8, 32>}, {pipeline_mode = #tpu.pipeline_mode<synchronous>, transform_indices = @transform_1, window_bounds = array<i64: 8, 32>}, {transform_indices = @transform_2, window_bounds = array<i64: 1, 1, 32>}, {transform_indices = @transform_3, window_bounds = array<i64: 1, 1, 32>}, {transform_indices = @transform_4, window_bounds = array<i64: 1, 32, 96>}, {transform_indices = @transform_5, window_bounds = array<i64: 1, 1, 96>}, {transform_indices = @transform_6, window_bounds = array<i64: 1, 32, 32>}, {transform_indices = @transform_7, window_bounds = array<i64: 1, 1, 32>}, {transform_indices = @transform_8, window_bounds = array<i64: 1, 1, 32>}, {transform_indices = @transform_9, window_bounds = array<i64: 1, 1, 32>}, {transform_indices = @transform_10, window_bounds = array<i64: 1, 32, 64>}, {transform_indices = @transform_11, window_bounds = array<i64: 1, 1, 64>}, {transform_indices = @transform_12, window_bounds = array<i64: 1, 64, 32>}, {transform_indices = @transform_13, window_bounds = array<i64: 1, 1, 32>}, {pipeline_mode = #tpu.pipeline_mode<synchronous>, transform_indices = @transform_14, window_bounds = array<i64: 1, 32>}, {pipeline_mode = #tpu.pipeline_mode<synchronous>, transform_indices = @transform_15, window_bounds = array<i64: 1, 32>}, {pipeline_mode = #tpu.pipeline_mode<synchronous>, transform_indices = @transform_16, window_bounds = array<i64: 2, 32>}, {transform_indices = @transform_17, window_bounds = array<i64: 1, 4, 8, 8>}]} {
    %c0_i32 = arith.constant 0 : i32
    %0 = arith.cmpi eq, %arg0, %c0_i32 : i32
    %1 = arith.extui %0 : i1 to i32
    %c0_i32_0 = arith.constant 0 : i32
    %2 = arith.cmpi ne, %1, %c0_i32_0 : i32
    scf.if %2 {
      %c0_123 = arith.constant 0 : index
      %c0_124 = arith.constant 0 : index
      %252 = vector.load %arg2[%c0_123, %c0_124] : memref<8x32xf32, #tpu.memory_space<vmem>>, vector<8x32xf32>
      %c0_125 = arith.constant 0 : index
      %c0_126 = arith.constant 0 : index
      %c0_127 = arith.constant 0 : index
      %253 = vector.load %arg1[%c0_125, %c0_126, %c0_127] : memref<2x8x32xf32, #tpu.memory_space<vmem>>, vector<1x8x32xf32>
      %254 = vector.shape_cast %253 : vector<1x8x32xf32> to vector<8x32xf32>
      %255 = arith.addf %254, %252 : vector<8x32xf32>
      %c0_128 = arith.constant 0 : index
      %c0_129 = arith.constant 0 : index
      %256 = vector.load %arg19[%c0_128, %c0_129] : memref<16x32xf32, #tpu.memory_space<vmem>>, vector<8x32xf32>
      tpu.vector_store %arg19[%c0_128, %c0_129], %255 {strides = array<i32>} : memref<16x32xf32, #tpu.memory_space<vmem>>, vector<8x32xf32>,
      %c1_130 = arith.constant 1 : index
      %c0_131 = arith.constant 0 : index
      %c0_132 = arith.constant 0 : index
      %257 = vector.load %arg1[%c1_130, %c0_131, %c0_132] : memref<2x8x32xf32, #tpu.memory_space<vmem>>, vector<1x8x32xf32>
      %258 = vector.shape_cast %257 : vector<1x8x32xf32> to vector<8x32xf32>
      %259 = arith.addf %258, %252 : vector<8x32xf32>
      %c8_133 = arith.constant 8 : index
      %c0_134 = arith.constant 0 : index
      %260 = vector.load %arg19[%c8_133, %c0_134] : memref<16x32xf32, #tpu.memory_space<vmem>>, vector<8x32xf32>
      tpu.vector_store %arg19[%c8_133, %c0_134], %259 {strides = array<i32>} : memref<16x32xf32, #tpu.memory_space<vmem>>, vector<8x32xf32>,
    } else {
    }
    %c0 = arith.constant 0 : index
    %c0_1 = arith.constant 0 : index
    %3 = vector.load %arg19[%c0, %c0_1] : memref<16x32xf32, #tpu.memory_space<vmem>>, vector<16x32xf32>
    %c0_2 = arith.constant 0 : index
    %c0_3 = arith.constant 0 : index
    %c0_4 = arith.constant 0 : index
    %4 = vector.load %arg3[%c0_2, %c0_3, %c0_4] : memref<1x1x32xf32, #tpu.memory_space<vmem>>, vector<1x1x32xf32>
    %5 = vector.shape_cast %4 : vector<1x1x32xf32> to vector<1x32xf32>
    %c0_5 = arith.constant 0 : index
    %c0_6 = arith.constant 0 : index
    %c0_7 = arith.constant 0 : index
    %6 = vector.load %arg4[%c0_5, %c0_6, %c0_7] : memref<1x1x32xf32, #tpu.memory_space<vmem>>, vector<1x1x32xf32>
    %7 = vector.shape_cast %6 : vector<1x1x32xf32> to vector<1x32xf32>
    %cst = arith.constant dense<0.000000e+00> : vector<16xf32>
    %8 = vector.multi_reduction <add>, %3, %cst [1] : vector<16x32xf32> to vector<16xf32>
    %9 = vector.shape_cast %8 : vector<16xf32> to vector<16x1xf32>
    %cst_8 = arith.constant 3.200000e+01 : f32
    %10 = vector.broadcast %cst_8 : f32 to vector<16x1xf32>
    %11 = arith.divf %9, %10 : vector<16x1xf32>
    %12 = vector.broadcast %11 : vector<16x1xf32> to vector<16x32xf32>
    %13 = arith.subf %3, %12 : vector<16x32xf32>
    %14 = arith.mulf %13, %13 : vector<16x32xf32>
    %cst_9 = arith.constant dense<0.000000e+00> : vector<16xf32>
    %15 = vector.multi_reduction <add>, %14, %cst_9 [1] : vector<16x32xf32> to vector<16xf32>
    %16 = vector.shape_cast %15 : vector<16xf32> to vector<16x1xf32>
    %cst_10 = arith.constant 3.200000e+01 : f32
    %17 = vector.broadcast %cst_10 : f32 to vector<16x1xf32>
    %18 = arith.divf %16, %17 : vector<16x1xf32>
    %19 = vector.broadcast %11 : vector<16x1xf32> to vector<16x32xf32>
    %20 = arith.subf %3, %19 : vector<16x32xf32>
    %cst_11 = arith.constant 9.99999974E-6 : f32
    %21 = vector.broadcast %cst_11 : f32 to vector<16x1xf32>
    %22 = arith.addf %18, %21 : vector<16x1xf32>
    %23 = math.rsqrt %22 : vector<16x1xf32>
    %24 = vector.broadcast %23 : vector<16x1xf32> to vector<16x32xf32>
    %25 = arith.mulf %20, %24 : vector<16x32xf32>
    %26 = vector.broadcast %5 : vector<1x32xf32> to vector<16x32xf32>
    %27 = arith.mulf %25, %26 : vector<16x32xf32>
    %28 = vector.broadcast %7 : vector<1x32xf32> to vector<16x32xf32>
    %29 = arith.addf %27, %28 : vector<16x32xf32>
    %c0_12 = arith.constant 0 : index
    %c0_13 = arith.constant 0 : index
    %c0_14 = arith.constant 0 : index
    %30 = vector.load %arg5[%c0_12, %c0_13, %c0_14] : memref<1x32x96xf32, #tpu.memory_space<vmem>>, vector<1x32x96xf32>
    %31 = vector.shape_cast %30 : vector<1x32x96xf32> to vector<32x96xf32>
    %cst_15 = arith.constant dense<0.000000e+00> : vector<16x96xf32>
    %32 = tpu.matmul %29, %31, %cst_15 {dimension_numbers = #tpu.dot_dimension_numbers<[1], [0], [0], [1], [0, 0, 1, 1], [], []>} : vector<16x32xf32>, vector<32x96xf32>, vector<16x96xf32> -> vector<16x96xf32>
    %c0_16 = arith.constant 0 : index
    %c0_17 = arith.constant 0 : index
    %c0_18 = arith.constant 0 : index
    %33 = vector.load %arg6[%c0_16, %c0_17, %c0_18] : memref<1x1x96xf32, #tpu.memory_space<vmem>>, vector<1x1x96xf32>
    %34 = vector.shape_cast %33 : vector<1x1x96xf32> to vector<1x96xf32>
    %35 = vector.broadcast %34 : vector<1x96xf32> to vector<16x96xf32>
    %36 = arith.addf %32, %35 : vector<16x96xf32>
    %37 = vector.extract_strided_slice %36 {offsets = [0, 0], sizes = [16, 32], strides = [1, 1]} : vector<16x96xf32> to vector<16x32xf32>
    %38 = vector.extract_strided_slice %36 {offsets = [0, 32], sizes = [16, 32], strides = [1, 1]} : vector<16x96xf32> to vector<16x32xf32>
    %39 = vector.extract_strided_slice %36 {offsets = [0, 64], sizes = [16, 32], strides = [1, 1]} : vector<16x96xf32> to vector<16x32xf32>
    %40 = vector.extract_strided_slice %37 {offsets = [0, 0], sizes = [8, 8], strides = [1, 1]} : vector<16x32xf32> to vector<8x8xf32>
    %41 = vector.extract_strided_slice %38 {offsets = [0, 0], sizes = [8, 8], strides = [1, 1]} : vector<16x32xf32> to vector<8x8xf32>
    %42 = vector.extract_strided_slice %39 {offsets = [0, 0], sizes = [8, 8], strides = [1, 1]} : vector<16x32xf32> to vector<8x8xf32>
    %cst_19 = arith.constant dense<0.000000e+00> : vector<8x8xf32>
    %43 = tpu.matmul %40, %41, %cst_19 {dimension_numbers = #tpu.dot_dimension_numbers<[1], [1], [0], [0], [0, 0, 1, 0], [], []>} : vector<8x8xf32>, vector<8x8xf32>, vector<8x8xf32> -> vector<8x8xf32>
    %cst_20 = arith.constant 0.353553385 : f32
    %44 = vector.broadcast %cst_20 : f32 to vector<8x8xf32>
    %45 = arith.mulf %43, %44 : vector<8x8xf32>
    %cst_21 = arith.constant dense<0xFF800000> : vector<8xf32>
    %46 = vector.multi_reduction <maximumf>, %45, %cst_21 [1] : vector<8x8xf32> to vector<8xf32>
    %47 = vector.shape_cast %46 : vector<8xf32> to vector<8x1xf32>
    %48 = vector.broadcast %47 : vector<8x1xf32> to vector<8x8xf32>
    %49 = arith.subf %45, %48 : vector<8x8xf32>
    %50 = math.exp %49 : vector<8x8xf32>
    %cst_22 = arith.constant dense<0.000000e+00> : vector<8xf32>
    %51 = vector.multi_reduction <add>, %50, %cst_22 [1] : vector<8x8xf32> to vector<8xf32>
    %52 = vector.shape_cast %51 : vector<8xf32> to vector<8x1xf32>
    %53 = tpu.reciprocal %52 {approx = true} : vector<8x1xf32> -> vector<8x1xf32>
    %54 = vector.broadcast %53 : vector<8x1xf32> to vector<8x8xf32>
    %55 = arith.mulf %50, %54 : vector<8x8xf32>
    %c0_23 = arith.constant 0 : index
    %c0_24 = arith.constant 0 : index
    %c0_25 = arith.constant 0 : index
    %c0_26 = arith.constant 0 : index
    %56 = vector.load %arg18[%c0_23, %c0_24, %c0_25, %c0_26] : memref<1x4x8x8xf32, #tpu.memory_space<vmem>>, vector<1x1x8x8xf32>
    %57 = vector.shape_cast %56 : vector<1x1x8x8xf32> to vector<8x8xf32>
    %58 = vector.shape_cast %55 : vector<8x8xf32> to vector<1x1x8x8xf32>
    tpu.vector_store %arg18[%c0_23, %c0_24, %c0_25, %c0_26], %58 {strides = array<i32>} : memref<1x4x8x8xf32, #tpu.memory_space<vmem>>, vector<1x1x8x8xf32>,
    %cst_27 = arith.constant dense<0.000000e+00> : vector<8x8xf32>
    %59 = tpu.matmul %55, %42, %cst_27 {dimension_numbers = #tpu.dot_dimension_numbers<[1], [0], [0], [1], [0, 0, 1, 1], [], []>} : vector<8x8xf32>, vector<8x8xf32>, vector<8x8xf32> -> vector<8x8xf32>
    %c0_28 = arith.constant 0 : index
    %c0_29 = arith.constant 0 : index
    %60 = vector.load %arg20[%c0_28, %c0_29] : memref<16x32xf32, #tpu.memory_space<vmem>>, vector<8x8xf32>
    tpu.vector_store %arg20[%c0_28, %c0_29], %59 {strides = array<i32>} : memref<16x32xf32, #tpu.memory_space<vmem>>, vector<8x8xf32>,
    %61 = vector.extract_strided_slice %37 {offsets = [0, 8], sizes = [8, 8], strides = [1, 1]} : vector<16x32xf32> to vector<8x8xf32>
    %62 = vector.extract_strided_slice %38 {offsets = [0, 8], sizes = [8, 8], strides = [1, 1]} : vector<16x32xf32> to vector<8x8xf32>
    %63 = vector.extract_strided_slice %39 {offsets = [0, 8], sizes = [8, 8], strides = [1, 1]} : vector<16x32xf32> to vector<8x8xf32>
    %cst_30 = arith.constant dense<0.000000e+00> : vector<8x8xf32>
    %64 = tpu.matmul %61, %62, %cst_30 {dimension_numbers = #tpu.dot_dimension_numbers<[1], [1], [0], [0], [0, 0, 1, 0], [], []>} : vector<8x8xf32>, vector<8x8xf32>, vector<8x8xf32> -> vector<8x8xf32>
    %cst_31 = arith.constant 0.353553385 : f32
    %65 = vector.broadcast %cst_31 : f32 to vector<8x8xf32>
    %66 = arith.mulf %64, %65 : vector<8x8xf32>
    %cst_32 = arith.constant dense<0xFF800000> : vector<8xf32>
    %67 = vector.multi_reduction <maximumf>, %66, %cst_32 [1] : vector<8x8xf32> to vector<8xf32>
    %68 = vector.shape_cast %67 : vector<8xf32> to vector<8x1xf32>
    %69 = vector.broadcast %68 : vector<8x1xf32> to vector<8x8xf32>
    %70 = arith.subf %66, %69 : vector<8x8xf32>
    %71 = math.exp %70 : vector<8x8xf32>
    %cst_33 = arith.constant dense<0.000000e+00> : vector<8xf32>
    %72 = vector.multi_reduction <add>, %71, %cst_33 [1] : vector<8x8xf32> to vector<8xf32>
    %73 = vector.shape_cast %72 : vector<8xf32> to vector<8x1xf32>
    %74 = tpu.reciprocal %73 {approx = true} : vector<8x1xf32> -> vector<8x1xf32>
    %75 = vector.broadcast %74 : vector<8x1xf32> to vector<8x8xf32>
    %76 = arith.mulf %71, %75 : vector<8x8xf32>
    %c0_34 = arith.constant 0 : index
    %c1 = arith.constant 1 : index
    %c0_35 = arith.constant 0 : index
    %c0_36 = arith.constant 0 : index
    %77 = vector.load %arg18[%c0_34, %c1, %c0_35, %c0_36] : memref<1x4x8x8xf32, #tpu.memory_space<vmem>>, vector<1x1x8x8xf32>
    %78 = vector.shape_cast %77 : vector<1x1x8x8xf32> to vector<8x8xf32>
    %79 = vector.shape_cast %76 : vector<8x8xf32> to vector<1x1x8x8xf32>
    tpu.vector_store %arg18[%c0_34, %c1, %c0_35, %c0_36], %79 {strides = array<i32>} : memref<1x4x8x8xf32, #tpu.memory_space<vmem>>, vector<1x1x8x8xf32>,
    %cst_37 = arith.constant dense<0.000000e+00> : vector<8x8xf32>
    %80 = tpu.matmul %76, %63, %cst_37 {dimension_numbers = #tpu.dot_dimension_numbers<[1], [0], [0], [1], [0, 0, 1, 1], [], []>} : vector<8x8xf32>, vector<8x8xf32>, vector<8x8xf32> -> vector<8x8xf32>
    %c0_38 = arith.constant 0 : index
    %c8 = arith.constant 8 : index
    %81 = vector.load %arg20[%c0_38, %c8] : memref<16x32xf32, #tpu.memory_space<vmem>>, vector<8x8xf32>
    tpu.vector_store %arg20[%c0_38, %c8], %80 {strides = array<i32>} : memref<16x32xf32, #tpu.memory_space<vmem>>, vector<8x8xf32>,
    %82 = vector.extract_strided_slice %37 {offsets = [0, 16], sizes = [8, 8], strides = [1, 1]} : vector<16x32xf32> to vector<8x8xf32>
    %83 = vector.extract_strided_slice %38 {offsets = [0, 16], sizes = [8, 8], strides = [1, 1]} : vector<16x32xf32> to vector<8x8xf32>
    %84 = vector.extract_strided_slice %39 {offsets = [0, 16], sizes = [8, 8], strides = [1, 1]} : vector<16x32xf32> to vector<8x8xf32>
    %cst_39 = arith.constant dense<0.000000e+00> : vector<8x8xf32>
    %85 = tpu.matmul %82, %83, %cst_39 {dimension_numbers = #tpu.dot_dimension_numbers<[1], [1], [0], [0], [0, 0, 1, 0], [], []>} : vector<8x8xf32>, vector<8x8xf32>, vector<8x8xf32> -> vector<8x8xf32>
    %cst_40 = arith.constant 0.353553385 : f32
    %86 = vector.broadcast %cst_40 : f32 to vector<8x8xf32>
    %87 = arith.mulf %85, %86 : vector<8x8xf32>
    %cst_41 = arith.constant dense<0xFF800000> : vector<8xf32>
    %88 = vector.multi_reduction <maximumf>, %87, %cst_41 [1] : vector<8x8xf32> to vector<8xf32>
    %89 = vector.shape_cast %88 : vector<8xf32> to vector<8x1xf32>
    %90 = vector.broadcast %89 : vector<8x1xf32> to vector<8x8xf32>
    %91 = arith.subf %87, %90 : vector<8x8xf32>
    %92 = math.exp %91 : vector<8x8xf32>
    %cst_42 = arith.constant dense<0.000000e+00> : vector<8xf32>
    %93 = vector.multi_reduction <add>, %92, %cst_42 [1] : vector<8x8xf32> to vector<8xf32>
    %94 = vector.shape_cast %93 : vector<8xf32> to vector<8x1xf32>
    %95 = tpu.reciprocal %94 {approx = true} : vector<8x1xf32> -> vector<8x1xf32>
    %96 = vector.broadcast %95 : vector<8x1xf32> to vector<8x8xf32>
    %97 = arith.mulf %92, %96 : vector<8x8xf32>
    %c0_43 = arith.constant 0 : index
    %c2 = arith.constant 2 : index
    %c0_44 = arith.constant 0 : index
    %c0_45 = arith.constant 0 : index
    %98 = vector.load %arg18[%c0_43, %c2, %c0_44, %c0_45] : memref<1x4x8x8xf32, #tpu.memory_space<vmem>>, vector<1x1x8x8xf32>
    %99 = vector.shape_cast %98 : vector<1x1x8x8xf32> to vector<8x8xf32>
    %100 = vector.shape_cast %97 : vector<8x8xf32> to vector<1x1x8x8xf32>
    tpu.vector_store %arg18[%c0_43, %c2, %c0_44, %c0_45], %100 {strides = array<i32>} : memref<1x4x8x8xf32, #tpu.memory_space<vmem>>, vector<1x1x8x8xf32>,
    %cst_46 = arith.constant dense<0.000000e+00> : vector<8x8xf32>
    %101 = tpu.matmul %97, %84, %cst_46 {dimension_numbers = #tpu.dot_dimension_numbers<[1], [0], [0], [1], [0, 0, 1, 1], [], []>} : vector<8x8xf32>, vector<8x8xf32>, vector<8x8xf32> -> vector<8x8xf32>
    %c0_47 = arith.constant 0 : index
    %c16 = arith.constant 16 : index
    %102 = vector.load %arg20[%c0_47, %c16] : memref<16x32xf32, #tpu.memory_space<vmem>>, vector<8x8xf32>
    tpu.vector_store %arg20[%c0_47, %c16], %101 {strides = array<i32>} : memref<16x32xf32, #tpu.memory_space<vmem>>, vector<8x8xf32>,
    %103 = vector.extract_strided_slice %37 {offsets = [0, 24], sizes = [8, 8], strides = [1, 1]} : vector<16x32xf32> to vector<8x8xf32>
    %104 = vector.extract_strided_slice %38 {offsets = [0, 24], sizes = [8, 8], strides = [1, 1]} : vector<16x32xf32> to vector<8x8xf32>
    %105 = vector.extract_strided_slice %39 {offsets = [0, 24], sizes = [8, 8], strides = [1, 1]} : vector<16x32xf32> to vector<8x8xf32>
    %cst_48 = arith.constant dense<0.000000e+00> : vector<8x8xf32>
    %106 = tpu.matmul %103, %104, %cst_48 {dimension_numbers = #tpu.dot_dimension_numbers<[1], [1], [0], [0], [0, 0, 1, 0], [], []>} : vector<8x8xf32>, vector<8x8xf32>, vector<8x8xf32> -> vector<8x8xf32>
    %cst_49 = arith.constant 0.353553385 : f32
    %107 = vector.broadcast %cst_49 : f32 to vector<8x8xf32>
    %108 = arith.mulf %106, %107 : vector<8x8xf32>
    %cst_50 = arith.constant dense<0xFF800000> : vector<8xf32>
    %109 = vector.multi_reduction <maximumf>, %108, %cst_50 [1] : vector<8x8xf32> to vector<8xf32>
    %110 = vector.shape_cast %109 : vector<8xf32> to vector<8x1xf32>
    %111 = vector.broadcast %110 : vector<8x1xf32> to vector<8x8xf32>
    %112 = arith.subf %108, %111 : vector<8x8xf32>
    %113 = math.exp %112 : vector<8x8xf32>
    %cst_51 = arith.constant dense<0.000000e+00> : vector<8xf32>
    %114 = vector.multi_reduction <add>, %113, %cst_51 [1] : vector<8x8xf32> to vector<8xf32>
    %115 = vector.shape_cast %114 : vector<8xf32> to vector<8x1xf32>
    %116 = tpu.reciprocal %115 {approx = true} : vector<8x1xf32> -> vector<8x1xf32>
    %117 = vector.broadcast %116 : vector<8x1xf32> to vector<8x8xf32>
    %118 = arith.mulf %113, %117 : vector<8x8xf32>
    %c0_52 = arith.constant 0 : index
    %c3 = arith.constant 3 : index
    %c0_53 = arith.constant 0 : index
    %c0_54 = arith.constant 0 : index
    %119 = vector.load %arg18[%c0_52, %c3, %c0_53, %c0_54] : memref<1x4x8x8xf32, #tpu.memory_space<vmem>>, vector<1x1x8x8xf32>
    %120 = vector.shape_cast %119 : vector<1x1x8x8xf32> to vector<8x8xf32>
    %121 = vector.shape_cast %118 : vector<8x8xf32> to vector<1x1x8x8xf32>
    tpu.vector_store %arg18[%c0_52, %c3, %c0_53, %c0_54], %121 {strides = array<i32>} : memref<1x4x8x8xf32, #tpu.memory_space<vmem>>, vector<1x1x8x8xf32>,
    %cst_55 = arith.constant dense<0.000000e+00> : vector<8x8xf32>
    %122 = tpu.matmul %118, %105, %cst_55 {dimension_numbers = #tpu.dot_dimension_numbers<[1], [0], [0], [1], [0, 0, 1, 1], [], []>} : vector<8x8xf32>, vector<8x8xf32>, vector<8x8xf32> -> vector<8x8xf32>
    %c0_56 = arith.constant 0 : index
    %c24 = arith.constant 24 : index
    %123 = vector.load %arg20[%c0_56, %c24] : memref<16x32xf32, #tpu.memory_space<vmem>>, vector<8x8xf32>
    tpu.vector_store %arg20[%c0_56, %c24], %122 {strides = array<i32>} : memref<16x32xf32, #tpu.memory_space<vmem>>, vector<8x8xf32>,
    %124 = vector.extract_strided_slice %37 {offsets = [8, 0], sizes = [8, 8], strides = [1, 1]} : vector<16x32xf32> to vector<8x8xf32>
    %125 = vector.extract_strided_slice %38 {offsets = [8, 0], sizes = [8, 8], strides = [1, 1]} : vector<16x32xf32> to vector<8x8xf32>
    %126 = vector.extract_strided_slice %39 {offsets = [8, 0], sizes = [8, 8], strides = [1, 1]} : vector<16x32xf32> to vector<8x8xf32>
    %cst_57 = arith.constant dense<0.000000e+00> : vector<8x8xf32>
    %127 = tpu.matmul %124, %125, %cst_57 {dimension_numbers = #tpu.dot_dimension_numbers<[1], [1], [0], [0], [0, 0, 1, 0], [], []>} : vector<8x8xf32>, vector<8x8xf32>, vector<8x8xf32> -> vector<8x8xf32>
    %cst_58 = arith.constant 0.353553385 : f32
    %128 = vector.broadcast %cst_58 : f32 to vector<8x8xf32>
    %129 = arith.mulf %127, %128 : vector<8x8xf32>
    %cst_59 = arith.constant dense<0xFF800000> : vector<8xf32>
    %130 = vector.multi_reduction <maximumf>, %129, %cst_59 [1] : vector<8x8xf32> to vector<8xf32>
    %131 = vector.shape_cast %130 : vector<8xf32> to vector<8x1xf32>
    %132 = vector.broadcast %131 : vector<8x1xf32> to vector<8x8xf32>
    %133 = arith.subf %129, %132 : vector<8x8xf32>
    %134 = math.exp %133 : vector<8x8xf32>
    %cst_60 = arith.constant dense<0.000000e+00> : vector<8xf32>
    %135 = vector.multi_reduction <add>, %134, %cst_60 [1] : vector<8x8xf32> to vector<8xf32>
    %136 = vector.shape_cast %135 : vector<8xf32> to vector<8x1xf32>
    %137 = tpu.reciprocal %136 {approx = true} : vector<8x1xf32> -> vector<8x1xf32>
    %138 = vector.broadcast %137 : vector<8x1xf32> to vector<8x8xf32>
    %139 = arith.mulf %134, %138 : vector<8x8xf32>
    %cst_61 = arith.constant dense<0.000000e+00> : vector<8x8xf32>
    %140 = tpu.matmul %139, %126, %cst_61 {dimension_numbers = #tpu.dot_dimension_numbers<[1], [0], [0], [1], [0, 0, 1, 1], [], []>} : vector<8x8xf32>, vector<8x8xf32>, vector<8x8xf32> -> vector<8x8xf32>
    %c8_62 = arith.constant 8 : index
    %c0_63 = arith.constant 0 : index
    %141 = vector.load %arg20[%c8_62, %c0_63] : memref<16x32xf32, #tpu.memory_space<vmem>>, vector<8x8xf32>
    tpu.vector_store %arg20[%c8_62, %c0_63], %140 {strides = array<i32>} : memref<16x32xf32, #tpu.memory_space<vmem>>, vector<8x8xf32>,
    %142 = vector.extract_strided_slice %37 {offsets = [8, 8], sizes = [8, 8], strides = [1, 1]} : vector<16x32xf32> to vector<8x8xf32>
    %143 = vector.extract_strided_slice %38 {offsets = [8, 8], sizes = [8, 8], strides = [1, 1]} : vector<16x32xf32> to vector<8x8xf32>
    %144 = vector.extract_strided_slice %39 {offsets = [8, 8], sizes = [8, 8], strides = [1, 1]} : vector<16x32xf32> to vector<8x8xf32>
    %cst_64 = arith.constant dense<0.000000e+00> : vector<8x8xf32>
    %145 = tpu.matmul %142, %143, %cst_64 {dimension_numbers = #tpu.dot_dimension_numbers<[1], [1], [0], [0], [0, 0, 1, 0], [], []>} : vector<8x8xf32>, vector<8x8xf32>, vector<8x8xf32> -> vector<8x8xf32>
    %cst_65 = arith.constant 0.353553385 : f32
    %146 = vector.broadcast %cst_65 : f32 to vector<8x8xf32>
    %147 = arith.mulf %145, %146 : vector<8x8xf32>
    %cst_66 = arith.constant dense<0xFF800000> : vector<8xf32>
    %148 = vector.multi_reduction <maximumf>, %147, %cst_66 [1] : vector<8x8xf32> to vector<8xf32>
    %149 = vector.shape_cast %148 : vector<8xf32> to vector<8x1xf32>
    %150 = vector.broadcast %149 : vector<8x1xf32> to vector<8x8xf32>
    %151 = arith.subf %147, %150 : vector<8x8xf32>
    %152 = math.exp %151 : vector<8x8xf32>
    %cst_67 = arith.constant dense<0.000000e+00> : vector<8xf32>
    %153 = vector.multi_reduction <add>, %152, %cst_67 [1] : vector<8x8xf32> to vector<8xf32>
    %154 = vector.shape_cast %153 : vector<8xf32> to vector<8x1xf32>
    %155 = tpu.reciprocal %154 {approx = true} : vector<8x1xf32> -> vector<8x1xf32>
    %156 = vector.broadcast %155 : vector<8x1xf32> to vector<8x8xf32>
    %157 = arith.mulf %152, %156 : vector<8x8xf32>
    %cst_68 = arith.constant dense<0.000000e+00> : vector<8x8xf32>
    %158 = tpu.matmul %157, %144, %cst_68 {dimension_numbers = #tpu.dot_dimension_numbers<[1], [0], [0], [1], [0, 0, 1, 1], [], []>} : vector<8x8xf32>, vector<8x8xf32>, vector<8x8xf32> -> vector<8x8xf32>
    %c8_69 = arith.constant 8 : index
    %c8_70 = arith.constant 8 : index
    %159 = vector.load %arg20[%c8_69, %c8_70] : memref<16x32xf32, #tpu.memory_space<vmem>>, vector<8x8xf32>
    tpu.vector_store %arg20[%c8_69, %c8_70], %158 {strides = array<i32>} : memref<16x32xf32, #tpu.memory_space<vmem>>, vector<8x8xf32>,
    %160 = vector.extract_strided_slice %37 {offsets = [8, 16], sizes = [8, 8], strides = [1, 1]} : vector<16x32xf32> to vector<8x8xf32>
    %161 = vector.extract_strided_slice %38 {offsets = [8, 16], sizes = [8, 8], strides = [1, 1]} : vector<16x32xf32> to vector<8x8xf32>
    %162 = vector.extract_strided_slice %39 {offsets = [8, 16], sizes = [8, 8], strides = [1, 1]} : vector<16x32xf32> to vector<8x8xf32>
    %cst_71 = arith.constant dense<0.000000e+00> : vector<8x8xf32>
    %163 = tpu.matmul %160, %161, %cst_71 {dimension_numbers = #tpu.dot_dimension_numbers<[1], [1], [0], [0], [0, 0, 1, 0], [], []>} : vector<8x8xf32>, vector<8x8xf32>, vector<8x8xf32> -> vector<8x8xf32>
    %cst_72 = arith.constant 0.353553385 : f32
    %164 = vector.broadcast %cst_72 : f32 to vector<8x8xf32>
    %165 = arith.mulf %163, %164 : vector<8x8xf32>
    %cst_73 = arith.constant dense<0xFF800000> : vector<8xf32>
    %166 = vector.multi_reduction <maximumf>, %165, %cst_73 [1] : vector<8x8xf32> to vector<8xf32>
    %167 = vector.shape_cast %166 : vector<8xf32> to vector<8x1xf32>
    %168 = vector.broadcast %167 : vector<8x1xf32> to vector<8x8xf32>
    %169 = arith.subf %165, %168 : vector<8x8xf32>
    %170 = math.exp %169 : vector<8x8xf32>
    %cst_74 = arith.constant dense<0.000000e+00> : vector<8xf32>
    %171 = vector.multi_reduction <add>, %170, %cst_74 [1] : vector<8x8xf32> to vector<8xf32>
    %172 = vector.shape_cast %171 : vector<8xf32> to vector<8x1xf32>
    %173 = tpu.reciprocal %172 {approx = true} : vector<8x1xf32> -> vector<8x1xf32>
    %174 = vector.broadcast %173 : vector<8x1xf32> to vector<8x8xf32>
    %175 = arith.mulf %170, %174 : vector<8x8xf32>
    %cst_75 = arith.constant dense<0.000000e+00> : vector<8x8xf32>
    %176 = tpu.matmul %175, %162, %cst_75 {dimension_numbers = #tpu.dot_dimension_numbers<[1], [0], [0], [1], [0, 0, 1, 1], [], []>} : vector<8x8xf32>, vector<8x8xf32>, vector<8x8xf32> -> vector<8x8xf32>
    %c8_76 = arith.constant 8 : index
    %c16_77 = arith.constant 16 : index
    %177 = vector.load %arg20[%c8_76, %c16_77] : memref<16x32xf32, #tpu.memory_space<vmem>>, vector<8x8xf32>
    tpu.vector_store %arg20[%c8_76, %c16_77], %176 {strides = array<i32>} : memref<16x32xf32, #tpu.memory_space<vmem>>, vector<8x8xf32>,
    %178 = vector.extract_strided_slice %37 {offsets = [8, 24], sizes = [8, 8], strides = [1, 1]} : vector<16x32xf32> to vector<8x8xf32>
    %179 = vector.extract_strided_slice %38 {offsets = [8, 24], sizes = [8, 8], strides = [1, 1]} : vector<16x32xf32> to vector<8x8xf32>
    %180 = vector.extract_strided_slice %39 {offsets = [8, 24], sizes = [8, 8], strides = [1, 1]} : vector<16x32xf32> to vector<8x8xf32>
    %cst_78 = arith.constant dense<0.000000e+00> : vector<8x8xf32>
    %181 = tpu.matmul %178, %179, %cst_78 {dimension_numbers = #tpu.dot_dimension_numbers<[1], [1], [0], [0], [0, 0, 1, 0], [], []>} : vector<8x8xf32>, vector<8x8xf32>, vector<8x8xf32> -> vector<8x8xf32>
    %cst_79 = arith.constant 0.353553385 : f32
    %182 = vector.broadcast %cst_79 : f32 to vector<8x8xf32>
    %183 = arith.mulf %181, %182 : vector<8x8xf32>
    %cst_80 = arith.constant dense<0xFF800000> : vector<8xf32>
    %184 = vector.multi_reduction <maximumf>, %183, %cst_80 [1] : vector<8x8xf32> to vector<8xf32>
    %185 = vector.shape_cast %184 : vector<8xf32> to vector<8x1xf32>
    %186 = vector.broadcast %185 : vector<8x1xf32> to vector<8x8xf32>
    %187 = arith.subf %183, %186 : vector<8x8xf32>
    %188 = math.exp %187 : vector<8x8xf32>
    %cst_81 = arith.constant dense<0.000000e+00> : vector<8xf32>
    %189 = vector.multi_reduction <add>, %188, %cst_81 [1] : vector<8x8xf32> to vector<8xf32>
    %190 = vector.shape_cast %189 : vector<8xf32> to vector<8x1xf32>
    %191 = tpu.reciprocal %190 {approx = true} : vector<8x1xf32> -> vector<8x1xf32>
    %192 = vector.broadcast %191 : vector<8x1xf32> to vector<8x8xf32>
    %193 = arith.mulf %188, %192 : vector<8x8xf32>
    %cst_82 = arith.constant dense<0.000000e+00> : vector<8x8xf32>
    %194 = tpu.matmul %193, %180, %cst_82 {dimension_numbers = #tpu.dot_dimension_numbers<[1], [0], [0], [1], [0, 0, 1, 1], [], []>} : vector<8x8xf32>, vector<8x8xf32>, vector<8x8xf32> -> vector<8x8xf32>
    %c8_83 = arith.constant 8 : index
    %c24_84 = arith.constant 24 : index
    %195 = vector.load %arg20[%c8_83, %c24_84] : memref<16x32xf32, #tpu.memory_space<vmem>>, vector<8x8xf32>
    tpu.vector_store %arg20[%c8_83, %c24_84], %194 {strides = array<i32>} : memref<16x32xf32, #tpu.memory_space<vmem>>, vector<8x8xf32>,
    %c0_85 = arith.constant 0 : index
    %c0_86 = arith.constant 0 : index
    %196 = vector.load %arg20[%c0_85, %c0_86] : memref<16x32xf32, #tpu.memory_space<vmem>>, vector<16x32xf32>
    %c0_87 = arith.constant 0 : index
    %c0_88 = arith.constant 0 : index
    %c0_89 = arith.constant 0 : index
    %197 = vector.load %arg7[%c0_87, %c0_88, %c0_89] : memref<1x32x32xf32, #tpu.memory_space<vmem>>, vector<1x32x32xf32>
    %198 = vector.shape_cast %197 : vector<1x32x32xf32> to vector<32x32xf32>
    %cst_90 = arith.constant dense<0.000000e+00> : vector<16x32xf32>
    %199 = tpu.matmul %196, %198, %cst_90 {dimension_numbers = #tpu.dot_dimension_numbers<[1], [0], [0], [1], [0, 0, 1, 1], [], []>} : vector<16x32xf32>, vector<32x32xf32>, vector<16x32xf32> -> vector<16x32xf32>
    %c0_91 = arith.constant 0 : index
    %c0_92 = arith.constant 0 : index
    %c0_93 = arith.constant 0 : index
    %200 = vector.load %arg8[%c0_91, %c0_92, %c0_93] : memref<1x1x32xf32, #tpu.memory_space<vmem>>, vector<1x1x32xf32>
    %201 = vector.shape_cast %200 : vector<1x1x32xf32> to vector<1x32xf32>
    %202 = vector.broadcast %201 : vector<1x32xf32> to vector<16x32xf32>
    %203 = arith.addf %199, %202 : vector<16x32xf32>
    %204 = arith.addf %3, %203 : vector<16x32xf32>
    %c0_94 = arith.constant 0 : index
    %c0_95 = arith.constant 0 : index
    %c0_96 = arith.constant 0 : index
    %205 = vector.load %arg9[%c0_94, %c0_95, %c0_96] : memref<1x1x32xf32, #tpu.memory_space<vmem>>, vector<1x1x32xf32>
    %206 = vector.shape_cast %205 : vector<1x1x32xf32> to vector<1x32xf32>
    %c0_97 = arith.constant 0 : index
    %c0_98 = arith.constant 0 : index
    %c0_99 = arith.constant 0 : index
    %207 = vector.load %arg10[%c0_97, %c0_98, %c0_99] : memref<1x1x32xf32, #tpu.memory_space<vmem>>, vector<1x1x32xf32>
    %208 = vector.shape_cast %207 : vector<1x1x32xf32> to vector<1x32xf32>
    %cst_100 = arith.constant dense<0.000000e+00> : vector<16xf32>
    %209 = vector.multi_reduction <add>, %204, %cst_100 [1] : vector<16x32xf32> to vector<16xf32>
    %210 = vector.shape_cast %209 : vector<16xf32> to vector<16x1xf32>
    %cst_101 = arith.constant 3.200000e+01 : f32
    %211 = vector.broadcast %cst_101 : f32 to vector<16x1xf32>
    %212 = arith.divf %210, %211 : vector<16x1xf32>
    %213 = vector.broadcast %212 : vector<16x1xf32> to vector<16x32xf32>
    %214 = arith.subf %204, %213 : vector<16x32xf32>
    %215 = arith.mulf %214, %214 : vector<16x32xf32>
    %cst_102 = arith.constant dense<0.000000e+00> : vector<16xf32>
    %216 = vector.multi_reduction <add>, %215, %cst_102 [1] : vector<16x32xf32> to vector<16xf32>
    %217 = vector.shape_cast %216 : vector<16xf32> to vector<16x1xf32>
    %cst_103 = arith.constant 3.200000e+01 : f32
    %218 = vector.broadcast %cst_103 : f32 to vector<16x1xf32>
    %219 = arith.divf %217, %218 : vector<16x1xf32>
    %220 = vector.broadcast %212 : vector<16x1xf32> to vector<16x32xf32>
    %221 = arith.subf %204, %220 : vector<16x32xf32>
    %cst_104 = arith.constant 9.99999974E-6 : f32
    %222 = vector.broadcast %cst_104 : f32 to vector<16x1xf32>
    %223 = arith.addf %219, %222 : vector<16x1xf32>
    %224 = math.rsqrt %223 : vector<16x1xf32>
    %225 = vector.broadcast %224 : vector<16x1xf32> to vector<16x32xf32>
    %226 = arith.mulf %221, %225 : vector<16x32xf32>
    %227 = vector.broadcast %206 : vector<1x32xf32> to vector<16x32xf32>
    %228 = arith.mulf %226, %227 : vector<16x32xf32>
    %229 = vector.broadcast %208 : vector<1x32xf32> to vector<16x32xf32>
    %230 = arith.addf %228, %229 : vector<16x32xf32>
    %c0_105 = arith.constant 0 : index
    %c0_106 = arith.constant 0 : index
    %c0_107 = arith.constant 0 : index
    %231 = vector.load %arg11[%c0_105, %c0_106, %c0_107] : memref<1x32x64xf32, #tpu.memory_space<vmem>>, vector<1x32x64xf32>
    %232 = vector.shape_cast %231 : vector<1x32x64xf32> to vector<32x64xf32>
    %cst_108 = arith.constant dense<0.000000e+00> : vector<16x64xf32>
    %233 = tpu.matmul %230, %232, %cst_108 {dimension_numbers = #tpu.dot_dimension_numbers<[1], [0], [0], [1], [0, 0, 1, 1], [], []>} : vector<16x32xf32>, vector<32x64xf32>, vector<16x64xf32> -> vector<16x64xf32>
    %c0_109 = arith.constant 0 : index
    %c0_110 = arith.constant 0 : index
    %c0_111 = arith.constant 0 : index
    %234 = vector.load %arg12[%c0_109, %c0_110, %c0_111] : memref<1x1x64xf32, #tpu.memory_space<vmem>>, vector<1x1x64xf32>
    %235 = vector.shape_cast %234 : vector<1x1x64xf32> to vector<1x64xf32>
    %236 = vector.broadcast %235 : vector<1x64xf32> to vector<16x64xf32>
    %237 = arith.addf %233, %236 : vector<16x64xf32>
    %cst_112 = arith.constant 0.000000e+00 : f32
    %238 = vector.broadcast %cst_112 : f32 to vector<16x64xf32>
    %239 = arith.maximumf %237, %238 : vector<16x64xf32>
    %c0_113 = arith.constant 0 : index
    %c0_114 = arith.constant 0 : index
    %c0_115 = arith.constant 0 : index
    %240 = vector.load %arg13[%c0_113, %c0_114, %c0_115] : memref<1x64x32xf32, #tpu.memory_space<vmem>>, vector<1x64x32xf32>
    %241 = vector.shape_cast %240 : vector<1x64x32xf32> to vector<64x32xf32>
    %cst_116 = arith.constant dense<0.000000e+00> : vector<16x32xf32>
    %242 = tpu.matmul %239, %241, %cst_116 {dimension_numbers = #tpu.dot_dimension_numbers<[1], [0], [0], [1], [0, 0, 1, 1], [], []>} : vector<16x64xf32>, vector<64x32xf32>, vector<16x32xf32> -> vector<16x32xf32>
    %c0_117 = arith.constant 0 : index
    %c0_118 = arith.constant 0 : index
    %c0_119 = arith.constant 0 : index
    %243 = vector.load %arg14[%c0_117, %c0_118, %c0_119] : memref<1x1x32xf32, #tpu.memory_space<vmem>>, vector<1x1x32xf32>
    %244 = vector.shape_cast %243 : vector<1x1x32xf32> to vector<1x32xf32>
    %245 = vector.broadcast %244 : vector<1x32xf32> to vector<16x32xf32>
    %246 = arith.addf %242, %245 : vector<16x32xf32>
    %247 = arith.addf %204, %246 : vector<16x32xf32>
    %c0_120 = arith.constant 0 : index
    %c0_121 = arith.constant 0 : index
    %248 = vector.load %arg19[%c0_120, %c0_121] : memref<16x32xf32, #tpu.memory_space<vmem>>, vector<16x32xf32>
    tpu.vector_store %arg19[%c0_120, %c0_121], %247 {strides = array<i32>} : memref<16x32xf32, #tpu.memory_space<vmem>>, vector<16x32xf32>,
    %c1_i32 = arith.constant 1 : i32
    %249 = arith.cmpi eq, %arg0, %c1_i32 : i32
    %250 = arith.extui %249 : i1 to i32
    %c0_i32_122 = arith.constant 0 : i32
    %251 = arith.cmpi ne, %250, %c0_i32_122 : i32
    scf.if %251 {
      %252 = vector.extract_strided_slice %247 {offsets = [0, 0], sizes = [1, 32], strides = [1, 1]} : vector<16x32xf32> to vector<1x32xf32>
      %c0_123 = arith.constant 0 : index
      %c0_124 = arith.constant 0 : index
      %253 = vector.load %arg15[%c0_123, %c0_124] : memref<1x32xf32, #tpu.memory_space<vmem>>, vector<1x32xf32>
      %c0_125 = arith.constant 0 : index
      %c0_126 = arith.constant 0 : index
      %254 = vector.load %arg16[%c0_125, %c0_126] : memref<1x32xf32, #tpu.memory_space<vmem>>, vector<1x32xf32>
      %cst_127 = arith.constant dense<0.000000e+00> : vector<1xf32>
      %255 = vector.multi_reduction <add>, %252, %cst_127 [1] : vector<1x32xf32> to vector<1xf32>
      %256 = vector.shape_cast %255 : vector<1xf32> to vector<1x1xf32>
      %cst_128 = arith.constant 3.200000e+01 : f32
      %257 = vector.broadcast %cst_128 : f32 to vector<1x1xf32>
      %258 = arith.divf %256, %257 : vector<1x1xf32>
      %259 = vector.broadcast %258 : vector<1x1xf32> to vector<1x32xf32>
      %260 = arith.subf %252, %259 : vector<1x32xf32>
      %261 = arith.mulf %260, %260 : vector<1x32xf32>
      %cst_129 = arith.constant dense<0.000000e+00> : vector<1xf32>
      %262 = vector.multi_reduction <add>, %261, %cst_129 [1] : vector<1x32xf32> to vector<1xf32>
      %263 = vector.shape_cast %262 : vector<1xf32> to vector<1x1xf32>
      %cst_130 = arith.constant 3.200000e+01 : f32
      %264 = vector.broadcast %cst_130 : f32 to vector<1x1xf32>
      %265 = arith.divf %263, %264 : vector<1x1xf32>
      %266 = vector.broadcast %258 : vector<1x1xf32> to vector<1x32xf32>
      %267 = arith.subf %252, %266 : vector<1x32xf32>
      %cst_131 = arith.constant 9.99999974E-6 : f32
      %268 = vector.broadcast %cst_131 : f32 to vector<1x1xf32>
      %269 = arith.addf %265, %268 : vector<1x1xf32>
      %270 = math.rsqrt %269 : vector<1x1xf32>
      %271 = vector.broadcast %270 : vector<1x1xf32> to vector<1x32xf32>
      %272 = arith.mulf %267, %271 : vector<1x32xf32>
      %273 = arith.mulf %272, %253 : vector<1x32xf32>
      %274 = arith.addf %273, %254 : vector<1x32xf32>
      %c0_132 = arith.constant 0 : index
      %c0_133 = arith.constant 0 : index
      %275 = vector.load %arg17[%c0_132, %c0_133] : memref<2x32xf32, #tpu.memory_space<vmem>>, vector<1x32xf32>
      tpu.vector_store %arg17[%c0_132, %c0_133], %274 {strides = array<i32>} : memref<2x32xf32, #tpu.memory_space<vmem>>, vector<1x32xf32>,
      %276 = vector.extract_strided_slice %247 {offsets = [8, 0], sizes = [1, 32], strides = [1, 1]} : vector<16x32xf32> to vector<1x32xf32>
      %c0_134 = arith.constant 0 : index
      %c0_135 = arith.constant 0 : index
      %277 = vector.load %arg15[%c0_134, %c0_135] : memref<1x32xf32, #tpu.memory_space<vmem>>, vector<1x32xf32>
      %c0_136 = arith.constant 0 : index
      %c0_137 = arith.constant 0 : index
      %278 = vector.load %arg16[%c0_136, %c0_137] : memref<1x32xf32, #tpu.memory_space<vmem>>, vector<1x32xf32>
      %cst_138 = arith.constant dense<0.000000e+00> : vector<1xf32>
      %279 = vector.multi_reduction <add>, %276, %cst_138 [1] : vector<1x32xf32> to vector<1xf32>
      %280 = vector.shape_cast %279 : vector<1xf32> to vector<1x1xf32>
      %cst_139 = arith.constant 3.200000e+01 : f32
      %281 = vector.broadcast %cst_139 : f32 to vector<1x1xf32>
      %282 = arith.divf %280, %281 : vector<1x1xf32>
      %283 = vector.broadcast %282 : vector<1x1xf32> to vector<1x32xf32>
      %284 = arith.subf %276, %283 : vector<1x32xf32>
      %285 = arith.mulf %284, %284 : vector<1x32xf32>
      %cst_140 = arith.constant dense<0.000000e+00> : vector<1xf32>
      %286 = vector.multi_reduction <add>, %285, %cst_140 [1] : vector<1x32xf32> to vector<1xf32>
      %287 = vector.shape_cast %286 : vector<1xf32> to vector<1x1xf32>
      %cst_141 = arith.constant 3.200000e+01 : f32
      %288 = vector.broadcast %cst_141 : f32 to vector<1x1xf32>
      %289 = arith.divf %287, %288 : vector<1x1xf32>
      %290 = vector.broadcast %282 : vector<1x1xf32> to vector<1x32xf32>
      %291 = arith.subf %276, %290 : vector<1x32xf32>
      %cst_142 = arith.constant 9.99999974E-6 : f32
      %292 = vector.broadcast %cst_142 : f32 to vector<1x1xf32>
      %293 = arith.addf %289, %292 : vector<1x1xf32>
      %294 = math.rsqrt %293 : vector<1x1xf32>
      %295 = vector.broadcast %294 : vector<1x1xf32> to vector<1x32xf32>
      %296 = arith.mulf %291, %295 : vector<1x32xf32>
      %297 = arith.mulf %296, %277 : vector<1x32xf32>
      %298 = arith.addf %297, %278 : vector<1x32xf32>
      %c1_143 = arith.constant 1 : index
      %c0_144 = arith.constant 0 : index
      %299 = vector.load %arg17[%c1_143, %c0_144] : memref<2x32xf32, #tpu.memory_space<vmem>>, vector<1x32xf32>
      tpu.vector_store %arg17[%c1_143, %c0_144], %298 {strides = array<i32>} : memref<2x32xf32, #tpu.memory_space<vmem>>, vector<1x32xf32>,
    } else {
    }
    return
  }
  func.func @transform_0(%arg0: i32) -> (i32, i32, i32) {
    %c0_i32 = arith.constant 0 : i32
    %c0_i32_0 = arith.constant 0 : i32
    %c0_i32_1 = arith.constant 0 : i32
    %c0_i32_2 = arith.constant 0 : i32
    return %c0_i32, %c0_i32_0, %c0_i32_1 : i32, i32, i32
  }
  func.func @transform_1(%arg0: i32) -> (i32, i32) {
    %c0_i32 = arith.constant 0 : i32
    %c0_i32_0 = arith.constant 0 : i32
    %c0_i32_1 = arith.constant 0 : i32
    return %c0_i32, %c0_i32_0 : i32, i32
  }
  func.func @transform_2(%arg0: i32) -> (i32, i32, i32) {
    %c0_i32 = arith.constant 0 : i32
    %c0_i32_0 = arith.constant 0 : i32
    %c0_i32_1 = arith.constant 0 : i32
    return %arg0, %c0_i32, %c0_i32_0 : i32, i32, i32
  }
  func.func @transform_3(%arg0: i32) -> (i32, i32, i32) {
    %c0_i32 = arith.constant 0 : i32
    %c0_i32_0 = arith.constant 0 : i32
    %c0_i32_1 = arith.constant 0 : i32
    return %arg0, %c0_i32, %c0_i32_0 : i32, i32, i32
  }
  func.func @transform_4(%arg0: i32) -> (i32, i32, i32) {
    %c0_i32 = arith.constant 0 : i32
    %c0_i32_0 = arith.constant 0 : i32
    %c0_i32_1 = arith.constant 0 : i32
    return %arg0, %c0_i32, %c0_i32_0 : i32, i32, i32
  }
  func.func @transform_5(%arg0: i32) -> (i32, i32, i32) {
    %c0_i32 = arith.constant 0 : i32
    %c0_i32_0 = arith.constant 0 : i32
    %c0_i32_1 = arith.constant 0 : i32
    return %arg0, %c0_i32, %c0_i32_0 : i32, i32, i32
  }
  func.func @transform_6(%arg0: i32) -> (i32, i32, i32) {
    %c0_i32 = arith.constant 0 : i32
    %c0_i32_0 = arith.constant 0 : i32
    %c0_i32_1 = arith.constant 0 : i32
    return %arg0, %c0_i32, %c0_i32_0 : i32, i32, i32
  }
  func.func @transform_7(%arg0: i32) -> (i32, i32, i32) {
    %c0_i32 = arith.constant 0 : i32
    %c0_i32_0 = arith.constant 0 : i32
    %c0_i32_1 = arith.constant 0 : i32
    return %arg0, %c0_i32, %c0_i32_0 : i32, i32, i32
  }
  func.func @transform_8(%arg0: i32) -> (i32, i32, i32) {
    %c0_i32 = arith.constant 0 : i32
    %c0_i32_0 = arith.constant 0 : i32
    %c0_i32_1 = arith.constant 0 : i32
    return %arg0, %c0_i32, %c0_i32_0 : i32, i32, i32
  }
  func.func @transform_9(%arg0: i32) -> (i32, i32, i32) {
    %c0_i32 = arith.constant 0 : i32
    %c0_i32_0 = arith.constant 0 : i32
    %c0_i32_1 = arith.constant 0 : i32
    return %arg0, %c0_i32, %c0_i32_0 : i32, i32, i32
  }
  func.func @transform_10(%arg0: i32) -> (i32, i32, i32) {
    %c0_i32 = arith.constant 0 : i32
    %c0_i32_0 = arith.constant 0 : i32
    %c0_i32_1 = arith.constant 0 : i32
    return %arg0, %c0_i32, %c0_i32_0 : i32, i32, i32
  }
  func.func @transform_11(%arg0: i32) -> (i32, i32, i32) {
    %c0_i32 = arith.constant 0 : i32
    %c0_i32_0 = arith.constant 0 : i32
    %c0_i32_1 = arith.constant 0 : i32
    return %arg0, %c0_i32, %c0_i32_0 : i32, i32, i32
  }
  func.func @transform_12(%arg0: i32) -> (i32, i32, i32) {
    %c0_i32 = arith.constant 0 : i32
    %c0_i32_0 = arith.constant 0 : i32
    %c0_i32_1 = arith.constant 0 : i32
    return %arg0, %c0_i32, %c0_i32_0 : i32, i32, i32
  }
  func.func @transform_13(%arg0: i32) -> (i32, i32, i32) {
    %c0_i32 = arith.constant 0 : i32
    %c0_i32_0 = arith.constant 0 : i32
    %c0_i32_1 = arith.constant 0 : i32
    return %arg0, %c0_i32, %c0_i32_0 : i32, i32, i32
  }
  func.func @transform_14(%arg0: i32) -> (i32, i32) {
    %c0_i32 = arith.constant 0 : i32
    %c0_i32_0 = arith.constant 0 : i32
    %c0_i32_1 = arith.constant 0 : i32
    return %c0_i32, %c0_i32_0 : i32, i32
  }
  func.func @transform_15(%arg0: i32) -> (i32, i32) {
    %c0_i32 = arith.constant 0 : i32
    %c0_i32_0 = arith.constant 0 : i32
    %c0_i32_1 = arith.constant 0 : i32
    return %c0_i32, %c0_i32_0 : i32, i32
  }
  func.func @transform_16(%arg0: i32) -> (i32, i32) {
    %c0_i32 = arith.constant 0 : i32
    %c0_i32_0 = arith.constant 0 : i32
    %c0_i32_1 = arith.constant 0 : i32
    return %c0_i32, %c0_i32_0 : i32, i32
  }
  func.func @transform_17(%arg0: i32) -> (i32, i32, i32, i32) {
    %c0_i32 = arith.constant 0 : i32
    %c0_i32_0 = arith.constant 0 : i32
    %c0_i32_1 = arith.constant 0 : i32
    %c0_i32_2 = arith.constant 0 : i32
    return %arg0, %c0_i32, %c0_i32_0, %c0_i32_1 : i32, i32, i32, i32
  }
}

</mosaic_0001>

<llo_original>
// kernel: tpu_custom_call.1
$region0: #{tpu_custom_call.1}
  #allocation0 [shape = 'u32[]', space=smem, size = 0x4, offset = 0x4, fixed_abs, tag = 'smem constant byte address 0x4 - core index']
  #allocation1 [shape = 'u32[144,128]{1,0:T(1,128)}', space=vmem, size = 0x12000, scoped, tag = 'internal scratch']
  #allocation2 [shape = 'f32[16,32]{1,0:T(8,128)}', space=vmem, size = 0x2000, scoped, tag = 'scratch operand']
  #allocation3 [shape = 'f32[16,32]{1,0:T(8,128)}', space=vmem, size = 0x2000, scoped, tag = 'scratch operand']
  %s0 = inlined_call_operand.hbm [shape: f32[2,8,32], index: 0, kind: input, shape index: {}]
  %s1 = inlined_call_operand.hbm [shape: f32[8,32], index: 1, kind: input, shape index: {}]
  %s2 = inlined_call_operand.vmem [shape: f32[2,1,32], index: 2, kind: input, shape index: {}]
  %s3 = inlined_call_operand.vmem [shape: f32[2,1,32], index: 3, kind: input, shape index: {}]
  %s4 = inlined_call_operand.vmem [shape: f32[2,32,96], index: 4, kind: input, shape index: {}]
  %s5 = inlined_call_operand.vmem [shape: f32[2,1,96], index: 5, kind: input, shape index: {}]
  %s6 = inlined_call_operand.vmem [shape: f32[2,32,32], index: 6, kind: input, shape index: {}]
  %s7 = inlined_call_operand.vmem [shape: f32[2,1,32], index: 7, kind: input, shape index: {}]
  %s8 = inlined_call_operand.vmem [shape: f32[2,1,32], index: 8, kind: input, shape index: {}]
  %s9 = inlined_call_operand.vmem [shape: f32[2,1,32], index: 9, kind: input, shape index: {}]
  %s10 = inlined_call_operand.vmem [shape: f32[2,32,64], index: 10, kind: input, shape index: {}]
  %s11 = inlined_call_operand.vmem [shape: f32[2,1,64], index: 11, kind: input, shape index: {}]
  %s12 = inlined_call_operand.vmem [shape: f32[2,64,32], index: 12, kind: input, shape index: {}]
  %s13 = inlined_call_operand.vmem [shape: f32[2,1,32], index: 13, kind: input, shape index: {}]
  %s14 = inlined_call_operand.vmem [shape: f32[1,32], index: 14, kind: input, shape index: {}]
  %s15 = inlined_call_operand.vmem [shape: f32[1,32], index: 15, kind: input, shape index: {}]
  %s16 = inlined_call_operand.hbm [shape: f32[2,32], index: 16, kind: output, shape index: {0}]
  %s17 = inlined_call_operand.hbm [shape: f32[2,4,8,8], index: 17, kind: output, shape index: {1}]
  %18 = xla_tuple %s16, %s17
  %s19 = sld [smem:[#allocation0]]
  $region121: #{tpu_custom_call.1} parent=0
    _
  %s21 = ssub.s32 1, %s19
  %s22 = scalar_select 0, %s21, %s19
  $region1: #{tpu_custom_call.1} parent=0
    #allocation4 [shape = 'u8[8192]{0}', space=vmem, size = 0x2000, scoped, tag = 'input window, operand 0, single buffered']
    #allocation5 [shape = 's32[2]{0}', space=sflag, size = 0x8, scoped, tag = 'scoped memory for tpu_custom_call.1']
    #allocation6 [shape = 's32[2]{0}', space=sflag, size = 0x8, scoped, tag = 'scoped memory for tpu_custom_call.1']
    #allocation7 [shape = 'u8[4096]{0}', space=vmem, size = 0x1000, scoped, tag = 'input window, operand 1, single buffered']
    #allocation8 [shape = 's32[1]{0}', space=sflag, size = 0x4, scoped, tag = 'scoped memory for tpu_custom_call.1']
    #allocation9 [shape = 'u8[1024]{0}', space=vmem, size = 0x400, scoped, tag = 'output window, operand 0, single buffered']
    #allocation10 [shape = 'u8[32768]{0}', space=vmem, size = 0x8000, scoped, tag = 'output window, operand 1']
    #allocation11 [shape = 's32[2]{0}', space=sflag, size = 0x8, scoped, tag = 'scoped memory for tpu_custom_call.1']
    %23 = vsyncpa [#allocation5], 0
    %24 = vsyncpa [#allocation8], 0
    %25 = vsyncpa [#allocation6], 0
    %26 = vsyncpa [#allocation11], 0
    %s27 = scalar_lea.sflag [#allocation11], 1
    %28 = vsyncpa %s27, 0
    loop: start=0, step=1, limit=4
    $region2: #{tpu_custom_call.1} parent=1 // loop_pre_header
      _
    $region3: #{tpu_custom_call.1} parent=1 // loop_header
      %s30 = sphi 0, %s34
      %p31 = scmp.ge.s32.totalorder %s30, 4
      %s38 = sphi 0, %s38
      %s40 = sphi 0, %s38
      %s41 = sphi 0, %s40
      %s55 = sphi 0, %s41
      %s59 = sphi 0, %s59
      %s61 = sphi 0, %s59
      %s62 = sphi 0, %s61
      %s76 = sphi 0, %s62
      %s82 = sphi 0, %s84
      %s85 = sphi 0, %s82
      %s86 = sphi 0, %s85
      %s102 = sphi 0, %s86
      %s108 = sphi 0, %s110
      %s111 = sphi 0, %s108
      %s112 = sphi 0, %s111
      %s128 = sphi 0, %s112
      %s134 = sphi 0, %s136
      %s137 = sphi 0, %s134
      %s138 = sphi 0, %s137
      %s154 = sphi 0, %s138
      %s160 = sphi 0, %s162
      %s163 = sphi 0, %s160
      %s164 = sphi 0, %s163
      %s180 = sphi 0, %s164
      %s186 = sphi 0, %s188
      %s189 = sphi 0, %s186
      %s190 = sphi 0, %s189
      %s206 = sphi 0, %s190
      %s212 = sphi 0, %s214
      %s215 = sphi 0, %s212
      %s216 = sphi 0, %s215
      %s232 = sphi 0, %s216
      %s238 = sphi 0, %s240
      %s241 = sphi 0, %s238
      %s242 = sphi 0, %s241
      %s258 = sphi 0, %s242
      %s264 = sphi 0, %s266
      %s267 = sphi 0, %s264
      %s268 = sphi 0, %s267
      %s284 = sphi 0, %s268
      %s290 = sphi 0, %s292
      %s293 = sphi 0, %s290
      %s294 = sphi 0, %s293
      %s310 = sphi 0, %s294
      %s316 = sphi 0, %s318
      %s319 = sphi 0, %s316
      %s320 = sphi 0, %s319
      %s336 = sphi 0, %s320
      %s342 = sphi 0, %s344
      %s345 = sphi 0, %s342
      %s346 = sphi 0, %s345
      %s362 = sphi 0, %s346
      %s368 = sphi 0, %s370
      %s371 = sphi 0, %s368
      %s372 = sphi 0, %s371
      %s388 = sphi 0, %s372
      %s392 = sphi 0, %s392
      %s394 = sphi 0, %s392
      %s395 = sphi 0, %s394
      %s409 = sphi 0, %s395
      %s413 = sphi 0, %s413
      %s415 = sphi 0, %s413
      %s416 = sphi 0, %s415
      %s430 = sphi 0, %s416
      %s434 = sphi 0, %s434
      %s436 = sphi 0, %s434
      %s437 = sphi 0, %s436
      %s451 = sphi 0, %s437
      %s457 = sphi 0, %s459
      %s460 = sphi 0, %s457
      %s461 = sphi 0, %s460
      %s477 = sphi 0, %s461
    $region4: #{tpu_custom_call.1} parent=1 // loop_header_branch
      %33 = sbr.rel (%p31) target = $region8
    $region5: #{tpu_custom_call.1} parent=1 // loop_body
      %s35 = ssub.s32 %s30, 1
      %s36 = ssub.s32 %s30, 2
      %s37 = sadd.s32 %s30, 1
      %s39 = sadd.s32 %s38, 1
      %p42 = scmp.eq.s32.totalorder %s30, 1
      %p43 = scmp.ne.s32.totalorder %s38, %s40
      %p44 = scmp.eq.s32.totalorder %s30, 0
      %p45 = por %p43, %p44
      %p46 = scmp.ne.s32.totalorder %s38, %s40
      %p47 = scmp.eq.s32.totalorder %s35, 1
      %p48 = por %p46, %p47
      %p49 = scmp.ne.s32.totalorder %s40, %s41
      %p50 = scmp.eq.s32.totalorder %s35, 0
      %p51 = por %p49, %p50
      %p52 = scmp.ne.s32.totalorder %s40, %s41
      %p53 = scmp.eq.s32.totalorder %s36, 1
      %p54 = por %p52, %p53
      %p56 = scmp.ne.s32.totalorder %s41, %s55
      %p57 = scmp.eq.s32.totalorder %s36, 0
      %p58 = por %p56, %p57
      %s60 = sadd.s32 %s59, 1
      %p63 = scmp.eq.s32.totalorder %s30, 1
      %p64 = scmp.ne.s32.totalorder %s59, %s61
      %p65 = scmp.eq.s32.totalorder %s30, 0
      %p66 = por %p64, %p65
      %p67 = scmp.ne.s32.totalorder %s59, %s61
      %p68 = scmp.eq.s32.totalorder %s35, 1
      %p69 = por %p67, %p68
      %p70 = scmp.ne.s32.totalorder %s61, %s62
      %p71 = scmp.eq.s32.totalorder %s35, 0
      %p72 = por %p70, %p71
      %p73 = scmp.ne.s32.totalorder %s61, %s62
      %p74 = scmp.eq.s32.totalorder %s36, 1
      %p75 = por %p73, %p74
      %p77 = scmp.ne.s32.totalorder %s62, %s76
      %p78 = scmp.eq.s32.totalorder %s36, 0
      %p79 = por %p77, %p78
      %s80 = ssub.s32 %s30, %s37
      %p81 = scmp.eq.s32.totalorder %s80, 0
      %s83 = sadd.s32 %s82, 1
      %s84 = scalar_select %p81, %s82, %s83
      %p87 = pneg %p81
      %p88 = scmp.eq.s32.totalorder %s30, 1
      %p89 = por %p87, %p88
      %p90 = scmp.ne.s32.totalorder %s82, %s85
      %p91 = scmp.eq.s32.totalorder %s30, 0
      %p92 = por %p90, %p91
      %p93 = scmp.ne.s32.totalorder %s82, %s85
      %p94 = scmp.eq.s32.totalorder %s35, 1
      %p95 = por %p93, %p94
      %p96 = scmp.ne.s32.totalorder %s85, %s86
      %p97 = scmp.eq.s32.totalorder %s35, 0
      %p98 = por %p96, %p97
      %p99 = scmp.ne.s32.totalorder %s85, %s86
      %p100 = scmp.eq.s32.totalorder %s36, 1
      %p101 = por %p99, %p100
      %p103 = scmp.ne.s32.totalorder %s86, %s102
      %p104 = scmp.eq.s32.totalorder %s36, 0
      %p105 = por %p103, %p104
      %s106 = ssub.s32 %s30, %s37
      %p107 = scmp.eq.s32.totalorder %s106, 0
      %s109 = sadd.s32 %s108, 1
      %s110 = scalar_select %p107, %s108, %s109
      %p113 = pneg %p107
      %p114 = scmp.eq.s32.totalorder %s30, 1
      %p115 = por %p113, %p114
      %p116 = scmp.ne.s32.totalorder %s108, %s111
      %p117 = scmp.eq.s32.totalorder %s30, 0
      %p118 = por %p116, %p117
      %p119 = scmp.ne.s32.totalorder %s108, %s111
      %p120 = scmp.eq.s32.totalorder %s35, 1
      %p121 = por %p119, %p120
      %p122 = scmp.ne.s32.totalorder %s111, %s112
      %p123 = scmp.eq.s32.totalorder %s35, 0
      %p124 = por %p122, %p123
      %p125 = scmp.ne.s32.totalorder %s111, %s112
      %p126 = scmp.eq.s32.totalorder %s36, 1
      %p127 = por %p125, %p126
      %p129 = scmp.ne.s32.totalorder %s112, %s128
      %p130 = scmp.eq.s32.totalorder %s36, 0
      %p131 = por %p129, %p130
      %s132 = ssub.s32 %s30, %s37
      %p133 = scmp.eq.s32.totalorder %s132, 0
      %s135 = sadd.s32 %s134, 1
      %s136 = scalar_select %p133, %s134, %s135
      %p139 = pneg %p133
      %p140 = scmp.eq.s32.totalorder %s30, 1
      %p141 = por %p139, %p140
      %p142 = scmp.ne.s32.totalorder %s134, %s137
      %p143 = scmp.eq.s32.totalorder %s30, 0
      %p144 = por %p142, %p143
      %p145 = scmp.ne.s32.totalorder %s134, %s137
      %p146 = scmp.eq.s32.totalorder %s35, 1
      %p147 = por %p145, %p146
      %p148 = scmp.ne.s32.totalorder %s137, %s138
      %p149 = scmp.eq.s32.totalorder %s35, 0
      %p150 = por %p148, %p149
      %p151 = scmp.ne.s32.totalorder %s137, %s138
      %p152 = scmp.eq.s32.totalorder %s36, 1
      %p153 = por %p151, %p152
      %p155 = scmp.ne.s32.totalorder %s138, %s154
      %p156 = scmp.eq.s32.totalorder %s36, 0
      %p157 = por %p155, %p156
      %s158 = ssub.s32 %s30, %s37
      %p159 = scmp.eq.s32.totalorder %s158, 0
      %s161 = sadd.s32 %s160, 1
      %s162 = scalar_select %p159, %s160, %s161
      %p165 = pneg %p159
      %p166 = scmp.eq.s32.totalorder %s30, 1
      %p167 = por %p165, %p166
      %p168 = scmp.ne.s32.totalorder %s160, %s163
      %p169 = scmp.eq.s32.totalorder %s30, 0
      %p170 = por %p168, %p169
      %p171 = scmp.ne.s32.totalorder %s160, %s163
      %p172 = scmp.eq.s32.totalorder %s35, 1
      %p173 = por %p171, %p172
      %p174 = scmp.ne.s32.totalorder %s163, %s164
      %p175 = scmp.eq.s32.totalorder %s35, 0
      %p176 = por %p174, %p175
      %p177 = scmp.ne.s32.totalorder %s163, %s164
      %p178 = scmp.eq.s32.totalorder %s36, 1
      %p179 = por %p177, %p178
      %p181 = scmp.ne.s32.totalorder %s164, %s180
      %p182 = scmp.eq.s32.totalorder %s36, 0
      %p183 = por %p181, %p182
      %s184 = ssub.s32 %s30, %s37
      %p185 = scmp.eq.s32.totalorder %s184, 0
      %s187 = sadd.s32 %s186, 1
      %s188 = scalar_select %p185, %s186, %s187
      %p191 = pneg %p185
      %p192 = scmp.eq.s32.totalorder %s30, 1
      %p193 = por %p191, %p192
      %p194 = scmp.ne.s32.totalorder %s186, %s189
      %p195 = scmp.eq.s32.totalorder %s30, 0
      %p196 = por %p194, %p195
      %p197 = scmp.ne.s32.totalorder %s186, %s189
      %p198 = scmp.eq.s32.totalorder %s35, 1
      %p199 = por %p197, %p198
      %p200 = scmp.ne.s32.totalorder %s189, %s190
      %p201 = scmp.eq.s32.totalorder %s35, 0
      %p202 = por %p200, %p201
      %p203 = scmp.ne.s32.totalorder %s189, %s190
      %p204 = scmp.eq.s32.totalorder %s36, 1
      %p205 = por %p203, %p204
      %p207 = scmp.ne.s32.totalorder %s190, %s206
      %p208 = scmp.eq.s32.totalorder %s36, 0
      %p209 = por %p207, %p208
      %s210 = ssub.s32 %s30, %s37
      %p211 = scmp.eq.s32.totalorder %s210, 0
      %s213 = sadd.s32 %s212, 1
      %s214 = scalar_select %p211, %s212, %s213
      %p217 = pneg %p211
      %p218 = scmp.eq.s32.totalorder %s30, 1
      %p219 = por %p217, %p218
      %p220 = scmp.ne.s32.totalorder %s212, %s215
      %p221 = scmp.eq.s32.totalorder %s30, 0
      %p222 = por %p220, %p221
      %p223 = scmp.ne.s32.totalorder %s212, %s215
      %p224 = scmp.eq.s32.totalorder %s35, 1
      %p225 = por %p223, %p224
      %p226 = scmp.ne.s32.totalorder %s215, %s216
      %p227 = scmp.eq.s32.totalorder %s35, 0
      %p228 = por %p226, %p227
      %p229 = scmp.ne.s32.totalorder %s215, %s216
      %p230 = scmp.eq.s32.totalorder %s36, 1
      %p231 = por %p229, %p230
      %p233 = scmp.ne.s32.totalorder %s216, %s232
      %p234 = scmp.eq.s32.totalorder %s36, 0
      %p235 = por %p233, %p234
      %s236 = ssub.s32 %s30, %s37
      %p237 = scmp.eq.s32.totalorder %s236, 0
      %s239 = sadd.s32 %s238, 1
      %s240 = scalar_select %p237, %s238, %s239
      %p243 = pneg %p237
      %p244 = scmp.eq.s32.totalorder %s30, 1
      %p245 = por %p243, %p244
      %p246 = scmp.ne.s32.totalorder %s238, %s241
      %p247 = scmp.eq.s32.totalorder %s30, 0
      %p248 = por %p246, %p247
      %p249 = scmp.ne.s32.totalorder %s238, %s241
      %p250 = scmp.eq.s32.totalorder %s35, 1
      %p251 = por %p249, %p250
      %p252 = scmp.ne.s32.totalorder %s241, %s242
      %p253 = scmp.eq.s32.totalorder %s35, 0
      %p254 = por %p252, %p253
      %p255 = scmp.ne.s32.totalorder %s241, %s242
      %p256 = scmp.eq.s32.totalorder %s36, 1
      %p257 = por %p255, %p256
      %p259 = scmp.ne.s32.totalorder %s242, %s258
      %p260 = scmp.eq.s32.totalorder %s36, 0
      %p261 = por %p259, %p260
      %s262 = ssub.s32 %s30, %s37
      %p263 = scmp.eq.s32.totalorder %s262, 0
      %s265 = sadd.s32 %s264, 1
      %s266 = scalar_select %p263, %s264, %s265
      %p269 = pneg %p263
      %p270 = scmp.eq.s32.totalorder %s30, 1
      %p271 = por %p269, %p270
      %p272 = scmp.ne.s32.totalorder %s264, %s267
      %p273 = scmp.eq.s32.totalorder %s30, 0
      %p274 = por %p272, %p273
      %p275 = scmp.ne.s32.totalorder %s264, %s267
      %p276 = scmp.eq.s32.totalorder %s35, 1
      %p277 = por %p275, %p276
      %p278 = scmp.ne.s32.totalorder %s267, %s268
      %p279 = scmp.eq.s32.totalorder %s35, 0
      %p280 = por %p278, %p279
      %p281 = scmp.ne.s32.totalorder %s267, %s268
      %p282 = scmp.eq.s32.totalorder %s36, 1
      %p283 = por %p281, %p282
      %p285 = scmp.ne.s32.totalorder %s268, %s284
      %p286 = scmp.eq.s32.totalorder %s36, 0
      %p287 = por %p285, %p286
      %s288 = ssub.s32 %s30, %s37
      %p289 = scmp.eq.s32.totalorder %s288, 0
      %s291 = sadd.s32 %s290, 1
      %s292 = scalar_select %p289, %s290, %s291
      %p295 = pneg %p289
      %p296 = scmp.eq.s32.totalorder %s30, 1
      %p297 = por %p295, %p296
      %p298 = scmp.ne.s32.totalorder %s290, %s293
      %p299 = scmp.eq.s32.totalorder %s30, 0
      %p300 = por %p298, %p299
      %p301 = scmp.ne.s32.totalorder %s290, %s293
      %p302 = scmp.eq.s32.totalorder %s35, 1
      %p303 = por %p301, %p302
      %p304 = scmp.ne.s32.totalorder %s293, %s294
      %p305 = scmp.eq.s32.totalorder %s35, 0
      %p306 = por %p304, %p305
      %p307 = scmp.ne.s32.totalorder %s293, %s294
      %p308 = scmp.eq.s32.totalorder %s36, 1
      %p309 = por %p307, %p308
      %p311 = scmp.ne.s32.totalorder %s294, %s310
      %p312 = scmp.eq.s32.totalorder %s36, 0
      %p313 = por %p311, %p312
      %s314 = ssub.s32 %s30, %s37
      %p315 = scmp.eq.s32.totalorder %s314, 0
      %s317 = sadd.s32 %s316, 1
      %s318 = scalar_select %p315, %s316, %s317
      %p321 = pneg %p315
      %p322 = scmp.eq.s32.totalorder %s30, 1
      %p323 = por %p321, %p322
      %p324 = scmp.ne.s32.totalorder %s316, %s319
      %p325 = scmp.eq.s32.totalorder %s30, 0
      %p326 = por %p324, %p325
      %p327 = scmp.ne.s32.totalorder %s316, %s319
      %p328 = scmp.eq.s32.totalorder %s35, 1
      %p329 = por %p327, %p328
      %p330 = scmp.ne.s32.totalorder %s319, %s320
      %p331 = scmp.eq.s32.totalorder %s35, 0
      %p332 = por %p330, %p331
      %p333 = scmp.ne.s32.totalorder %s319, %s320
      %p334 = scmp.eq.s32.totalorder %s36, 1
      %p335 = por %p333, %p334
      %p337 = scmp.ne.s32.totalorder %s320, %s336
      %p338 = scmp.eq.s32.totalorder %s36, 0
      %p339 = por %p337, %p338
      %s340 = ssub.s32 %s30, %s37
      %p341 = scmp.eq.s32.totalorder %s340, 0
      %s343 = sadd.s32 %s342, 1
      %s344 = scalar_select %p341, %s342, %s343
      %p347 = pneg %p341
      %p348 = scmp.eq.s32.totalorder %s30, 1
      %p349 = por %p347, %p348
      %p350 = scmp.ne.s32.totalorder %s342, %s345
      %p351 = scmp.eq.s32.totalorder %s30, 0
      %p352 = por %p350, %p351
      %p353 = scmp.ne.s32.totalorder %s342, %s345
      %p354 = scmp.eq.s32.totalorder %s35, 1
      %p355 = por %p353, %p354
      %p356 = scmp.ne.s32.totalorder %s345, %s346
      %p357 = scmp.eq.s32.totalorder %s35, 0
      %p358 = por %p356, %p357
      %p359 = scmp.ne.s32.totalorder %s345, %s346
      %p360 = scmp.eq.s32.totalorder %s36, 1
      %p361 = por %p359, %p360
      %p363 = scmp.ne.s32.totalorder %s346, %s362
      %p364 = scmp.eq.s32.totalorder %s36, 0
      %p365 = por %p363, %p364
      %s366 = ssub.s32 %s30, %s37
      %p367 = scmp.eq.s32.totalorder %s366, 0
      %s369 = sadd.s32 %s368, 1
      %s370 = scalar_select %p367, %s368, %s369
      %p373 = pneg %p367
      %p374 = scmp.eq.s32.totalorder %s30, 1
      %p375 = por %p373, %p374
      %p376 = scmp.ne.s32.totalorder %s368, %s371
      %p377 = scmp.eq.s32.totalorder %s30, 0
      %p378 = por %p376, %p377
      %p379 = scmp.ne.s32.totalorder %s368, %s371
      %p380 = scmp.eq.s32.totalorder %s35, 1
      %p381 = por %p379, %p380
      %p382 = scmp.ne.s32.totalorder %s371, %s372
      %p383 = scmp.eq.s32.totalorder %s35, 0
      %p384 = por %p382, %p383
      %p385 = scmp.ne.s32.totalorder %s371, %s372
      %p386 = scmp.eq.s32.totalorder %s36, 1
      %p387 = por %p385, %p386
      %p389 = scmp.ne.s32.totalorder %s372, %s388
      %p390 = scmp.eq.s32.totalorder %s36, 0
      %p391 = por %p389, %p390
      %s393 = sadd.s32 %s392, 1
      %p396 = scmp.eq.s32.totalorder %s30, 1
      %p397 = scmp.ne.s32.totalorder %s392, %s394
      %p398 = scmp.eq.s32.totalorder %s30, 0
      %p399 = por %p397, %p398
      %p400 = scmp.ne.s32.totalorder %s392, %s394
      %p401 = scmp.eq.s32.totalorder %s35, 1
      %p402 = por %p400, %p401
      %p403 = scmp.ne.s32.totalorder %s394, %s395
      %p404 = scmp.eq.s32.totalorder %s35, 0
      %p405 = por %p403, %p404
      %p406 = scmp.ne.s32.totalorder %s394, %s395
      %p407 = scmp.eq.s32.totalorder %s36, 1
      %p408 = por %p406, %p407
      %p410 = scmp.ne.s32.totalorder %s395, %s409
      %p411 = scmp.eq.s32.totalorder %s36, 0
      %p412 = por %p410, %p411
      %s414 = sadd.s32 %s413, 1
      %p417 = scmp.eq.s32.totalorder %s30, 1
      %p418 = scmp.ne.s32.totalorder %s413, %s415
      %p419 = scmp.eq.s32.totalorder %s30, 0
      %p420 = por %p418, %p419
      %p421 = scmp.ne.s32.totalorder %s413, %s415
      %p422 = scmp.eq.s32.totalorder %s35, 1
      %p423 = por %p421, %p422
      %p424 = scmp.ne.s32.totalorder %s415, %s416
      %p425 = scmp.eq.s32.totalorder %s35, 0
      %p426 = por %p424, %p425
      %p427 = scmp.ne.s32.totalorder %s415, %s416
      %p428 = scmp.eq.s32.totalorder %s36, 1
      %p429 = por %p427, %p428
      %p431 = scmp.ne.s32.totalorder %s416, %s430
      %p432 = scmp.eq.s32.totalorder %s36, 0
      %p433 = por %p431, %p432
      %s435 = sadd.s32 %s434, 1
      %p438 = scmp.eq.s32.totalorder %s30, 1
      %p439 = scmp.ne.s32.totalorder %s434, %s436
      %p440 = scmp.eq.s32.totalorder %s30, 0
      %p441 = por %p439, %p440
      %p442 = scmp.ne.s32.totalorder %s434, %s436
      %p443 = scmp.eq.s32.totalorder %s35, 1
      %p444 = por %p442, %p443
      %p445 = scmp.ne.s32.totalorder %s436, %s437
      %p446 = scmp.eq.s32.totalorder %s35, 0
      %p447 = por %p445, %p446
      %p448 = scmp.ne.s32.totalorder %s436, %s437
      %p449 = scmp.eq.s32.totalorder %s36, 1
      %p450 = por %p448, %p449
      %p452 = scmp.ne.s32.totalorder %s437, %s451
      %p453 = scmp.eq.s32.totalorder %s36, 0
      %p454 = por %p452, %p453
      %s455 = ssub.s32 %s30, %s37
      %p456 = scmp.eq.s32.totalorder %s455, 0
      %s458 = sadd.s32 %s457, 1
      %s459 = scalar_select %p456, %s457, %s458
      %p462 = pneg %p456
      %p463 = scmp.eq.s32.totalorder %s30, 1
      %p464 = por %p462, %p463
      %p465 = scmp.ne.s32.totalorder %s457, %s460
      %p466 = scmp.eq.s32.totalorder %s30, 0
      %p467 = por %p465, %p466
      %p468 = scmp.ne.s32.totalorder %s457, %s460
      %p469 = scmp.eq.s32.totalorder %s35, 1
      %p470 = por %p468, %p469
      %p471 = scmp.ne.s32.totalorder %s460, %s461
      %p472 = scmp.eq.s32.totalorder %s35, 0
      %p473 = por %p471, %p472
      %p474 = scmp.ne.s32.totalorder %s460, %s461
      %p475 = scmp.eq.s32.totalorder %s36, 1
      %p476 = por %p474, %p475
      %p478 = scmp.ne.s32.totalorder %s461, %s477
      %p479 = scmp.eq.s32.totalorder %s36, 0
      %p480 = por %p478, %p479
      %p481 = scmp.le.s32.totalorder 1, %s30
      %p482 = scmp.lt.s32.totalorder %s30, 3
      %p483 = pnand %p481, %p482
      %p484 = pneg %p483
      // Predicated region
      $region9: #{tpu_custom_call.1} parent=5 // pred_check
        _
      $region10: #{tpu_custom_call.1} parent=5 // pred_check_branch
        %486 = sbr.rel (%p483) target = $region12
      $region11: #{tpu_custom_call.1} parent=5 // pred_region
        %s487 = ssub.s32 %s30, 1
        // Predicated region
        $region13: #{tpu_custom_call.1} parent=11 // pred_check
          %p488 = pneg %p51
        $region14: #{tpu_custom_call.1} parent=11 // pred_check_branch
          %490 = sbr.rel (%p488) target = $region16
        $region15: #{tpu_custom_call.1} parent=11 // pred_region
          %s492 = ssub.s32 256, 256
          %493 = vsyncadd [#allocation5], %s492
          %s494 = sshll.u32 [#allocation4], 4
          %s495 = int_to_ptr.vmem [resolvable:$true] %s494
          %500 = dma.hbm_to_vmem [thread:$0]  %s0, 256, %s495, [#allocation5], 128, 128, 8
        $region16: #{tpu_custom_call.1} parent=11 // pred_fallthru
          _
        // Predicated region
        $region17: #{tpu_custom_call.1} parent=11 // pred_check
          %p501 = pneg %p72
        $region18: #{tpu_custom_call.1} parent=11 // pred_check_branch
          %503 = sbr.rel (%p501) target = $region20
        $region19: #{tpu_custom_call.1} parent=11 // pred_region
          %s505 = ssub.s32 128, 128
          %506 = vsyncadd [#allocation8], %s505
          %s508 = sshll.u32 [#allocation7], 4
          %s509 = int_to_ptr.vmem [resolvable:$true] %s508
          %511 = dma.hbm_to_vmem [thread:$0]  %s1, 128, %s509, [#allocation8]
        $region20: #{tpu_custom_call.1} parent=11 // pred_fallthru
          _
        // Predicated region
        $region21: #{tpu_custom_call.1} parent=11 // pred_check
          %p512 = pneg %p405
        $region22: #{tpu_custom_call.1} parent=11 // pred_check_branch
          %514 = sbr.rel (%p512) target = $region24
        $region23: #{tpu_custom_call.1} parent=11 // pred_region
          _
        $region24: #{tpu_custom_call.1} parent=11 // pred_fallthru
          _
        // Predicated region
        $region25: #{tpu_custom_call.1} parent=11 // pred_check
          %p515 = pneg %p426
        $region26: #{tpu_custom_call.1} parent=11 // pred_check_branch
          %517 = sbr.rel (%p515) target = $region28
        $region27: #{tpu_custom_call.1} parent=11 // pred_region
          _
        $region28: #{tpu_custom_call.1} parent=11 // pred_fallthru
          _
      $region12: #{tpu_custom_call.1} parent=5 // pred_fallthru
        _
      %p518 = scmp.lt.s32.totalorder %s30, 2
      // Predicated region
      $region29: #{tpu_custom_call.1} parent=5 // pred_check
        %p519 = pneg %p518
      $region30: #{tpu_custom_call.1} parent=5 // pred_check_branch
        %521 = sbr.rel (%p519) target = $region32
      $region31: #{tpu_custom_call.1} parent=5 // pred_region
        // Predicated region
        $region33: #{tpu_custom_call.1} parent=31 // pred_check
          %p522 = pneg %p92
        $region34: #{tpu_custom_call.1} parent=31 // pred_check_branch
          %524 = sbr.rel (%p522) target = $region36
        $region35: #{tpu_custom_call.1} parent=31 // pred_region
          %p525 = scmp.lt.s32.totalorder %s30, 1
          %s526 = scalar_select %p525, %s30, 1
          %s527 = scalar_lea.vmem %s2, %s526
        $region36: #{tpu_custom_call.1} parent=31 // pred_fallthru
          _
        // Predicated region
        $region37: #{tpu_custom_call.1} parent=31 // pred_check
          %p528 = pneg %p118
        $region38: #{tpu_custom_call.1} parent=31 // pred_check_branch
          %530 = sbr.rel (%p528) target = $region40
        $region39: #{tpu_custom_call.1} parent=31 // pred_region
          %p531 = scmp.lt.s32.totalorder %s30, 1
          %s532 = scalar_select %p531, %s30, 1
          %s533 = scalar_lea.vmem %s3, %s532
        $region40: #{tpu_custom_call.1} parent=31 // pred_fallthru
          _
        // Predicated region
        $region41: #{tpu_custom_call.1} parent=31 // pred_check
          %p534 = pneg %p144
        $region42: #{tpu_custom_call.1} parent=31 // pred_check_branch
          %536 = sbr.rel (%p534) target = $region44
        $region43: #{tpu_custom_call.1} parent=31 // pred_region
          %p537 = scmp.lt.s32.totalorder %s30, 1
          %s538 = scalar_select %p537, %s30, 1
          %s539 = smul.addr %s538, 4
          %s540 = smul.addr %s539, 8
          %s541 = scalar_lea.vmem %s4, %s540
        $region44: #{tpu_custom_call.1} parent=31 // pred_fallthru
          _
        // Predicated region
        $region45: #{tpu_custom_call.1} parent=31 // pred_check
          %p542 = pneg %p170
        $region46: #{tpu_custom_call.1} parent=31 // pred_check_branch
          %544 = sbr.rel (%p542) target = $region48
        $region47: #{tpu_custom_call.1} parent=31 // pred_region
          %p545 = scmp.lt.s32.totalorder %s30, 1
          %s546 = scalar_select %p545, %s30, 1
          %s547 = scalar_lea.vmem %s5, %s546
        $region48: #{tpu_custom_call.1} parent=31 // pred_fallthru
          _
        // Predicated region
        $region49: #{tpu_custom_call.1} parent=31 // pred_check
          %p548 = pneg %p196
        $region50: #{tpu_custom_call.1} parent=31 // pred_check_branch
          %550 = sbr.rel (%p548) target = $region52
        $region51: #{tpu_custom_call.1} parent=31 // pred_region
          %p551 = scmp.lt.s32.totalorder %s30, 1
          %s552 = scalar_select %p551, %s30, 1
          %s553 = smul.addr %s552, 4
          %s554 = smul.addr %s553, 8
          %s555 = scalar_lea.vmem %s6, %s554
        $region52: #{tpu_custom_call.1} parent=31 // pred_fallthru
          _
        // Predicated region
        $region53: #{tpu_custom_call.1} parent=31 // pred_check
          %p556 = pneg %p222
        $region54: #{tpu_custom_call.1} parent=31 // pred_check_branch
          %558 = sbr.rel (%p556) target = $region56
        $region55: #{tpu_custom_call.1} parent=31 // pred_region
          %p559 = scmp.lt.s32.totalorder %s30, 1
          %s560 = scalar_select %p559, %s30, 1
          %s561 = scalar_lea.vmem %s7, %s560
        $region56: #{tpu_custom_call.1} parent=31 // pred_fallthru
          _
        // Predicated region
        $region57: #{tpu_custom_call.1} parent=31 // pred_check
          %p562 = pneg %p248
        $region58: #{tpu_custom_call.1} parent=31 // pred_check_branch
          %564 = sbr.rel (%p562) target = $region60
        $region59: #{tpu_custom_call.1} parent=31 // pred_region
          %p565 = scmp.lt.s32.totalorder %s30, 1
          %s566 = scalar_select %p565, %s30, 1
          %s567 = scalar_lea.vmem %s8, %s566
        $region60: #{tpu_custom_call.1} parent=31 // pred_fallthru
          _
        // Predicated region
        $region61: #{tpu_custom_call.1} parent=31 // pred_check
          %p568 = pneg %p274
        $region62: #{tpu_custom_call.1} parent=31 // pred_check_branch
          %570 = sbr.rel (%p568) target = $region64
        $region63: #{tpu_custom_call.1} parent=31 // pred_region
          %p571 = scmp.lt.s32.totalorder %s30, 1
          %s572 = scalar_select %p571, %s30, 1
          %s573 = scalar_lea.vmem %s9, %s572
        $region64: #{tpu_custom_call.1} parent=31 // pred_fallthru
          _
        // Predicated region
        $region65: #{tpu_custom_call.1} parent=31 // pred_check
          %p574 = pneg %p300
        $region66: #{tpu_custom_call.1} parent=31 // pred_check_branch
          %576 = sbr.rel (%p574) target = $region68
        $region67: #{tpu_custom_call.1} parent=31 // pred_region
          %p577 = scmp.lt.s32.totalorder %s30, 1
          %s578 = scalar_select %p577, %s30, 1
          %s579 = smul.addr %s578, 4
          %s580 = smul.addr %s579, 8
          %s581 = scalar_lea.vmem %s10, %s580
        $region68: #{tpu_custom_call.1} parent=31 // pred_fallthru
          _
        // Predicated region
        $region69: #{tpu_custom_call.1} parent=31 // pred_check
          %p582 = pneg %p326
        $region70: #{tpu_custom_call.1} parent=31 // pred_check_branch
          %584 = sbr.rel (%p582) target = $region72
        $region71: #{tpu_custom_call.1} parent=31 // pred_region
          %p585 = scmp.lt.s32.totalorder %s30, 1
          %s586 = scalar_select %p585, %s30, 1
          %s587 = scalar_lea.vmem %s11, %s586
        $region72: #{tpu_custom_call.1} parent=31 // pred_fallthru
          _
        // Predicated region
        $region73: #{tpu_custom_call.1} parent=31 // pred_check
          %p588 = pneg %p352
        $region74: #{tpu_custom_call.1} parent=31 // pred_check_branch
          %590 = sbr.rel (%p588) target = $region76
        $region75: #{tpu_custom_call.1} parent=31 // pred_region
          %p591 = scmp.lt.s32.totalorder %s30, 1
          %s592 = scalar_select %p591, %s30, 1
          %s593 = smul.addr %s592, 8
          %s594 = smul.addr %s593, 8
          %s595 = scalar_lea.vmem %s12, %s594
        $region76: #{tpu_custom_call.1} parent=31 // pred_fallthru
          _
        // Predicated region
        $region77: #{tpu_custom_call.1} parent=31 // pred_check
          %p596 = pneg %p378
        $region78: #{tpu_custom_call.1} parent=31 // pred_check_branch
          %598 = sbr.rel (%p596) target = $region80
        $region79: #{tpu_custom_call.1} parent=31 // pred_region
          %p599 = scmp.lt.s32.totalorder %s30, 1
          %s600 = scalar_select %p599, %s30, 1
          %s601 = scalar_lea.vmem %s13, %s600
        $region80: #{tpu_custom_call.1} parent=31 // pred_fallthru
          _
      $region32: #{tpu_custom_call.1} parent=5 // pred_fallthru
        _
      %p602 = scmp.le.s32.totalorder 1, %s30
      %p603 = scmp.lt.s32.totalorder %s30, 3
      %p604 = pnand %p602, %p603
      %p605 = pneg %p604
      // Predicated region
      $region81: #{tpu_custom_call.1} parent=5 // pred_check
        _
      $region82: #{tpu_custom_call.1} parent=5 // pred_check_branch
        %607 = sbr.rel (%p604) target = $region84
      $region83: #{tpu_custom_call.1} parent=5 // pred_region
        %s608 = ssub.s32 %s30, 1
        // Predicated region
        $region85: #{tpu_custom_call.1} parent=83 // pred_check
          %p609 = pneg %p51
        $region86: #{tpu_custom_call.1} parent=83 // pred_check_branch
          %611 = sbr.rel (%p609) target = $region88
        $region87: #{tpu_custom_call.1} parent=83 // pred_region
          %612 = dma.done [#allocation5], 256
        $region88: #{tpu_custom_call.1} parent=83 // pred_fallthru
          _
        // Predicated region
        $region89: #{tpu_custom_call.1} parent=83 // pred_check
          %p613 = pneg %p72
        $region90: #{tpu_custom_call.1} parent=83 // pred_check_branch
          %615 = sbr.rel (%p613) target = $region92
        $region91: #{tpu_custom_call.1} parent=83 // pred_region
          %616 = dma.done [#allocation8], 128
        $region92: #{tpu_custom_call.1} parent=83 // pred_fallthru
          _
        %p617 = pneg %p51
        %p618 = pneg %p48
        %p619 = pneg %p72
        %p620 = pneg %p69
        %p621 = scmp.lt.s32.totalorder %s35, 1
        %s622 = scalar_select %p621, %s35, 1
        %s623 = scalar_lea.vmem %s2, %s622
        %p624 = pneg %p98
        %p625 = pneg %p95
        %p626 = scmp.lt.s32.totalorder %s35, 1
        %s627 = scalar_select %p626, %s35, 1
        %s628 = scalar_lea.vmem %s3, %s627
        %p629 = pneg %p124
        %p630 = pneg %p121
        %p631 = scmp.lt.s32.totalorder %s35, 1
        %s632 = scalar_select %p631, %s35, 1
        %s633 = smul.addr %s632, 4
        %s634 = smul.addr %s633, 8
        %s635 = scalar_lea.vmem %s4, %s634
        %p636 = pneg %p150
        %p637 = pneg %p147
        %p638 = scmp.lt.s32.totalorder %s35, 1
        %s639 = scalar_select %p638, %s35, 1
        %s640 = scalar_lea.vmem %s5, %s639
        %p641 = pneg %p176
        %p642 = pneg %p173
        %p643 = scmp.lt.s32.totalorder %s35, 1
        %s644 = scalar_select %p643, %s35, 1
        %s645 = smul.addr %s644, 4
        %s646 = smul.addr %s645, 8
        %s647 = scalar_lea.vmem %s6, %s646
        %p648 = pneg %p202
        %p649 = pneg %p199
        %p650 = scmp.lt.s32.totalorder %s35, 1
        %s651 = scalar_select %p650, %s35, 1
        %s652 = scalar_lea.vmem %s7, %s651
        %p653 = pneg %p228
        %p654 = pneg %p225
        %p655 = scmp.lt.s32.totalorder %s35, 1
        %s656 = scalar_select %p655, %s35, 1
        %s657 = scalar_lea.vmem %s8, %s656
        %p658 = pneg %p254
        %p659 = pneg %p251
        %p660 = scmp.lt.s32.totalorder %s35, 1
        %s661 = scalar_select %p660, %s35, 1
        %s662 = scalar_lea.vmem %s9, %s661
        %p663 = pneg %p280
        %p664 = pneg %p277
        %p665 = scmp.lt.s32.totalorder %s35, 1
        %s666 = scalar_select %p665, %s35, 1
        %s667 = smul.addr %s666, 4
        %s668 = smul.addr %s667, 8
        %s669 = scalar_lea.vmem %s10, %s668
        %p670 = pneg %p306
        %p671 = pneg %p303
        %p672 = scmp.lt.s32.totalorder %s35, 1
        %s673 = scalar_select %p672, %s35, 1
        %s674 = scalar_lea.vmem %s11, %s673
        %p675 = pneg %p332
        %p676 = pneg %p329
        %p677 = scmp.lt.s32.totalorder %s35, 1
        %s678 = scalar_select %p677, %s35, 1
        %s679 = smul.addr %s678, 8
        %s680 = smul.addr %s679, 8
        %s681 = scalar_lea.vmem %s12, %s680
        %p682 = pneg %p358
        %p683 = pneg %p355
        %p684 = scmp.lt.s32.totalorder %s35, 1
        %s685 = scalar_select %p684, %s35, 1
        %s686 = scalar_lea.vmem %s13, %s685
        %p687 = pneg %p384
        %p688 = pneg %p381
        %p689 = pneg %p405
        %p690 = pneg %p402
        %p691 = pneg %p426
        %p692 = pneg %p423
        %p693 = pneg %p447
        %p694 = pneg %p444
        %p695 = pneg %p473
        %p696 = pneg %p470
        %s697 = sand.u32 %s460, 1
        %s698 = scalar_lea.sflag [#allocation11], %s697
        %s699 = sand.u32 %s460, 1
        %s700 = smul.addr %s699, 32
        %s701 = scalar_lea.vmem [#allocation10], %s700
        %p702 = scmp.lt.s32.totalorder %s35, 1
        %s703 = scalar_select %p702, %s35, 1
        %s704 = scalar_lea.vmem %s2, %s703
        %p705 = scmp.lt.s32.totalorder %s35, 1
        %s706 = scalar_select %p705, %s35, 1
        %s707 = scalar_lea.vmem %s3, %s706
        %p708 = scmp.lt.s32.totalorder %s35, 1
        %s709 = scalar_select %p708, %s35, 1
        %s710 = smul.addr %s709, 4
        %s711 = smul.addr %s710, 8
        %s712 = scalar_lea.vmem %s4, %s711
        %p713 = scmp.lt.s32.totalorder %s35, 1
        %s714 = scalar_select %p713, %s35, 1
        %s715 = scalar_lea.vmem %s5, %s714
        %p716 = scmp.lt.s32.totalorder %s35, 1
        %s717 = scalar_select %p716, %s35, 1
        %s718 = smul.addr %s717, 4
        %s719 = smul.addr %s718, 8
        %s720 = scalar_lea.vmem %s6, %s719
        %p721 = scmp.lt.s32.totalorder %s35, 1
        %s722 = scalar_select %p721, %s35, 1
        %s723 = scalar_lea.vmem %s7, %s722
        %p724 = scmp.lt.s32.totalorder %s35, 1
        %s725 = scalar_select %p724, %s35, 1
        %s726 = scalar_lea.vmem %s8, %s725
        %p727 = scmp.lt.s32.totalorder %s35, 1
        %s728 = scalar_select %p727, %s35, 1
        %s729 = scalar_lea.vmem %s9, %s728
        %p730 = scmp.lt.s32.totalorder %s35, 1
        %s731 = scalar_select %p730, %s35, 1
        %s732 = smul.addr %s731, 4
        %s733 = smul.addr %s732, 8
        %s734 = scalar_lea.vmem %s10, %s733
        %p735 = scmp.lt.s32.totalorder %s35, 1
        %s736 = scalar_select %p735, %s35, 1
        %s737 = scalar_lea.vmem %s11, %s736
        %p738 = scmp.lt.s32.totalorder %s35, 1
        %s739 = scalar_select %p738, %s35, 1
        %s740 = smul.addr %s739, 8
        %s741 = smul.addr %s740, 8
        %s742 = scalar_lea.vmem %s12, %s741
        %p743 = scmp.lt.s32.totalorder %s35, 1
        %s744 = scalar_select %p743, %s35, 1
        %s745 = scalar_lea.vmem %s13, %s744
        %p746 = scmp.eq.s32.totalorder %s35, 0
        // Predicated region
        $region93: #{tpu_custom_call.1} parent=83 // pred_check
          %p747 = pneg %p746
        $region94: #{tpu_custom_call.1} parent=83 // pred_check_branch
          %749 = sbr.rel (%p747) target = $region96
        $region95: #{tpu_custom_call.1} parent=83 // pred_region
          %v750 = vld [vmem:[#allocation7] sm:$0xff]
          %v751 = vld [vmem:[#allocation4] sm:$0xff]
          %v752 = vadd.f32 %v751, %v750
          %vm753 = vcmask 261120
          %754 = vst.msk [vmem:[#allocation2] sm:$0xff] %vm753, %v752
          %s755 = scalar_lea.vmem [#allocation4], 8
          %v756 = vld [vmem:[%s755] sm:$0xff]
          %v757 = vadd.f32 %v756, %v750
          %758 = vst.msk [vmem:[#allocation2 + $0x8] sm:$0xff] %vm753, %v757
        $region96: #{tpu_custom_call.1} parent=83 // pred_fallthru
          _
        %v759 = vld [vmem:[#allocation2] sm:$0xff]
        %v760 = vld [vmem:[#allocation2 + $0x8] sm:$0xff]
        %v761 = vld [vmem:[%s704] sm:$0x1]
        %v762 = vld [vmem:[%s707] sm:$0x1]
        %vm763 = vcmask 261120
        %v764 = vsel %vm763, %v759, 0.0
        %765 = vadd.xlane.f32.xlu0 %v764
        %v766 = vpop.xlane.xlu0 %765
        %v767 = vsel %vm763, %v760, 0.0
        %768 = vadd.xlane.f32.xlu0 %v767
        %v769 = vpop.xlane.xlu0 %768
        %v770 = vrcp.pop 32.0
        %v771 = vmul.f32 %v766, %v770
        %v772 = vmul.f32 %v769, %v770
        %v773 = vsub.f32 %v759, %v771
        %v774 = vsub.f32 %v760, %v772
        %v775 = vmul.f32 %v773, %v773
        %v776 = vmul.f32 %v774, %v774
        %v777 = vsel %vm763, %v775, 0.0
        %778 = vadd.xlane.f32.xlu0 %v777
        %v779 = vpop.xlane.xlu0 %778
        %v780 = vsel %vm763, %v776, 0.0
        %781 = vadd.xlane.f32.xlu0 %v780
        %v782 = vpop.xlane.xlu0 %781
        %v783 = vmul.f32 %v779, %v770
        %v784 = vmul.f32 %v782, %v770
        %v785 = vadd.f32 %v783, 1e-05
        %v786 = vadd.f32 %v784, 1e-05
        %v787 = vrsqrt.pop %v785
        %v788 = vrsqrt.pop %v786
        %v789 = vmul.f32 %v773, %v787
        %v790 = vmul.f32 %v774, %v788
        %v792 = vlaneseq
        %v793 = vshrl.u32 %v792, 7
        %v794 = vsub.s32 0, %v793
        %v795 = vrot.slane %v761, %v794
        %v797 = vmul.f32 %v789, %v795
        %v798 = vmul.f32 %v790, %v795
        %v800 = vlaneseq
        %v801 = vshrl.u32 %v800, 7
        %v802 = vsub.s32 0, %v801
        %v803 = vrot.slane %v762, %v802
        %v805 = vadd.f32 %v797, %v803
        %v806 = vadd.f32 %v798, %v803
        %v807 = vld [vmem:[%s712] sm:$0xff]
        %v808 = vld [vmem:[%s712 + $0x8] sm:$0xff]
        %v809 = vld [vmem:[%s712 + $0x10] sm:$0xff]
        %v810 = vld [vmem:[%s712 + $0x18] sm:$0xff]
        %v811 = vld [vmem:[%s715] sm:$0x1]
        %v813 = vlaneseq
        %v814 = vshrl.u32 %v813, 7
        %v815 = vsub.s32 0, %v814
        %v816 = vrot.slane %v811, %v815
        %v819 = vsel %vm763, %v805, 0
        %v822 = vsel %vm763, %v806, 0
        %824 = vmatprep.subr.mxu0 0.0
        %825 = vmatpush1.msra.mxu0 %v807
        %826 = vmatprep.subr.mxu0 0.0
        %827 = vmatpush1.msra.mxu0 %v808
        %828 = vmatprep.subr.mxu0 0.0
        %829 = vmatpush1.msra.mxu0 %v809
        %830 = vmatprep.subr.mxu0 0.0
        %831 = vmatpush1.msra.mxu0 %v810
        %832 = vmatprep.subr.mxu0 0.0
        %833 = vmatpush1.msra.mxu0 0.0
        %834 = vmatprep.subr.mxu0 0.0
        %835 = vmatpush1.msra.mxu0 0.0
        %836 = vmatprep.subr.mxu0 0.0
        %837 = vmatpush1.msra.mxu0 0.0
        %838 = vmatprep.subr.mxu0 0.0
        %839 = vmatpush1.msra.mxu0 0.0
        %840 = vmatprep.subr.mxu0 0.0
        %841 = vmatpush1.msra.mxu0 0.0
        %842 = vmatprep.subr.mxu0 0.0
        %843 = vmatpush1.msra.mxu0 0.0
        %844 = vmatprep.subr.mxu0 0.0
        %845 = vmatpush1.msra.mxu0 0.0
        %846 = vmatprep.subr.mxu0 0.0
        %847 = vmatpush1.msra.mxu0 0.0
        %848 = vmatprep.subr.mxu0 0.0
        %849 = vmatpush1.msra.mxu0 0.0
        %850 = vmatprep.subr.mxu0 0.0
        %851 = vmatpush1.msra.mxu0 0.0
        %852 = vmatprep.subr.mxu0 0.0
        %853 = vmatpush1.msra.mxu0 0.0
        %854 = vmatprep.subr.mxu0 0.0
        %855 = vmatpush1.msra.mxu0 0.0
        %856 = vmatprep.subr.mxu0 0.0
        %857 = vmatpush1.msra.mxu0 0.0
        %858 = vmatprep.subr.mxu0 0.0
        %859 = vmatpush1.msra.mxu0 0.0
        %860 = vmatprep.subr.mxu0 0.0
        %861 = vmatpush1.msra.mxu0 0.0
        %862 = vmatprep.subr.mxu0 0.0
        %863 = vmatpush1.msra.mxu0 0.0
        %864 = vmatprep.subr.mxu0 0.0
        %865 = vmatpush1.msra.mxu0 0.0
        %866 = vmatprep.subr.mxu0 0.0
        %867 = vmatpush1.msra.mxu0 0.0
        %868 = vmatprep.subr.mxu0 0.0
        %869 = vmatpush1.msra.mxu0 0.0
        %870 = vmatprep.subr.mxu0 0.0
        %871 = vmatpush1.msra.mxu0 0.0
        %872 = vmatprep.subr.mxu0 0.0
        %873 = vmatpush1.msra.mxu0 0.0
        %874 = vmatprep.subr.mxu0 0.0
        %875 = vmatpush1.msra.mxu0 0.0
        %876 = vmatprep.subr.mxu0 0.0
        %877 = vmatpush1.msra.mxu0 0.0
        %878 = vmatprep.subr.mxu0 0.0
        %879 = vmatpush1.msra.mxu0 0.0
        %880 = vmatprep.subr.mxu0 0.0
        %881 = vmatpush1.msra.mxu0 0.0
        %882 = vmatprep.subr.mxu0 0.0
        %883 = vmatpush1.msra.mxu0 0.0
        %884 = vmatprep.subr.mxu0 0.0
        %885 = vmatpush1.msra.mxu0 0.0
        %886 = vmatprep.subr.mxu0 0.0
        %887 = vmatpush1.msra.mxu0 0.0
        %888 = vmatprep.mubr.f32.mxu0 0.0
        %889 = vmatmul.mubr.f32.gmra.mrb[0].mxu0 %v819
        %v890 = vpop.f32.mrb[0].mxu0
        %v891 = vadd.f32 %v816, %v890
        %v892 = vpop.f32.mrb[0].mxu0
        %893 = vmatprep.mubr.f32.mxu0 0.0
        %894 = vmatmul.mubr.f32.gmra.mrb[0].mxu0 %v822
        %v895 = vpop.f32.mrb[0].mxu0
        %v896 = vadd.f32 %v816, %v895
        %v897 = vpop.f32.mrb[0].mxu0
        %898 = vdwg.mxu0
        %900 = vrot.lane.b32.xlu0 %v891, 96
        %v901 = vpop.permute.xlu0 %900
        %vm902 = vcmask 64512
        %v903 = vsel %vm902, %v891, 0
        %v905 = vsel %vm902, %v901, 0
        %907 = vmatprep.subr.mxu0 0.0
        %908 = vmatpush1.xpose.msra.mxu0 %v905
        %909 = vmatprep.subr.mxu0 0.0
        %910 = vmatpush1.xpose.msra.mxu0 0.0
        %911 = vmatprep.subr.mxu0 0.0
        %912 = vmatpush1.xpose.msra.mxu0 0.0
        %913 = vmatprep.subr.mxu0 0.0
        %914 = vmatpush1.xpose.msra.mxu0 0.0
        %915 = vmatprep.subr.mxu0 0.0
        %916 = vmatpush1.xpose.msra.mxu0 0.0
        %917 = vmatprep.subr.mxu0 0.0
        %918 = vmatpush1.xpose.msra.mxu0 0.0
        %919 = vmatprep.subr.mxu0 0.0
        %920 = vmatpush1.xpose.msra.mxu0 0.0
        %921 = vmatprep.subr.mxu0 0.0
        %922 = vmatpush1.xpose.msra.mxu0 0.0
        %923 = vmatprep.subr.mxu0 0.0
        %924 = vmatpush1.xpose.msra.mxu0 0.0
        %925 = vmatprep.subr.mxu0 0.0
        %926 = vmatpush1.xpose.msra.mxu0 0.0
        %927 = vmatprep.subr.mxu0 0.0
        %928 = vmatpush1.xpose.msra.mxu0 0.0
        %929 = vmatprep.subr.mxu0 0.0
        %930 = vmatpush1.xpose.msra.mxu0 0.0
        %931 = vmatprep.subr.mxu0 0.0
        %932 = vmatpush1.xpose.msra.mxu0 0.0
        %933 = vmatprep.subr.mxu0 0.0
        %934 = vmatpush1.xpose.msra.mxu0 0.0
        %935 = vmatprep.subr.mxu0 0.0
        %936 = vmatpush1.xpose.msra.mxu0 0.0
        %937 = vmatprep.subr.mxu0 0.0
        %938 = vmatpush1.xpose.msra.mxu0 0.0
        %939 = vmatprep.subr.mxu0 0.0
        %940 = vmatpush1.xpose.msra.mxu0 0.0
        %941 = vmatprep.subr.mxu0 0.0
        %942 = vmatpush1.xpose.msra.mxu0 0.0
        %943 = vmatprep.subr.mxu0 0.0
        %944 = vmatpush1.xpose.msra.mxu0 0.0
        %945 = vmatprep.subr.mxu0 0.0
        %946 = vmatpush1.xpose.msra.mxu0 0.0
        %947 = vmatprep.subr.mxu0 0.0
        %948 = vmatpush1.xpose.msra.mxu0 0.0
        %949 = vmatprep.subr.mxu0 0.0
        %950 = vmatpush1.xpose.msra.mxu0 0.0
        %951 = vmatprep.subr.mxu0 0.0
        %952 = vmatpush1.xpose.msra.mxu0 0.0
        %953 = vmatprep.subr.mxu0 0.0
        %954 = vmatpush1.xpose.msra.mxu0 0.0
        %955 = vmatprep.subr.mxu0 0.0
        %956 = vmatpush1.xpose.msra.mxu0 0.0
        %957 = vmatprep.subr.mxu0 0.0
        %958 = vmatpush1.xpose.msra.mxu0 0.0
        %959 = vmatprep.subr.mxu0 0.0
        %960 = vmatpush1.xpose.msra.mxu0 0.0
        %961 = vmatprep.subr.mxu0 0.0
        %962 = vmatpush1.xpose.msra.mxu0 0.0
        %963 = vmatprep.subr.mxu0 0.0
        %964 = vmatpush1.xpose.msra.mxu0 0.0
        %965 = vmatprep.subr.mxu0 0.0
        %966 = vmatpush1.xpose.msra.mxu0 0.0
        %967 = vmatprep.subr.mxu0 0.0
        %968 = vmatpush1.xpose.msra.mxu0 0.0
        %969 = vmatprep.subr.mxu0 0.0
        %970 = vmatpush1.xpose.msra.mxu0 0.0
        %971 = vmatprep.mubr.f32.mxu0 0.0
        %972 = vmatmul.mubr.f32.gmra.mrb[0].mxu0 %v903
        %v973 = vpop.f32.mrb[0].mxu0
        %v974 = vadd.f32 0.0, %v973
        %v975 = vpop.f32.mrb[0].mxu0
        %976 = vdwg.mxu0
        %v977 = vmul.f32 %v974, 0.35355338
        %v978 = vsel %vm902, %v977, -inf
        %979 = vmax.xlane.f32.xlu0 %v978
        %v980 = vpop.xlane.xlu0 %979
        %v981 = vsub.f32 %v977, %v980
        %v982 = vmul.f32 %v981, 1.442695
        %v983 = vpow.pop %v982
        %v984 = vsel %vm902, %v983, 0.0
        %985 = vadd.xlane.f32.xlu0 %v984
        %v986 = vpop.xlane.xlu0 %985
        %v987 = vrcp.pop %v986
        %v988 = vmul.f32 %v983, %v987
        %989 = vst.msk [vmem:[%s701] sm:$0xff] %vm902, %v988
        %990 = vrot.lane.b32.xlu0 %v891, 64
        %v991 = vpop.permute.xlu0 %990
        %v994 = vsel %vm902, %v988, 0
        %996 = vmatprep.subr.mxu0 0.0
        %997 = vmatpush1.msra.mxu0 %v991
        %998 = vmatprep.subr.mxu0 0.0
        %999 = vmatpush1.msra.mxu0 0.0
        %1000 = vmatprep.subr.mxu0 0.0
        %1001 = vmatpush1.msra.mxu0 0.0
        %1002 = vmatprep.subr.mxu0 0.0
        %1003 = vmatpush1.msra.mxu0 0.0
        %1004 = vmatprep.subr.mxu0 0.0
        %1005 = vmatpush1.msra.mxu0 0.0
        %1006 = vmatprep.subr.mxu0 0.0
        %1007 = vmatpush1.msra.mxu0 0.0
        %1008 = vmatprep.subr.mxu0 0.0
        %1009 = vmatpush1.msra.mxu0 0.0
        %1010 = vmatprep.subr.mxu0 0.0
        %1011 = vmatpush1.msra.mxu0 0.0
        %1012 = vmatprep.subr.mxu0 0.0
        %1013 = vmatpush1.msra.mxu0 0.0
        %1014 = vmatprep.subr.mxu0 0.0
        %1015 = vmatpush1.msra.mxu0 0.0
        %1016 = vmatprep.subr.mxu0 0.0
        %1017 = vmatpush1.msra.mxu0 0.0
        %1018 = vmatprep.subr.mxu0 0.0
        %1019 = vmatpush1.msra.mxu0 0.0
        %1020 = vmatprep.subr.mxu0 0.0
        %1021 = vmatpush1.msra.mxu0 0.0
        %1022 = vmatprep.subr.mxu0 0.0
        %1023 = vmatpush1.msra.mxu0 0.0
        %1024 = vmatprep.subr.mxu0 0.0
        %1025 = vmatpush1.msra.mxu0 0.0
        %1026 = vmatprep.subr.mxu0 0.0
        %1027 = vmatpush1.msra.mxu0 0.0
        %1028 = vmatprep.subr.mxu0 0.0
        %1029 = vmatpush1.msra.mxu0 0.0
        %1030 = vmatprep.subr.mxu0 0.0
        %1031 = vmatpush1.msra.mxu0 0.0
        %1032 = vmatprep.subr.mxu0 0.0
        %1033 = vmatpush1.msra.mxu0 0.0
        %1034 = vmatprep.subr.mxu0 0.0
        %1035 = vmatpush1.msra.mxu0 0.0
        %1036 = vmatprep.subr.mxu0 0.0
        %1037 = vmatpush1.msra.mxu0 0.0
        %1038 = vmatprep.subr.mxu0 0.0
        %1039 = vmatpush1.msra.mxu0 0.0
        %1040 = vmatprep.subr.mxu0 0.0
        %1041 = vmatpush1.msra.mxu0 0.0
        %1042 = vmatprep.subr.mxu0 0.0
        %1043 = vmatpush1.msra.mxu0 0.0
        %1044 = vmatprep.subr.mxu0 0.0
        %1045 = vmatpush1.msra.mxu0 0.0
        %1046 = vmatprep.subr.mxu0 0.0
        %1047 = vmatpush1.msra.mxu0 0.0
        %1048 = vmatprep.subr.mxu0 0.0
        %1049 = vmatpush1.msra.mxu0 0.0
        %1050 = vmatprep.subr.mxu0 0.0
        %1051 = vmatpush1.msra.mxu0 0.0
        %1052 = vmatprep.subr.mxu0 0.0
        %1053 = vmatpush1.msra.mxu0 0.0
        %1054 = vmatprep.subr.mxu0 0.0
        %1055 = vmatpush1.msra.mxu0 0.0
        %1056 = vmatprep.subr.mxu0 0.0
        %1057 = vmatpush1.msra.mxu0 0.0
        %1058 = vmatprep.subr.mxu0 0.0
        %1059 = vmatpush1.msra.mxu0 0.0
        %1060 = vmatprep.mubr.f32.mxu0 0.0
        %1061 = vmatmul.mubr.f32.gmra.mrb[0].mxu0 %v994
        %v1062 = vpop.f32.mrb[0].mxu0
        %v1063 = vadd.f32 0.0, %v1062
        %v1064 = vpop.f32.mrb[0].mxu0
        %1065 = vdwg.mxu0
        %1066 = vst.msk [vmem:[#allocation3] sm:$0xff] %vm902, %v1063
        %1067 = vrot.lane.b32.xlu0 %v891, 120
        %v1068 = vpop.permute.xlu0 %1067
        %1069 = vrot.lane.b32.xlu0 %v891, 88
        %v1070 = vpop.permute.xlu0 %1069
        %v1071 = vsel %vm902, %v1068, 0
        %v1073 = vsel %vm902, %v1070, 0
        %1075 = vmatprep.subr.mxu0 0.0
        %1076 = vmatpush1.xpose.msra.mxu0 %v1073
        %1077 = vmatprep.subr.mxu0 0.0
        %1078 = vmatpush1.xpose.msra.mxu0 0.0
        %1079 = vmatprep.subr.mxu0 0.0
        %1080 = vmatpush1.xpose.msra.mxu0 0.0
        %1081 = vmatprep.subr.mxu0 0.0
        %1082 = vmatpush1.xpose.msra.mxu0 0.0
        %1083 = vmatprep.subr.mxu0 0.0
        %1084 = vmatpush1.xpose.msra.mxu0 0.0
        %1085 = vmatprep.subr.mxu0 0.0
        %1086 = vmatpush1.xpose.msra.mxu0 0.0
        %1087 = vmatprep.subr.mxu0 0.0
        %1088 = vmatpush1.xpose.msra.mxu0 0.0
        %1089 = vmatprep.subr.mxu0 0.0
        %1090 = vmatpush1.xpose.msra.mxu0 0.0
        %1091 = vmatprep.subr.mxu0 0.0
        %1092 = vmatpush1.xpose.msra.mxu0 0.0
        %1093 = vmatprep.subr.mxu0 0.0
        %1094 = vmatpush1.xpose.msra.mxu0 0.0
        %1095 = vmatprep.subr.mxu0 0.0
        %1096 = vmatpush1.xpose.msra.mxu0 0.0
        %1097 = vmatprep.subr.mxu0 0.0
        %1098 = vmatpush1.xpose.msra.mxu0 0.0
        %1099 = vmatprep.subr.mxu0 0.0
        %1100 = vmatpush1.xpose.msra.mxu0 0.0
        %1101 = vmatprep.subr.mxu0 0.0
        %1102 = vmatpush1.xpose.msra.mxu0 0.0
        %1103 = vmatprep.subr.mxu0 0.0
        %1104 = vmatpush1.xpose.msra.mxu0 0.0
        %1105 = vmatprep.subr.mxu0 0.0
        %1106 = vmatpush1.xpose.msra.mxu0 0.0
        %1107 = vmatprep.subr.mxu0 0.0
        %1108 = vmatpush1.xpose.msra.mxu0 0.0
        %1109 = vmatprep.subr.mxu0 0.0
        %1110 = vmatpush1.xpose.msra.mxu0 0.0
        %1111 = vmatprep.subr.mxu0 0.0
        %1112 = vmatpush1.xpose.msra.mxu0 0.0
        %1113 = vmatprep.subr.mxu0 0.0
        %1114 = vmatpush1.xpose.msra.mxu0 0.0
        %1115 = vmatprep.subr.mxu0 0.0
        %1116 = vmatpush1.xpose.msra.mxu0 0.0
        %1117 = vmatprep.subr.mxu0 0.0
        %1118 = vmatpush1.xpose.msra.mxu0 0.0
        %1119 = vmatprep.subr.mxu0 0.0
        %1120 = vmatpush1.xpose.msra.mxu0 0.0
        %1121 = vmatprep.subr.mxu0 0.0
        %1122 = vmatpush1.xpose.msra.mxu0 0.0
        %1123 = vmatprep.subr.mxu0 0.0
        %1124 = vmatpush1.xpose.msra.mxu0 0.0
        %1125 = vmatprep.subr.mxu0 0.0
        %1126 = vmatpush1.xpose.msra.mxu0 0.0
        %1127 = vmatprep.subr.mxu0 0.0
        %1128 = vmatpush1.xpose.msra.mxu0 0.0
        %1129 = vmatprep.subr.mxu0 0.0
        %1130 = vmatpush1.xpose.msra.mxu0 0.0
        %1131 = vmatprep.subr.mxu0 0.0
        %1132 = vmatpush1.xpose.msra.mxu0 0.0
        %1133 = vmatprep.subr.mxu0 0.0
        %1134 = vmatpush1.xpose.msra.mxu0 0.0
        %1135 = vmatprep.subr.mxu0 0.0
        %1136 = vmatpush1.xpose.msra.mxu0 0.0
        %1137 = vmatprep.subr.mxu0 0.0
        %1138 = vmatpush1.xpose.msra.mxu0 0.0
        %1139 = vmatprep.mubr.f32.mxu0 0.0
        %1140 = vmatmul.mubr.f32.gmra.mrb[0].mxu0 %v1071
        %v1141 = vpop.f32.mrb[0].mxu0
        %v1142 = vadd.f32 0.0, %v1141
        %v1143 = vpop.f32.mrb[0].mxu0
        %1144 = vdwg.mxu0
        %v1145 = vmul.f32 %v1142, 0.35355338
        %v1146 = vsel %vm902, %v1145, -inf
        %1147 = vmax.xlane.f32.xlu0 %v1146
        %v1148 = vpop.xlane.xlu0 %1147
        %v1149 = vsub.f32 %v1145, %v1148
        %v1150 = vmul.f32 %v1149, 1.442695
        %v1151 = vpow.pop %v1150
        %v1152 = vsel %vm902, %v1151, 0.0
        %1153 = vadd.xlane.f32.xlu0 %v1152
        %v1154 = vpop.xlane.xlu0 %1153
        %v1155 = vrcp.pop %v1154
        %v1156 = vmul.f32 %v1151, %v1155
        %s1157 = scalar_lea.vmem %s701, 8 [#allocation10]
        %1158 = vst.msk [vmem:[%s1157] sm:$0xff] %vm902, %v1156
        %1159 = vrot.lane.b32.xlu0 %v891, 56
        %v1160 = vpop.permute.xlu0 %1159
        %v1163 = vsel %vm902, %v1156, 0
        %1165 = vmatprep.subr.mxu0 0.0
        %1166 = vmatpush1.msra.mxu0 %v1160
        %1167 = vmatprep.subr.mxu0 0.0
        %1168 = vmatpush1.msra.mxu0 0.0
        %1169 = vmatprep.subr.mxu0 0.0
        %1170 = vmatpush1.msra.mxu0 0.0
        %1171 = vmatprep.subr.mxu0 0.0
        %1172 = vmatpush1.msra.mxu0 0.0
        %1173 = vmatprep.subr.mxu0 0.0
        %1174 = vmatpush1.msra.mxu0 0.0
        %1175 = vmatprep.subr.mxu0 0.0
        %1176 = vmatpush1.msra.mxu0 0.0
        %1177 = vmatprep.subr.mxu0 0.0
        %1178 = vmatpush1.msra.mxu0 0.0
        %1179 = vmatprep.subr.mxu0 0.0
        %1180 = vmatpush1.msra.mxu0 0.0
        %1181 = vmatprep.subr.mxu0 0.0
        %1182 = vmatpush1.msra.mxu0 0.0
        %1183 = vmatprep.subr.mxu0 0.0
        %1184 = vmatpush1.msra.mxu0 0.0
        %1185 = vmatprep.subr.mxu0 0.0
        %1186 = vmatpush1.msra.mxu0 0.0
        %1187 = vmatprep.subr.mxu0 0.0
        %1188 = vmatpush1.msra.mxu0 0.0
        %1189 = vmatprep.subr.mxu0 0.0
        %1190 = vmatpush1.msra.mxu0 0.0
        %1191 = vmatprep.subr.mxu0 0.0
        %1192 = vmatpush1.msra.mxu0 0.0
        %1193 = vmatprep.subr.mxu0 0.0
        %1194 = vmatpush1.msra.mxu0 0.0
        %1195 = vmatprep.subr.mxu0 0.0
        %1196 = vmatpush1.msra.mxu0 0.0
        %1197 = vmatprep.subr.mxu0 0.0
        %1198 = vmatpush1.msra.mxu0 0.0
        %1199 = vmatprep.subr.mxu0 0.0
        %1200 = vmatpush1.msra.mxu0 0.0
        %1201 = vmatprep.subr.mxu0 0.0
        %1202 = vmatpush1.msra.mxu0 0.0
        %1203 = vmatprep.subr.mxu0 0.0
        %1204 = vmatpush1.msra.mxu0 0.0
        %1205 = vmatprep.subr.mxu0 0.0
        %1206 = vmatpush1.msra.mxu0 0.0
        %1207 = vmatprep.subr.mxu0 0.0
        %1208 = vmatpush1.msra.mxu0 0.0
        %1209 = vmatprep.subr.mxu0 0.0
        %1210 = vmatpush1.msra.mxu0 0.0
        %1211 = vmatprep.subr.mxu0 0.0
        %1212 = vmatpush1.msra.mxu0 0.0
        %1213 = vmatprep.subr.mxu0 0.0
        %1214 = vmatpush1.msra.mxu0 0.0
        %1215 = vmatprep.subr.mxu0 0.0
        %1216 = vmatpush1.msra.mxu0 0.0
        %1217 = vmatprep.subr.mxu0 0.0
        %1218 = vmatpush1.msra.mxu0 0.0
        %1219 = vmatprep.subr.mxu0 0.0
        %1220 = vmatpush1.msra.mxu0 0.0
        %1221 = vmatprep.subr.mxu0 0.0
        %1222 = vmatpush1.msra.mxu0 0.0
        %1223 = vmatprep.subr.mxu0 0.0
        %1224 = vmatpush1.msra.mxu0 0.0
        %1225 = vmatprep.subr.mxu0 0.0
        %1226 = vmatpush1.msra.mxu0 0.0
        %1227 = vmatprep.subr.mxu0 0.0
        %1228 = vmatpush1.msra.mxu0 0.0
        %1229 = vmatprep.mubr.f32.mxu0 0.0
        %1230 = vmatmul.mubr.f32.gmra.mrb[0].mxu0 %v1163
        %v1231 = vpop.f32.mrb[0].mxu0
        %v1232 = vadd.f32 0.0, %v1231
        %v1233 = vpop.f32.mrb[0].mxu0
        %1234 = vdwg.mxu0
        %1236 = vrot.lane.b32.xlu0 %v1232, 8
        %v1237 = vpop.permute.xlu0 %1236
        %vm1239 = vcmask 130112
        %1240 = vst.msk [vmem:[#allocation3] sm:$0xff] %vm1239, %v1237
        %1241 = vrot.lane.b32.xlu0 %v891, 112
        %v1242 = vpop.permute.xlu0 %1241
        %1243 = vrot.lane.b32.xlu0 %v891, 80
        %v1244 = vpop.permute.xlu0 %1243
        %v1245 = vsel %vm902, %v1242, 0
        %v1247 = vsel %vm902, %v1244, 0
        %1249 = vmatprep.subr.mxu0 0.0
        %1250 = vmatpush1.xpose.msra.mxu0 %v1247
        %1251 = vmatprep.subr.mxu0 0.0
        %1252 = vmatpush1.xpose.msra.mxu0 0.0
        %1253 = vmatprep.subr.mxu0 0.0
        %1254 = vmatpush1.xpose.msra.mxu0 0.0
        %1255 = vmatprep.subr.mxu0 0.0
        %1256 = vmatpush1.xpose.msra.mxu0 0.0
        %1257 = vmatprep.subr.mxu0 0.0
        %1258 = vmatpush1.xpose.msra.mxu0 0.0
        %1259 = vmatprep.subr.mxu0 0.0
        %1260 = vmatpush1.xpose.msra.mxu0 0.0
        %1261 = vmatprep.subr.mxu0 0.0
        %1262 = vmatpush1.xpose.msra.mxu0 0.0
        %1263 = vmatprep.subr.mxu0 0.0
        %1264 = vmatpush1.xpose.msra.mxu0 0.0
        %1265 = vmatprep.subr.mxu0 0.0
        %1266 = vmatpush1.xpose.msra.mxu0 0.0
        %1267 = vmatprep.subr.mxu0 0.0
        %1268 = vmatpush1.xpose.msra.mxu0 0.0
        %1269 = vmatprep.subr.mxu0 0.0
        %1270 = vmatpush1.xpose.msra.mxu0 0.0
        %1271 = vmatprep.subr.mxu0 0.0
        %1272 = vmatpush1.xpose.msra.mxu0 0.0
        %1273 = vmatprep.subr.mxu0 0.0
        %1274 = vmatpush1.xpose.msra.mxu0 0.0
        %1275 = vmatprep.subr.mxu0 0.0
        %1276 = vmatpush1.xpose.msra.mxu0 0.0
        %1277 = vmatprep.subr.mxu0 0.0
        %1278 = vmatpush1.xpose.msra.mxu0 0.0
        %1279 = vmatprep.subr.mxu0 0.0
        %1280 = vmatpush1.xpose.msra.mxu0 0.0
        %1281 = vmatprep.subr.mxu0 0.0
        %1282 = vmatpush1.xpose.msra.mxu0 0.0
        %1283 = vmatprep.subr.mxu0 0.0
        %1284 = vmatpush1.xpose.msra.mxu0 0.0
        %1285 = vmatprep.subr.mxu0 0.0
        %1286 = vmatpush1.xpose.msra.mxu0 0.0
        %1287 = vmatprep.subr.mxu0 0.0
        %1288 = vmatpush1.xpose.msra.mxu0 0.0
        %1289 = vmatprep.subr.mxu0 0.0
        %1290 = vmatpush1.xpose.msra.mxu0 0.0
        %1291 = vmatprep.subr.mxu0 0.0
        %1292 = vmatpush1.xpose.msra.mxu0 0.0
        %1293 = vmatprep.subr.mxu0 0.0
        %1294 = vmatpush1.xpose.msra.mxu0 0.0
        %1295 = vmatprep.subr.mxu0 0.0
        %1296 = vmatpush1.xpose.msra.mxu0 0.0
        %1297 = vmatprep.subr.mxu0 0.0
        %1298 = vmatpush1.xpose.msra.mxu0 0.0
        %1299 = vmatprep.subr.mxu0 0.0
        %1300 = vmatpush1.xpose.msra.mxu0 0.0
        %1301 = vmatprep.subr.mxu0 0.0
        %1302 = vmatpush1.xpose.msra.mxu0 0.0
        %1303 = vmatprep.subr.mxu0 0.0
        %1304 = vmatpush1.xpose.msra.mxu0 0.0
        %1305 = vmatprep.subr.mxu0 0.0
        %1306 = vmatpush1.xpose.msra.mxu0 0.0
        %1307 = vmatprep.subr.mxu0 0.0
        %1308 = vmatpush1.xpose.msra.mxu0 0.0
        %1309 = vmatprep.subr.mxu0 0.0
        %1310 = vmatpush1.xpose.msra.mxu0 0.0
        %1311 = vmatprep.subr.mxu0 0.0
        %1312 = vmatpush1.xpose.msra.mxu0 0.0
        %1313 = vmatprep.mubr.f32.mxu0 0.0
        %1314 = vmatmul.mubr.f32.gmra.mrb[0].mxu0 %v1245
        %v1315 = vpop.f32.mrb[0].mxu0
        %v1316 = vadd.f32 0.0, %v1315
        %v1317 = vpop.f32.mrb[0].mxu0
        %1318 = vdwg.mxu0
        %v1319 = vmul.f32 %v1316, 0.35355338
        %v1320 = vsel %vm902, %v1319, -inf
        %1321 = vmax.xlane.f32.xlu0 %v1320
        %v1322 = vpop.xlane.xlu0 %1321
        %v1323 = vsub.f32 %v1319, %v1322
        %v1324 = vmul.f32 %v1323, 1.442695
        %v1325 = vpow.pop %v1324
        %v1326 = vsel %vm902, %v1325, 0.0
        %1327 = vadd.xlane.f32.xlu0 %v1326
        %v1328 = vpop.xlane.xlu0 %1327
        %v1329 = vrcp.pop %v1328
        %v1330 = vmul.f32 %v1325, %v1329
        %s1331 = scalar_lea.vmem %s701, 16 [#allocation10]
        %1332 = vst.msk [vmem:[%s1331] sm:$0xff] %vm902, %v1330
        %1333 = vrot.lane.b32.xlu0 %v891, 48
        %v1334 = vpop.permute.xlu0 %1333
        %v1337 = vsel %vm902, %v1330, 0
        %1339 = vmatprep.subr.mxu0 0.0
        %1340 = vmatpush1.msra.mxu0 %v1334
        %1341 = vmatprep.subr.mxu0 0.0
        %1342 = vmatpush1.msra.mxu0 0.0
        %1343 = vmatprep.subr.mxu0 0.0
        %1344 = vmatpush1.msra.mxu0 0.0
        %1345 = vmatprep.subr.mxu0 0.0
        %1346 = vmatpush1.msra.mxu0 0.0
        %1347 = vmatprep.subr.mxu0 0.0
        %1348 = vmatpush1.msra.mxu0 0.0
        %1349 = vmatprep.subr.mxu0 0.0
        %1350 = vmatpush1.msra.mxu0 0.0
        %1351 = vmatprep.subr.mxu0 0.0
        %1352 = vmatpush1.msra.mxu0 0.0
        %1353 = vmatprep.subr.mxu0 0.0
        %1354 = vmatpush1.msra.mxu0 0.0
        %1355 = vmatprep.subr.mxu0 0.0
        %1356 = vmatpush1.msra.mxu0 0.0
        %1357 = vmatprep.subr.mxu0 0.0
        %1358 = vmatpush1.msra.mxu0 0.0
        %1359 = vmatprep.subr.mxu0 0.0
        %1360 = vmatpush1.msra.mxu0 0.0
        %1361 = vmatprep.subr.mxu0 0.0
        %1362 = vmatpush1.msra.mxu0 0.0
        %1363 = vmatprep.subr.mxu0 0.0
        %1364 = vmatpush1.msra.mxu0 0.0
        %1365 = vmatprep.subr.mxu0 0.0
        %1366 = vmatpush1.msra.mxu0 0.0
        %1367 = vmatprep.subr.mxu0 0.0
        %1368 = vmatpush1.msra.mxu0 0.0
        %1369 = vmatprep.subr.mxu0 0.0
        %1370 = vmatpush1.msra.mxu0 0.0
        %1371 = vmatprep.subr.mxu0 0.0
        %1372 = vmatpush1.msra.mxu0 0.0
        %1373 = vmatprep.subr.mxu0 0.0
        %1374 = vmatpush1.msra.mxu0 0.0
        %1375 = vmatprep.subr.mxu0 0.0
        %1376 = vmatpush1.msra.mxu0 0.0
        %1377 = vmatprep.subr.mxu0 0.0
        %1378 = vmatpush1.msra.mxu0 0.0
        %1379 = vmatprep.subr.mxu0 0.0
        %1380 = vmatpush1.msra.mxu0 0.0
        %1381 = vmatprep.subr.mxu0 0.0
        %1382 = vmatpush1.msra.mxu0 0.0
        %1383 = vmatprep.subr.mxu0 0.0
        %1384 = vmatpush1.msra.mxu0 0.0
        %1385 = vmatprep.subr.mxu0 0.0
        %1386 = vmatpush1.msra.mxu0 0.0
        %1387 = vmatprep.subr.mxu0 0.0
        %1388 = vmatpush1.msra.mxu0 0.0
        %1389 = vmatprep.subr.mxu0 0.0
        %1390 = vmatpush1.msra.mxu0 0.0
        %1391 = vmatprep.subr.mxu0 0.0
        %1392 = vmatpush1.msra.mxu0 0.0
        %1393 = vmatprep.subr.mxu0 0.0
        %1394 = vmatpush1.msra.mxu0 0.0
        %1395 = vmatprep.subr.mxu0 0.0
        %1396 = vmatpush1.msra.mxu0 0.0
        %1397 = vmatprep.subr.mxu0 0.0
        %1398 = vmatpush1.msra.mxu0 0.0
        %1399 = vmatprep.subr.mxu0 0.0
        %1400 = vmatpush1.msra.mxu0 0.0
        %1401 = vmatprep.subr.mxu0 0.0
        %1402 = vmatpush1.msra.mxu0 0.0
        %1403 = vmatprep.mubr.f32.mxu0 0.0
        %1404 = vmatmul.mubr.f32.gmra.mrb[0].mxu0 %v1337
        %v1405 = vpop.f32.mrb[0].mxu0
        %v1406 = vadd.f32 0.0, %v1405
        %v1407 = vpop.f32.mrb[0].mxu0
        %1408 = vdwg.mxu0
        %1410 = vrot.lane.b32.xlu0 %v1406, 16
        %v1411 = vpop.permute.xlu0 %1410
        %vm1413 = vcmask 195712
        %1414 = vst.msk [vmem:[#allocation3] sm:$0xff] %vm1413, %v1411
        %1415 = vrot.lane.b32.xlu0 %v891, 104
        %v1416 = vpop.permute.xlu0 %1415
        %1417 = vrot.lane.b32.xlu0 %v891, 72
        %v1418 = vpop.permute.xlu0 %1417
        %v1419 = vsel %vm902, %v1416, 0
        %v1421 = vsel %vm902, %v1418, 0
        %1423 = vmatprep.subr.mxu0 0.0
        %1424 = vmatpush1.xpose.msra.mxu0 %v1421
        %1425 = vmatprep.subr.mxu0 0.0
        %1426 = vmatpush1.xpose.msra.mxu0 0.0
        %1427 = vmatprep.subr.mxu0 0.0
        %1428 = vmatpush1.xpose.msra.mxu0 0.0
        %1429 = vmatprep.subr.mxu0 0.0
        %1430 = vmatpush1.xpose.msra.mxu0 0.0
        %1431 = vmatprep.subr.mxu0 0.0
        %1432 = vmatpush1.xpose.msra.mxu0 0.0
        %1433 = vmatprep.subr.mxu0 0.0
        %1434 = vmatpush1.xpose.msra.mxu0 0.0
        %1435 = vmatprep.subr.mxu0 0.0
        %1436 = vmatpush1.xpose.msra.mxu0 0.0
        %1437 = vmatprep.subr.mxu0 0.0
        %1438 = vmatpush1.xpose.msra.mxu0 0.0
        %1439 = vmatprep.subr.mxu0 0.0
        %1440 = vmatpush1.xpose.msra.mxu0 0.0
        %1441 = vmatprep.subr.mxu0 0.0
        %1442 = vmatpush1.xpose.msra.mxu0 0.0
        %1443 = vmatprep.subr.mxu0 0.0
        %1444 = vmatpush1.xpose.msra.mxu0 0.0
        %1445 = vmatprep.subr.mxu0 0.0
        %1446 = vmatpush1.xpose.msra.mxu0 0.0
        %1447 = vmatprep.subr.mxu0 0.0
        %1448 = vmatpush1.xpose.msra.mxu0 0.0
        %1449 = vmatprep.subr.mxu0 0.0
        %1450 = vmatpush1.xpose.msra.mxu0 0.0
        %1451 = vmatprep.subr.mxu0 0.0
        %1452 = vmatpush1.xpose.msra.mxu0 0.0
        %1453 = vmatprep.subr.mxu0 0.0
        %1454 = vmatpush1.xpose.msra.mxu0 0.0
        %1455 = vmatprep.subr.mxu0 0.0
        %1456 = vmatpush1.xpose.msra.mxu0 0.0
        %1457 = vmatprep.subr.mxu0 0.0
        %1458 = vmatpush1.xpose.msra.mxu0 0.0
        %1459 = vmatprep.subr.mxu0 0.0
        %1460 = vmatpush1.xpose.msra.mxu0 0.0
        %1461 = vmatprep.subr.mxu0 0.0
        %1462 = vmatpush1.xpose.msra.mxu0 0.0
        %1463 = vmatprep.subr.mxu0 0.0
        %1464 = vmatpush1.xpose.msra.mxu0 0.0
        %1465 = vmatprep.subr.mxu0 0.0
        %1466 = vmatpush1.xpose.msra.mxu0 0.0
        %1467 = vmatprep.subr.mxu0 0.0
        %1468 = vmatpush1.xpose.msra.mxu0 0.0
        %1469 = vmatprep.subr.mxu0 0.0
        %1470 = vmatpush1.xpose.msra.mxu0 0.0
        %1471 = vmatprep.subr.mxu0 0.0
        %1472 = vmatpush1.xpose.msra.mxu0 0.0
        %1473 = vmatprep.subr.mxu0 0.0
        %1474 = vmatpush1.xpose.msra.mxu0 0.0
        %1475 = vmatprep.subr.mxu0 0.0
        %1476 = vmatpush1.xpose.msra.mxu0 0.0
        %1477 = vmatprep.subr.mxu0 0.0
        %1478 = vmatpush1.xpose.msra.mxu0 0.0
        %1479 = vmatprep.subr.mxu0 0.0
        %1480 = vmatpush1.xpose.msra.mxu0 0.0
        %1481 = vmatprep.subr.mxu0 0.0
        %1482 = vmatpush1.xpose.msra.mxu0 0.0
        %1483 = vmatprep.subr.mxu0 0.0
        %1484 = vmatpush1.xpose.msra.mxu0 0.0
        %1485 = vmatprep.subr.mxu0 0.0
        %1486 = vmatpush1.xpose.msra.mxu0 0.0
        %1487 = vmatprep.mubr.f32.mxu0 0.0
        %1488 = vmatmul.mubr.f32.gmra.mrb[0].mxu0 %v1419
        %v1489 = vpop.f32.mrb[0].mxu0
        %v1490 = vadd.f32 0.0, %v1489
        %v1491 = vpop.f32.mrb[0].mxu0
        %1492 = vdwg.mxu0
        %v1493 = vmul.f32 %v1490, 0.35355338
        %v1494 = vsel %vm902, %v1493, -inf
        %1495 = vmax.xlane.f32.xlu0 %v1494
        %v1496 = vpop.xlane.xlu0 %1495
        %v1497 = vsub.f32 %v1493, %v1496
        %v1498 = vmul.f32 %v1497, 1.442695
        %v1499 = vpow.pop %v1498
        %v1500 = vsel %vm902, %v1499, 0.0
        %1501 = vadd.xlane.f32.xlu0 %v1500
        %v1502 = vpop.xlane.xlu0 %1501
        %v1503 = vrcp.pop %v1502
        %v1504 = vmul.f32 %v1499, %v1503
        %s1505 = scalar_lea.vmem %s701, 24 [#allocation10]
        %1506 = vst.msk [vmem:[%s1505] sm:$0xff] %vm902, %v1504
        %1507 = vrot.lane.b32.xlu0 %v891, 40
        %v1508 = vpop.permute.xlu0 %1507
        %v1511 = vsel %vm902, %v1504, 0
        %1513 = vmatprep.subr.mxu0 0.0
        %1514 = vmatpush1.msra.mxu0 %v1508
        %1515 = vmatprep.subr.mxu0 0.0
        %1516 = vmatpush1.msra.mxu0 0.0
        %1517 = vmatprep.subr.mxu0 0.0
        %1518 = vmatpush1.msra.mxu0 0.0
        %1519 = vmatprep.subr.mxu0 0.0
        %1520 = vmatpush1.msra.mxu0 0.0
        %1521 = vmatprep.subr.mxu0 0.0
        %1522 = vmatpush1.msra.mxu0 0.0
        %1523 = vmatprep.subr.mxu0 0.0
        %1524 = vmatpush1.msra.mxu0 0.0
        %1525 = vmatprep.subr.mxu0 0.0
        %1526 = vmatpush1.msra.mxu0 0.0
        %1527 = vmatprep.subr.mxu0 0.0
        %1528 = vmatpush1.msra.mxu0 0.0
        %1529 = vmatprep.subr.mxu0 0.0
        %1530 = vmatpush1.msra.mxu0 0.0
        %1531 = vmatprep.subr.mxu0 0.0
        %1532 = vmatpush1.msra.mxu0 0.0
        %1533 = vmatprep.subr.mxu0 0.0
        %1534 = vmatpush1.msra.mxu0 0.0
        %1535 = vmatprep.subr.mxu0 0.0
        %1536 = vmatpush1.msra.mxu0 0.0
        %1537 = vmatprep.subr.mxu0 0.0
        %1538 = vmatpush1.msra.mxu0 0.0
        %1539 = vmatprep.subr.mxu0 0.0
        %1540 = vmatpush1.msra.mxu0 0.0
        %1541 = vmatprep.subr.mxu0 0.0
        %1542 = vmatpush1.msra.mxu0 0.0
        %1543 = vmatprep.subr.mxu0 0.0
        %1544 = vmatpush1.msra.mxu0 0.0
        %1545 = vmatprep.subr.mxu0 0.0
        %1546 = vmatpush1.msra.mxu0 0.0
        %1547 = vmatprep.subr.mxu0 0.0
        %1548 = vmatpush1.msra.mxu0 0.0
        %1549 = vmatprep.subr.mxu0 0.0
        %1550 = vmatpush1.msra.mxu0 0.0
        %1551 = vmatprep.subr.mxu0 0.0
        %1552 = vmatpush1.msra.mxu0 0.0
        %1553 = vmatprep.subr.mxu0 0.0
        %1554 = vmatpush1.msra.mxu0 0.0
        %1555 = vmatprep.subr.mxu0 0.0
        %1556 = vmatpush1.msra.mxu0 0.0
        %1557 = vmatprep.subr.mxu0 0.0
        %1558 = vmatpush1.msra.mxu0 0.0
        %1559 = vmatprep.subr.mxu0 0.0
        %1560 = vmatpush1.msra.mxu0 0.0
        %1561 = vmatprep.subr.mxu0 0.0
        %1562 = vmatpush1.msra.mxu0 0.0
        %1563 = vmatprep.subr.mxu0 0.0
        %1564 = vmatpush1.msra.mxu0 0.0
        %1565 = vmatprep.subr.mxu0 0.0
        %1566 = vmatpush1.msra.mxu0 0.0
        %1567 = vmatprep.subr.mxu0 0.0
        %1568 = vmatpush1.msra.mxu0 0.0
        %1569 = vmatprep.subr.mxu0 0.0
        %1570 = vmatpush1.msra.mxu0 0.0
        %1571 = vmatprep.subr.mxu0 0.0
        %1572 = vmatpush1.msra.mxu0 0.0
        %1573 = vmatprep.subr.mxu0 0.0
        %1574 = vmatpush1.msra.mxu0 0.0
        %1575 = vmatprep.subr.mxu0 0.0
        %1576 = vmatpush1.msra.mxu0 0.0
        %1577 = vmatprep.mubr.f32.mxu0 0.0
        %1578 = vmatmul.mubr.f32.gmra.mrb[0].mxu0 %v1511
        %v1579 = vpop.f32.mrb[0].mxu0
        %v1580 = vadd.f32 0.0, %v1579
        %v1581 = vpop.f32.mrb[0].mxu0
        %1582 = vdwg.mxu0
        %1584 = vrot.lane.b32.xlu0 %v1580, 24
        %v1585 = vpop.permute.xlu0 %1584
        %vm1587 = vcmask 261312
        %1588 = vst.msk [vmem:[#allocation3] sm:$0xff] %vm1587, %v1585
        %1590 = vrot.lane.b32.xlu0 %v896, 96
        %v1591 = vpop.permute.xlu0 %1590
        %v1592 = vsel %vm902, %v896, 0
        %v1594 = vsel %vm902, %v1591, 0
        %1596 = vmatprep.subr.mxu0 0.0
        %1597 = vmatpush1.xpose.msra.mxu0 %v1594
        %1598 = vmatprep.subr.mxu0 0.0
        %1599 = vmatpush1.xpose.msra.mxu0 0.0
        %1600 = vmatprep.subr.mxu0 0.0
        %1601 = vmatpush1.xpose.msra.mxu0 0.0
        %1602 = vmatprep.subr.mxu0 0.0
        %1603 = vmatpush1.xpose.msra.mxu0 0.0
        %1604 = vmatprep.subr.mxu0 0.0
        %1605 = vmatpush1.xpose.msra.mxu0 0.0
        %1606 = vmatprep.subr.mxu0 0.0
        %1607 = vmatpush1.xpose.msra.mxu0 0.0
        %1608 = vmatprep.subr.mxu0 0.0
        %1609 = vmatpush1.xpose.msra.mxu0 0.0
        %1610 = vmatprep.subr.mxu0 0.0
        %1611 = vmatpush1.xpose.msra.mxu0 0.0
        %1612 = vmatprep.subr.mxu0 0.0
        %1613 = vmatpush1.xpose.msra.mxu0 0.0
        %1614 = vmatprep.subr.mxu0 0.0
        %1615 = vmatpush1.xpose.msra.mxu0 0.0
        %1616 = vmatprep.subr.mxu0 0.0
        %1617 = vmatpush1.xpose.msra.mxu0 0.0
        %1618 = vmatprep.subr.mxu0 0.0
        %1619 = vmatpush1.xpose.msra.mxu0 0.0
        %1620 = vmatprep.subr.mxu0 0.0
        %1621 = vmatpush1.xpose.msra.mxu0 0.0
        %1622 = vmatprep.subr.mxu0 0.0
        %1623 = vmatpush1.xpose.msra.mxu0 0.0
        %1624 = vmatprep.subr.mxu0 0.0
        %1625 = vmatpush1.xpose.msra.mxu0 0.0
        %1626 = vmatprep.subr.mxu0 0.0
        %1627 = vmatpush1.xpose.msra.mxu0 0.0
        %1628 = vmatprep.subr.mxu0 0.0
        %1629 = vmatpush1.xpose.msra.mxu0 0.0
        %1630 = vmatprep.subr.mxu0 0.0
        %1631 = vmatpush1.xpose.msra.mxu0 0.0
        %1632 = vmatprep.subr.mxu0 0.0
        %1633 = vmatpush1.xpose.msra.mxu0 0.0
        %1634 = vmatprep.subr.mxu0 0.0
        %1635 = vmatpush1.xpose.msra.mxu0 0.0
        %1636 = vmatprep.subr.mxu0 0.0
        %1637 = vmatpush1.xpose.msra.mxu0 0.0
        %1638 = vmatprep.subr.mxu0 0.0
        %1639 = vmatpush1.xpose.msra.mxu0 0.0
        %1640 = vmatprep.subr.mxu0 0.0
        %1641 = vmatpush1.xpose.msra.mxu0 0.0
        %1642 = vmatprep.subr.mxu0 0.0
        %1643 = vmatpush1.xpose.msra.mxu0 0.0
        %1644 = vmatprep.subr.mxu0 0.0
        %1645 = vmatpush1.xpose.msra.mxu0 0.0
        %1646 = vmatprep.subr.mxu0 0.0
        %1647 = vmatpush1.xpose.msra.mxu0 0.0
        %1648 = vmatprep.subr.mxu0 0.0
        %1649 = vmatpush1.xpose.msra.mxu0 0.0
        %1650 = vmatprep.subr.mxu0 0.0
        %1651 = vmatpush1.xpose.msra.mxu0 0.0
        %1652 = vmatprep.subr.mxu0 0.0
        %1653 = vmatpush1.xpose.msra.mxu0 0.0
        %1654 = vmatprep.subr.mxu0 0.0
        %1655 = vmatpush1.xpose.msra.mxu0 0.0
        %1656 = vmatprep.subr.mxu0 0.0
        %1657 = vmatpush1.xpose.msra.mxu0 0.0
        %1658 = vmatprep.subr.mxu0 0.0
        %1659 = vmatpush1.xpose.msra.mxu0 0.0
        %1660 = vmatprep.mubr.f32.mxu0 0.0
        %1661 = vmatmul.mubr.f32.gmra.mrb[0].mxu0 %v1592
        %v1662 = vpop.f32.mrb[0].mxu0
        %v1663 = vadd.f32 0.0, %v1662
        %v1664 = vpop.f32.mrb[0].mxu0
        %1665 = vdwg.mxu0
        %v1666 = vmul.f32 %v1663, 0.35355338
        %v1667 = vsel %vm902, %v1666, -inf
        %1668 = vmax.xlane.f32.xlu0 %v1667
        %v1669 = vpop.xlane.xlu0 %1668
        %v1670 = vsub.f32 %v1666, %v1669
        %v1671 = vmul.f32 %v1670, 1.442695
        %v1672 = vpow.pop %v1671
        %v1673 = vsel %vm902, %v1672, 0.0
        %1674 = vadd.xlane.f32.xlu0 %v1673
        %v1675 = vpop.xlane.xlu0 %1674
        %v1676 = vrcp.pop %v1675
        %v1677 = vmul.f32 %v1672, %v1676
        %1678 = vrot.lane.b32.xlu0 %v896, 64
        %v1679 = vpop.permute.xlu0 %1678
        %v1682 = vsel %vm902, %v1677, 0
        %1684 = vmatprep.subr.mxu0 0.0
        %1685 = vmatpush1.msra.mxu0 %v1679
        %1686 = vmatprep.subr.mxu0 0.0
        %1687 = vmatpush1.msra.mxu0 0.0
        %1688 = vmatprep.subr.mxu0 0.0
        %1689 = vmatpush1.msra.mxu0 0.0
        %1690 = vmatprep.subr.mxu0 0.0
        %1691 = vmatpush1.msra.mxu0 0.0
        %1692 = vmatprep.subr.mxu0 0.0
        %1693 = vmatpush1.msra.mxu0 0.0
        %1694 = vmatprep.subr.mxu0 0.0
        %1695 = vmatpush1.msra.mxu0 0.0
        %1696 = vmatprep.subr.mxu0 0.0
        %1697 = vmatpush1.msra.mxu0 0.0
        %1698 = vmatprep.subr.mxu0 0.0
        %1699 = vmatpush1.msra.mxu0 0.0
        %1700 = vmatprep.subr.mxu0 0.0
        %1701 = vmatpush1.msra.mxu0 0.0
        %1702 = vmatprep.subr.mxu0 0.0
        %1703 = vmatpush1.msra.mxu0 0.0
        %1704 = vmatprep.subr.mxu0 0.0
        %1705 = vmatpush1.msra.mxu0 0.0
        %1706 = vmatprep.subr.mxu0 0.0
        %1707 = vmatpush1.msra.mxu0 0.0
        %1708 = vmatprep.subr.mxu0 0.0
        %1709 = vmatpush1.msra.mxu0 0.0
        %1710 = vmatprep.subr.mxu0 0.0
        %1711 = vmatpush1.msra.mxu0 0.0
        %1712 = vmatprep.subr.mxu0 0.0
        %1713 = vmatpush1.msra.mxu0 0.0
        %1714 = vmatprep.subr.mxu0 0.0
        %1715 = vmatpush1.msra.mxu0 0.0
        %1716 = vmatprep.subr.mxu0 0.0
        %1717 = vmatpush1.msra.mxu0 0.0
        %1718 = vmatprep.subr.mxu0 0.0
        %1719 = vmatpush1.msra.mxu0 0.0
        %1720 = vmatprep.subr.mxu0 0.0
        %1721 = vmatpush1.msra.mxu0 0.0
        %1722 = vmatprep.subr.mxu0 0.0
        %1723 = vmatpush1.msra.mxu0 0.0
        %1724 = vmatprep.subr.mxu0 0.0
        %1725 = vmatpush1.msra.mxu0 0.0
        %1726 = vmatprep.subr.mxu0 0.0
        %1727 = vmatpush1.msra.mxu0 0.0
        %1728 = vmatprep.subr.mxu0 0.0
        %1729 = vmatpush1.msra.mxu0 0.0
        %1730 = vmatprep.subr.mxu0 0.0
        %1731 = vmatpush1.msra.mxu0 0.0
        %1732 = vmatprep.subr.mxu0 0.0
        %1733 = vmatpush1.msra.mxu0 0.0
        %1734 = vmatprep.subr.mxu0 0.0
        %1735 = vmatpush1.msra.mxu0 0.0
        %1736 = vmatprep.subr.mxu0 0.0
        %1737 = vmatpush1.msra.mxu0 0.0
        %1738 = vmatprep.subr.mxu0 0.0
        %1739 = vmatpush1.msra.mxu0 0.0
        %1740 = vmatprep.subr.mxu0 0.0
        %1741 = vmatpush1.msra.mxu0 0.0
        %1742 = vmatprep.subr.mxu0 0.0
        %1743 = vmatpush1.msra.mxu0 0.0
        %1744 = vmatprep.subr.mxu0 0.0
        %1745 = vmatpush1.msra.mxu0 0.0
        %1746 = vmatprep.subr.mxu0 0.0
        %1747 = vmatpush1.msra.mxu0 0.0
        %1748 = vmatprep.mubr.f32.mxu0 0.0
        %1749 = vmatmul.mubr.f32.gmra.mrb[0].mxu0 %v1682
        %v1750 = vpop.f32.mrb[0].mxu0
        %v1751 = vadd.f32 0.0, %v1750
        %v1752 = vpop.f32.mrb[0].mxu0
        %1753 = vdwg.mxu0
        %1754 = vst.msk [vmem:[#allocation3 + $0x8] sm:$0xff] %vm902, %v1751
        %1755 = vrot.lane.b32.xlu0 %v896, 120
        %v1756 = vpop.permute.xlu0 %1755
        %1757 = vrot.lane.b32.xlu0 %v896, 88
        %v1758 = vpop.permute.xlu0 %1757
        %v1759 = vsel %vm902, %v1756, 0
        %v1761 = vsel %vm902, %v1758, 0
        %1763 = vmatprep.subr.mxu0 0.0
        %1764 = vmatpush1.xpose.msra.mxu0 %v1761
        %1765 = vmatprep.subr.mxu0 0.0
        %1766 = vmatpush1.xpose.msra.mxu0 0.0
        %1767 = vmatprep.subr.mxu0 0.0
        %1768 = vmatpush1.xpose.msra.mxu0 0.0
        %1769 = vmatprep.subr.mxu0 0.0
        %1770 = vmatpush1.xpose.msra.mxu0 0.0
        %1771 = vmatprep.subr.mxu0 0.0
        %1772 = vmatpush1.xpose.msra.mxu0 0.0
        %1773 = vmatprep.subr.mxu0 0.0
        %1774 = vmatpush1.xpose.msra.mxu0 0.0
        %1775 = vmatprep.subr.mxu0 0.0
        %1776 = vmatpush1.xpose.msra.mxu0 0.0
        %1777 = vmatprep.subr.mxu0 0.0
        %1778 = vmatpush1.xpose.msra.mxu0 0.0
        %1779 = vmatprep.subr.mxu0 0.0
        %1780 = vmatpush1.xpose.msra.mxu0 0.0
        %1781 = vmatprep.subr.mxu0 0.0
        %1782 = vmatpush1.xpose.msra.mxu0 0.0
        %1783 = vmatprep.subr.mxu0 0.0
        %1784 = vmatpush1.xpose.msra.mxu0 0.0
        %1785 = vmatprep.subr.mxu0 0.0
        %1786 = vmatpush1.xpose.msra.mxu0 0.0
        %1787 = vmatprep.subr.mxu0 0.0
        %1788 = vmatpush1.xpose.msra.mxu0 0.0
        %1789 = vmatprep.subr.mxu0 0.0
        %1790 = vmatpush1.xpose.msra.mxu0 0.0
        %1791 = vmatprep.subr.mxu0 0.0
        %1792 = vmatpush1.xpose.msra.mxu0 0.0
        %1793 = vmatprep.subr.mxu0 0.0
        %1794 = vmatpush1.xpose.msra.mxu0 0.0
        %1795 = vmatprep.subr.mxu0 0.0
        %1796 = vmatpush1.xpose.msra.mxu0 0.0
        %1797 = vmatprep.subr.mxu0 0.0
        %1798 = vmatpush1.xpose.msra.mxu0 0.0
        %1799 = vmatprep.subr.mxu0 0.0
        %1800 = vmatpush1.xpose.msra.mxu0 0.0
        %1801 = vmatprep.subr.mxu0 0.0
        %1802 = vmatpush1.xpose.msra.mxu0 0.0
        %1803 = vmatprep.subr.mxu0 0.0
        %1804 = vmatpush1.xpose.msra.mxu0 0.0
        %1805 = vmatprep.subr.mxu0 0.0
        %1806 = vmatpush1.xpose.msra.mxu0 0.0
        %1807 = vmatprep.subr.mxu0 0.0
        %1808 = vmatpush1.xpose.msra.mxu0 0.0
        %1809 = vmatprep.subr.mxu0 0.0
        %1810 = vmatpush1.xpose.msra.mxu0 0.0
        %1811 = vmatprep.subr.mxu0 0.0
        %1812 = vmatpush1.xpose.msra.mxu0 0.0
        %1813 = vmatprep.subr.mxu0 0.0
        %1814 = vmatpush1.xpose.msra.mxu0 0.0
        %1815 = vmatprep.subr.mxu0 0.0
        %1816 = vmatpush1.xpose.msra.mxu0 0.0
        %1817 = vmatprep.subr.mxu0 0.0
        %1818 = vmatpush1.xpose.msra.mxu0 0.0
        %1819 = vmatprep.subr.mxu0 0.0
        %1820 = vmatpush1.xpose.msra.mxu0 0.0
        %1821 = vmatprep.subr.mxu0 0.0
        %1822 = vmatpush1.xpose.msra.mxu0 0.0
        %1823 = vmatprep.subr.mxu0 0.0
        %1824 = vmatpush1.xpose.msra.mxu0 0.0
        %1825 = vmatprep.subr.mxu0 0.0
        %1826 = vmatpush1.xpose.msra.mxu0 0.0
        %1827 = vmatprep.mubr.f32.mxu0 0.0
        %1828 = vmatmul.mubr.f32.gmra.mrb[0].mxu0 %v1759
        %v1829 = vpop.f32.mrb[0].mxu0
        %v1830 = vadd.f32 0.0, %v1829
        %v1831 = vpop.f32.mrb[0].mxu0
        %1832 = vdwg.mxu0
        %v1833 = vmul.f32 %v1830, 0.35355338
        %v1834 = vsel %vm902, %v1833, -inf
        %1835 = vmax.xlane.f32.xlu0 %v1834
        %v1836 = vpop.xlane.xlu0 %1835
        %v1837 = vsub.f32 %v1833, %v1836
        %v1838 = vmul.f32 %v1837, 1.442695
        %v1839 = vpow.pop %v1838
        %v1840 = vsel %vm902, %v1839, 0.0
        %1841 = vadd.xlane.f32.xlu0 %v1840
        %v1842 = vpop.xlane.xlu0 %1841
        %v1843 = vrcp.pop %v1842
        %v1844 = vmul.f32 %v1839, %v1843
        %1845 = vrot.lane.b32.xlu0 %v896, 56
        %v1846 = vpop.permute.xlu0 %1845
        %v1849 = vsel %vm902, %v1844, 0
        %1851 = vmatprep.subr.mxu0 0.0
        %1852 = vmatpush1.msra.mxu0 %v1846
        %1853 = vmatprep.subr.mxu0 0.0
        %1854 = vmatpush1.msra.mxu0 0.0
        %1855 = vmatprep.subr.mxu0 0.0
        %1856 = vmatpush1.msra.mxu0 0.0
        %1857 = vmatprep.subr.mxu0 0.0
        %1858 = vmatpush1.msra.mxu0 0.0
        %1859 = vmatprep.subr.mxu0 0.0
        %1860 = vmatpush1.msra.mxu0 0.0
        %1861 = vmatprep.subr.mxu0 0.0
        %1862 = vmatpush1.msra.mxu0 0.0
        %1863 = vmatprep.subr.mxu0 0.0
        %1864 = vmatpush1.msra.mxu0 0.0
        %1865 = vmatprep.subr.mxu0 0.0
        %1866 = vmatpush1.msra.mxu0 0.0
        %1867 = vmatprep.subr.mxu0 0.0
        %1868 = vmatpush1.msra.mxu0 0.0
        %1869 = vmatprep.subr.mxu0 0.0
        %1870 = vmatpush1.msra.mxu0 0.0
        %1871 = vmatprep.subr.mxu0 0.0
        %1872 = vmatpush1.msra.mxu0 0.0
        %1873 = vmatprep.subr.mxu0 0.0
        %1874 = vmatpush1.msra.mxu0 0.0
        %1875 = vmatprep.subr.mxu0 0.0
        %1876 = vmatpush1.msra.mxu0 0.0
        %1877 = vmatprep.subr.mxu0 0.0
        %1878 = vmatpush1.msra.mxu0 0.0
        %1879 = vmatprep.subr.mxu0 0.0
        %1880 = vmatpush1.msra.mxu0 0.0
        %1881 = vmatprep.subr.mxu0 0.0
        %1882 = vmatpush1.msra.mxu0 0.0
        %1883 = vmatprep.subr.mxu0 0.0
        %1884 = vmatpush1.msra.mxu0 0.0
        %1885 = vmatprep.subr.mxu0 0.0
        %1886 = vmatpush1.msra.mxu0 0.0
        %1887 = vmatprep.subr.mxu0 0.0
        %1888 = vmatpush1.msra.mxu0 0.0
        %1889 = vmatprep.subr.mxu0 0.0
        %1890 = vmatpush1.msra.mxu0 0.0
        %1891 = vmatprep.subr.mxu0 0.0
        %1892 = vmatpush1.msra.mxu0 0.0
        %1893 = vmatprep.subr.mxu0 0.0
        %1894 = vmatpush1.msra.mxu0 0.0
        %1895 = vmatprep.subr.mxu0 0.0
        %1896 = vmatpush1.msra.mxu0 0.0
        %1897 = vmatprep.subr.mxu0 0.0
        %1898 = vmatpush1.msra.mxu0 0.0
        %1899 = vmatprep.subr.mxu0 0.0
        %1900 = vmatpush1.msra.mxu0 0.0
        %1901 = vmatprep.subr.mxu0 0.0
        %1902 = vmatpush1.msra.mxu0 0.0
        %1903 = vmatprep.subr.mxu0 0.0
        %1904 = vmatpush1.msra.mxu0 0.0
        %1905 = vmatprep.subr.mxu0 0.0
        %1906 = vmatpush1.msra.mxu0 0.0
        %1907 = vmatprep.subr.mxu0 0.0
        %1908 = vmatpush1.msra.mxu0 0.0
        %1909 = vmatprep.subr.mxu0 0.0
        %1910 = vmatpush1.msra.mxu0 0.0
        %1911 = vmatprep.subr.mxu0 0.0
        %1912 = vmatpush1.msra.mxu0 0.0
        %1913 = vmatprep.subr.mxu0 0.0
        %1914 = vmatpush1.msra.mxu0 0.0
        %1915 = vmatprep.mubr.f32.mxu0 0.0
        %1916 = vmatmul.mubr.f32.gmra.mrb[0].mxu0 %v1849
        %v1917 = vpop.f32.mrb[0].mxu0
        %v1918 = vadd.f32 0.0, %v1917
        %v1919 = vpop.f32.mrb[0].mxu0
        %1920 = vdwg.mxu0
        %1922 = vrot.lane.b32.xlu0 %v1918, 8
        %v1923 = vpop.permute.xlu0 %1922
        %1925 = vst.msk [vmem:[#allocation3 + $0x8] sm:$0xff] %vm1239, %v1923
        %1926 = vrot.lane.b32.xlu0 %v896, 112
        %v1927 = vpop.permute.xlu0 %1926
        %1928 = vrot.lane.b32.xlu0 %v896, 80
        %v1929 = vpop.permute.xlu0 %1928
        %v1930 = vsel %vm902, %v1927, 0
        %v1932 = vsel %vm902, %v1929, 0
        %1934 = vmatprep.subr.mxu0 0.0
        %1935 = vmatpush1.xpose.msra.mxu0 %v1932
        %1936 = vmatprep.subr.mxu0 0.0
        %1937 = vmatpush1.xpose.msra.mxu0 0.0
        %1938 = vmatprep.subr.mxu0 0.0
        %1939 = vmatpush1.xpose.msra.mxu0 0.0
        %1940 = vmatprep.subr.mxu0 0.0
        %1941 = vmatpush1.xpose.msra.mxu0 0.0
        %1942 = vmatprep.subr.mxu0 0.0
        %1943 = vmatpush1.xpose.msra.mxu0 0.0
        %1944 = vmatprep.subr.mxu0 0.0
        %1945 = vmatpush1.xpose.msra.mxu0 0.0
        %1946 = vmatprep.subr.mxu0 0.0
        %1947 = vmatpush1.xpose.msra.mxu0 0.0
        %1948 = vmatprep.subr.mxu0 0.0
        %1949 = vmatpush1.xpose.msra.mxu0 0.0
        %1950 = vmatprep.subr.mxu0 0.0
        %1951 = vmatpush1.xpose.msra.mxu0 0.0
        %1952 = vmatprep.subr.mxu0 0.0
        %1953 = vmatpush1.xpose.msra.mxu0 0.0
        %1954 = vmatprep.subr.mxu0 0.0
        %1955 = vmatpush1.xpose.msra.mxu0 0.0
        %1956 = vmatprep.subr.mxu0 0.0
        %1957 = vmatpush1.xpose.msra.mxu0 0.0
        %1958 = vmatprep.subr.mxu0 0.0
        %1959 = vmatpush1.xpose.msra.mxu0 0.0
        %1960 = vmatprep.subr.mxu0 0.0
        %1961 = vmatpush1.xpose.msra.mxu0 0.0
        %1962 = vmatprep.subr.mxu0 0.0
        %1963 = vmatpush1.xpose.msra.mxu0 0.0
        %1964 = vmatprep.subr.mxu0 0.0
        %1965 = vmatpush1.xpose.msra.mxu0 0.0
        %1966 = vmatprep.subr.mxu0 0.0
        %1967 = vmatpush1.xpose.msra.mxu0 0.0
        %1968 = vmatprep.subr.mxu0 0.0
        %1969 = vmatpush1.xpose.msra.mxu0 0.0
        %1970 = vmatprep.subr.mxu0 0.0
        %1971 = vmatpush1.xpose.msra.mxu0 0.0
        %1972 = vmatprep.subr.mxu0 0.0
        %1973 = vmatpush1.xpose.msra.mxu0 0.0
        %1974 = vmatprep.subr.mxu0 0.0
        %1975 = vmatpush1.xpose.msra.mxu0 0.0
        %1976 = vmatprep.subr.mxu0 0.0
        %1977 = vmatpush1.xpose.msra.mxu0 0.0
        %1978 = vmatprep.subr.mxu0 0.0
        %1979 = vmatpush1.xpose.msra.mxu0 0.0
        %1980 = vmatprep.subr.mxu0 0.0
        %1981 = vmatpush1.xpose.msra.mxu0 0.0
        %1982 = vmatprep.subr.mxu0 0.0
        %1983 = vmatpush1.xpose.msra.mxu0 0.0
        %1984 = vmatprep.subr.mxu0 0.0
        %1985 = vmatpush1.xpose.msra.mxu0 0.0
        %1986 = vmatprep.subr.mxu0 0.0
        %1987 = vmatpush1.xpose.msra.mxu0 0.0
        %1988 = vmatprep.subr.mxu0 0.0
        %1989 = vmatpush1.xpose.msra.mxu0 0.0
        %1990 = vmatprep.subr.mxu0 0.0
        %1991 = vmatpush1.xpose.msra.mxu0 0.0
        %1992 = vmatprep.subr.mxu0 0.0
        %1993 = vmatpush1.xpose.msra.mxu0 0.0
        %1994 = vmatprep.subr.mxu0 0.0
        %1995 = vmatpush1.xpose.msra.mxu0 0.0
        %1996 = vmatprep.subr.mxu0 0.0
        %1997 = vmatpush1.xpose.msra.mxu0 0.0
        %1998 = vmatprep.mubr.f32.mxu0 0.0
        %1999 = vmatmul.mubr.f32.gmra.mrb[0].mxu0 %v1930
        %v2000 = vpop.f32.mrb[0].mxu0
        %v2001 = vadd.f32 0.0, %v2000
        %v2002 = vpop.f32.mrb[0].mxu0
        %2003 = vdwg.mxu0
        %v2004 = vmul.f32 %v2001, 0.35355338
        %v2005 = vsel %vm902, %v2004, -inf
        %2006 = vmax.xlane.f32.xlu0 %v2005
        %v2007 = vpop.xlane.xlu0 %2006
        %v2008 = vsub.f32 %v2004, %v2007
        %v2009 = vmul.f32 %v2008, 1.442695
        %v2010 = vpow.pop %v2009
        %v2011 = vsel %vm902, %v2010, 0.0
        %2012 = vadd.xlane.f32.xlu0 %v2011
        %v2013 = vpop.xlane.xlu0 %2012
        %v2014 = vrcp.pop %v2013
        %v2015 = vmul.f32 %v2010, %v2014
        %2016 = vrot.lane.b32.xlu0 %v896, 48
        %v2017 = vpop.permute.xlu0 %2016
        %v2020 = vsel %vm902, %v2015, 0
        %2022 = vmatprep.subr.mxu0 0.0
        %2023 = vmatpush1.msra.mxu0 %v2017
        %2024 = vmatprep.subr.mxu0 0.0
        %2025 = vmatpush1.msra.mxu0 0.0
        %2026 = vmatprep.subr.mxu0 0.0
        %2027 = vmatpush1.msra.mxu0 0.0
        %2028 = vmatprep.subr.mxu0 0.0
        %2029 = vmatpush1.msra.mxu0 0.0
        %2030 = vmatprep.subr.mxu0 0.0
        %2031 = vmatpush1.msra.mxu0 0.0
        %2032 = vmatprep.subr.mxu0 0.0
        %2033 = vmatpush1.msra.mxu0 0.0
        %2034 = vmatprep.subr.mxu0 0.0
        %2035 = vmatpush1.msra.mxu0 0.0
        %2036 = vmatprep.subr.mxu0 0.0
        %2037 = vmatpush1.msra.mxu0 0.0
        %2038 = vmatprep.subr.mxu0 0.0
        %2039 = vmatpush1.msra.mxu0 0.0
        %2040 = vmatprep.subr.mxu0 0.0
        %2041 = vmatpush1.msra.mxu0 0.0
        %2042 = vmatprep.subr.mxu0 0.0
        %2043 = vmatpush1.msra.mxu0 0.0
        %2044 = vmatprep.subr.mxu0 0.0
        %2045 = vmatpush1.msra.mxu0 0.0
        %2046 = vmatprep.subr.mxu0 0.0
        %2047 = vmatpush1.msra.mxu0 0.0
        %2048 = vmatprep.subr.mxu0 0.0
        %2049 = vmatpush1.msra.mxu0 0.0
        %2050 = vmatprep.subr.mxu0 0.0
        %2051 = vmatpush1.msra.mxu0 0.0
        %2052 = vmatprep.subr.mxu0 0.0
        %2053 = vmatpush1.msra.mxu0 0.0
        %2054 = vmatprep.subr.mxu0 0.0
        %2055 = vmatpush1.msra.mxu0 0.0
        %2056 = vmatprep.subr.mxu0 0.0
        %2057 = vmatpush1.msra.mxu0 0.0
        %2058 = vmatprep.subr.mxu0 0.0
        %2059 = vmatpush1.msra.mxu0 0.0
        %2060 = vmatprep.subr.mxu0 0.0
        %2061 = vmatpush1.msra.mxu0 0.0
        %2062 = vmatprep.subr.mxu0 0.0
        %2063 = vmatpush1.msra.mxu0 0.0
        %2064 = vmatprep.subr.mxu0 0.0
        %2065 = vmatpush1.msra.mxu0 0.0
        %2066 = vmatprep.subr.mxu0 0.0
        %2067 = vmatpush1.msra.mxu0 0.0
        %2068 = vmatprep.subr.mxu0 0.0
        %2069 = vmatpush1.msra.mxu0 0.0
        %2070 = vmatprep.subr.mxu0 0.0
        %2071 = vmatpush1.msra.mxu0 0.0
        %2072 = vmatprep.subr.mxu0 0.0
        %2073 = vmatpush1.msra.mxu0 0.0
        %2074 = vmatprep.subr.mxu0 0.0
        %2075 = vmatpush1.msra.mxu0 0.0
        %2076 = vmatprep.subr.mxu0 0.0
        %2077 = vmatpush1.msra.mxu0 0.0
        %2078 = vmatprep.subr.mxu0 0.0
        %2079 = vmatpush1.msra.mxu0 0.0
        %2080 = vmatprep.subr.mxu0 0.0
        %2081 = vmatpush1.msra.mxu0 0.0
        %2082 = vmatprep.subr.mxu0 0.0
        %2083 = vmatpush1.msra.mxu0 0.0
        %2084 = vmatprep.subr.mxu0 0.0
        %2085 = vmatpush1.msra.mxu0 0.0
        %2086 = vmatprep.mubr.f32.mxu0 0.0
        %2087 = vmatmul.mubr.f32.gmra.mrb[0].mxu0 %v2020
        %v2088 = vpop.f32.mrb[0].mxu0
        %v2089 = vadd.f32 0.0, %v2088
        %v2090 = vpop.f32.mrb[0].mxu0
        %2091 = vdwg.mxu0
        %2093 = vrot.lane.b32.xlu0 %v2089, 16
        %v2094 = vpop.permute.xlu0 %2093
        %2096 = vst.msk [vmem:[#allocation3 + $0x8] sm:$0xff] %vm1413, %v2094
        %2097 = vrot.lane.b32.xlu0 %v896, 104
        %v2098 = vpop.permute.xlu0 %2097
        %2099 = vrot.lane.b32.xlu0 %v896, 72
        %v2100 = vpop.permute.xlu0 %2099
        %v2101 = vsel %vm902, %v2098, 0
        %v2103 = vsel %vm902, %v2100, 0
        %2105 = vmatprep.subr.mxu0 0.0
        %2106 = vmatpush1.xpose.msra.mxu0 %v2103
        %2107 = vmatprep.subr.mxu0 0.0
        %2108 = vmatpush1.xpose.msra.mxu0 0.0
        %2109 = vmatprep.subr.mxu0 0.0
        %2110 = vmatpush1.xpose.msra.mxu0 0.0
        %2111 = vmatprep.subr.mxu0 0.0
        %2112 = vmatpush1.xpose.msra.mxu0 0.0
        %2113 = vmatprep.subr.mxu0 0.0
        %2114 = vmatpush1.xpose.msra.mxu0 0.0
        %2115 = vmatprep.subr.mxu0 0.0
        %2116 = vmatpush1.xpose.msra.mxu0 0.0
        %2117 = vmatprep.subr.mxu0 0.0
        %2118 = vmatpush1.xpose.msra.mxu0 0.0
        %2119 = vmatprep.subr.mxu0 0.0
        %2120 = vmatpush1.xpose.msra.mxu0 0.0
        %2121 = vmatprep.subr.mxu0 0.0
        %2122 = vmatpush1.xpose.msra.mxu0 0.0
        %2123 = vmatprep.subr.mxu0 0.0
        %2124 = vmatpush1.xpose.msra.mxu0 0.0
        %2125 = vmatprep.subr.mxu0 0.0
        %2126 = vmatpush1.xpose.msra.mxu0 0.0
        %2127 = vmatprep.subr.mxu0 0.0
        %2128 = vmatpush1.xpose.msra.mxu0 0.0
        %2129 = vmatprep.subr.mxu0 0.0
        %2130 = vmatpush1.xpose.msra.mxu0 0.0
        %2131 = vmatprep.subr.mxu0 0.0
        %2132 = vmatpush1.xpose.msra.mxu0 0.0
        %2133 = vmatprep.subr.mxu0 0.0
        %2134 = vmatpush1.xpose.msra.mxu0 0.0
        %2135 = vmatprep.subr.mxu0 0.0
        %2136 = vmatpush1.xpose.msra.mxu0 0.0
        %2137 = vmatprep.subr.mxu0 0.0
        %2138 = vmatpush1.xpose.msra.mxu0 0.0
        %2139 = vmatprep.subr.mxu0 0.0
        %2140 = vmatpush1.xpose.msra.mxu0 0.0
        %2141 = vmatprep.subr.mxu0 0.0
        %2142 = vmatpush1.xpose.msra.mxu0 0.0
        %2143 = vmatprep.subr.mxu0 0.0
        %2144 = vmatpush1.xpose.msra.mxu0 0.0
        %2145 = vmatprep.subr.mxu0 0.0
        %2146 = vmatpush1.xpose.msra.mxu0 0.0
        %2147 = vmatprep.subr.mxu0 0.0
        %2148 = vmatpush1.xpose.msra.mxu0 0.0
        %2149 = vmatprep.subr.mxu0 0.0
        %2150 = vmatpush1.xpose.msra.mxu0 0.0
        %2151 = vmatprep.subr.mxu0 0.0
        %2152 = vmatpush1.xpose.msra.mxu0 0.0
        %2153 = vmatprep.subr.mxu0 0.0
        %2154 = vmatpush1.xpose.msra.mxu0 0.0
        %2155 = vmatprep.subr.mxu0 0.0
        %2156 = vmatpush1.xpose.msra.mxu0 0.0
        %2157 = vmatprep.subr.mxu0 0.0
        %2158 = vmatpush1.xpose.msra.mxu0 0.0
        %2159 = vmatprep.subr.mxu0 0.0
        %2160 = vmatpush1.xpose.msra.mxu0 0.0
        %2161 = vmatprep.subr.mxu0 0.0
        %2162 = vmatpush1.xpose.msra.mxu0 0.0
        %2163 = vmatprep.subr.mxu0 0.0
        %2164 = vmatpush1.xpose.msra.mxu0 0.0
        %2165 = vmatprep.subr.mxu0 0.0
        %2166 = vmatpush1.xpose.msra.mxu0 0.0
        %2167 = vmatprep.subr.mxu0 0.0
        %2168 = vmatpush1.xpose.msra.mxu0 0.0
        %2169 = vmatprep.mubr.f32.mxu0 0.0
        %2170 = vmatmul.mubr.f32.gmra.mrb[0].mxu0 %v2101
        %v2171 = vpop.f32.mrb[0].mxu0
        %v2172 = vadd.f32 0.0, %v2171
        %v2173 = vpop.f32.mrb[0].mxu0
        %2174 = vdwg.mxu0
        %v2175 = vmul.f32 %v2172, 0.35355338
        %v2176 = vsel %vm902, %v2175, -inf
        %2177 = vmax.xlane.f32.xlu0 %v2176
        %v2178 = vpop.xlane.xlu0 %2177
        %v2179 = vsub.f32 %v2175, %v2178
        %v2180 = vmul.f32 %v2179, 1.442695
        %v2181 = vpow.pop %v2180
        %v2182 = vsel %vm902, %v2181, 0.0
        %2183 = vadd.xlane.f32.xlu0 %v2182
        %v2184 = vpop.xlane.xlu0 %2183
        %v2185 = vrcp.pop %v2184
        %v2186 = vmul.f32 %v2181, %v2185
        %2187 = vrot.lane.b32.xlu0 %v896, 40
        %v2188 = vpop.permute.xlu0 %2187
        %v2191 = vsel %vm902, %v2186, 0
        %2193 = vmatprep.subr.mxu0 0.0
        %2194 = vmatpush1.msra.mxu0 %v2188
        %2195 = vmatprep.subr.mxu0 0.0
        %2196 = vmatpush1.msra.mxu0 0.0
        %2197 = vmatprep.subr.mxu0 0.0
        %2198 = vmatpush1.msra.mxu0 0.0
        %2199 = vmatprep.subr.mxu0 0.0
        %2200 = vmatpush1.msra.mxu0 0.0
        %2201 = vmatprep.subr.mxu0 0.0
        %2202 = vmatpush1.msra.mxu0 0.0
        %2203 = vmatprep.subr.mxu0 0.0
        %2204 = vmatpush1.msra.mxu0 0.0
        %2205 = vmatprep.subr.mxu0 0.0
        %2206 = vmatpush1.msra.mxu0 0.0
        %2207 = vmatprep.subr.mxu0 0.0
        %2208 = vmatpush1.msra.mxu0 0.0
        %2209 = vmatprep.subr.mxu0 0.0
        %2210 = vmatpush1.msra.mxu0 0.0
        %2211 = vmatprep.subr.mxu0 0.0
        %2212 = vmatpush1.msra.mxu0 0.0
        %2213 = vmatprep.subr.mxu0 0.0
        %2214 = vmatpush1.msra.mxu0 0.0
        %2215 = vmatprep.subr.mxu0 0.0
        %2216 = vmatpush1.msra.mxu0 0.0
        %2217 = vmatprep.subr.mxu0 0.0
        %2218 = vmatpush1.msra.mxu0 0.0
        %2219 = vmatprep.subr.mxu0 0.0
        %2220 = vmatpush1.msra.mxu0 0.0
        %2221 = vmatprep.subr.mxu0 0.0
        %2222 = vmatpush1.msra.mxu0 0.0
        %2223 = vmatprep.subr.mxu0 0.0
        %2224 = vmatpush1.msra.mxu0 0.0
        %2225 = vmatprep.subr.mxu0 0.0
        %2226 = vmatpush1.msra.mxu0 0.0
        %2227 = vmatprep.subr.mxu0 0.0
        %2228 = vmatpush1.msra.mxu0 0.0
        %2229 = vmatprep.subr.mxu0 0.0
        %2230 = vmatpush1.msra.mxu0 0.0
        %2231 = vmatprep.subr.mxu0 0.0
        %2232 = vmatpush1.msra.mxu0 0.0
        %2233 = vmatprep.subr.mxu0 0.0
        %2234 = vmatpush1.msra.mxu0 0.0
        %2235 = vmatprep.subr.mxu0 0.0
        %2236 = vmatpush1.msra.mxu0 0.0
        %2237 = vmatprep.subr.mxu0 0.0
        %2238 = vmatpush1.msra.mxu0 0.0
        %2239 = vmatprep.subr.mxu0 0.0
        %2240 = vmatpush1.msra.mxu0 0.0
        %2241 = vmatprep.subr.mxu0 0.0
        %2242 = vmatpush1.msra.mxu0 0.0
        %2243 = vmatprep.subr.mxu0 0.0
        %2244 = vmatpush1.msra.mxu0 0.0
        %2245 = vmatprep.subr.mxu0 0.0
        %2246 = vmatpush1.msra.mxu0 0.0
        %2247 = vmatprep.subr.mxu0 0.0
        %2248 = vmatpush1.msra.mxu0 0.0
        %2249 = vmatprep.subr.mxu0 0.0
        %2250 = vmatpush1.msra.mxu0 0.0
        %2251 = vmatprep.subr.mxu0 0.0
        %2252 = vmatpush1.msra.mxu0 0.0
        %2253 = vmatprep.subr.mxu0 0.0
        %2254 = vmatpush1.msra.mxu0 0.0
        %2255 = vmatprep.subr.mxu0 0.0
        %2256 = vmatpush1.msra.mxu0 0.0
        %2257 = vmatprep.mubr.f32.mxu0 0.0
        %2258 = vmatmul.mubr.f32.gmra.mrb[0].mxu0 %v2191
        %v2259 = vpop.f32.mrb[0].mxu0
        %v2260 = vadd.f32 0.0, %v2259
        %v2261 = vpop.f32.mrb[0].mxu0
        %2262 = vdwg.mxu0
        %2264 = vrot.lane.b32.xlu0 %v2260, 24
        %v2265 = vpop.permute.xlu0 %2264
        %2267 = vst.msk [vmem:[#allocation3 + $0x8] sm:$0xff] %vm1587, %v2265
        %v2268 = vld [vmem:[#allocation3] sm:$0xff]
        %v2269 = vld [vmem:[#allocation3 + $0x8] sm:$0xff]
        %v2270 = vld [vmem:[%s720] sm:$0xff]
        %v2271 = vld [vmem:[%s720 + $0x8] sm:$0xff]
        %v2272 = vld [vmem:[%s720 + $0x10] sm:$0xff]
        %v2273 = vld [vmem:[%s720 + $0x18] sm:$0xff]
        %v2274 = vld [vmem:[%s723] sm:$0x1]
        %v2276 = vlaneseq
        %v2277 = vshrl.u32 %v2276, 7
        %v2278 = vsub.s32 0, %v2277
        %v2279 = vrot.slane %v2274, %v2278
        %v2282 = vsel %vm763, %v2268, 0
        %v2285 = vsel %vm763, %v2269, 0
        %2287 = vmatprep.subr.mxu0 0.0
        %2288 = vmatpush1.msra.mxu0 %v2270
        %2289 = vmatprep.subr.mxu0 0.0
        %2290 = vmatpush1.msra.mxu0 %v2271
        %2291 = vmatprep.subr.mxu0 0.0
        %2292 = vmatpush1.msra.mxu0 %v2272
        %2293 = vmatprep.subr.mxu0 0.0
        %2294 = vmatpush1.msra.mxu0 %v2273
        %2295 = vmatprep.subr.mxu0 0.0
        %2296 = vmatpush1.msra.mxu0 0.0
        %2297 = vmatprep.subr.mxu0 0.0
        %2298 = vmatpush1.msra.mxu0 0.0
        %2299 = vmatprep.subr.mxu0 0.0
        %2300 = vmatpush1.msra.mxu0 0.0
        %2301 = vmatprep.subr.mxu0 0.0
        %2302 = vmatpush1.msra.mxu0 0.0
        %2303 = vmatprep.subr.mxu0 0.0
        %2304 = vmatpush1.msra.mxu0 0.0
        %2305 = vmatprep.subr.mxu0 0.0
        %2306 = vmatpush1.msra.mxu0 0.0
        %2307 = vmatprep.subr.mxu0 0.0
        %2308 = vmatpush1.msra.mxu0 0.0
        %2309 = vmatprep.subr.mxu0 0.0
        %2310 = vmatpush1.msra.mxu0 0.0
        %2311 = vmatprep.subr.mxu0 0.0
        %2312 = vmatpush1.msra.mxu0 0.0
        %2313 = vmatprep.subr.mxu0 0.0
        %2314 = vmatpush1.msra.mxu0 0.0
        %2315 = vmatprep.subr.mxu0 0.0
        %2316 = vmatpush1.msra.mxu0 0.0
        %2317 = vmatprep.subr.mxu0 0.0
        %2318 = vmatpush1.msra.mxu0 0.0
        %2319 = vmatprep.subr.mxu0 0.0
        %2320 = vmatpush1.msra.mxu0 0.0
        %2321 = vmatprep.subr.mxu0 0.0
        %2322 = vmatpush1.msra.mxu0 0.0
        %2323 = vmatprep.subr.mxu0 0.0
        %2324 = vmatpush1.msra.mxu0 0.0
        %2325 = vmatprep.subr.mxu0 0.0
        %2326 = vmatpush1.msra.mxu0 0.0
        %2327 = vmatprep.subr.mxu0 0.0
        %2328 = vmatpush1.msra.mxu0 0.0
        %2329 = vmatprep.subr.mxu0 0.0
        %2330 = vmatpush1.msra.mxu0 0.0
        %2331 = vmatprep.subr.mxu0 0.0
        %2332 = vmatpush1.msra.mxu0 0.0
        %2333 = vmatprep.subr.mxu0 0.0
        %2334 = vmatpush1.msra.mxu0 0.0
        %2335 = vmatprep.subr.mxu0 0.0
        %2336 = vmatpush1.msra.mxu0 0.0
        %2337 = vmatprep.subr.mxu0 0.0
        %2338 = vmatpush1.msra.mxu0 0.0
        %2339 = vmatprep.subr.mxu0 0.0
        %2340 = vmatpush1.msra.mxu0 0.0
        %2341 = vmatprep.subr.mxu0 0.0
        %2342 = vmatpush1.msra.mxu0 0.0
        %2343 = vmatprep.subr.mxu0 0.0
        %2344 = vmatpush1.msra.mxu0 0.0
        %2345 = vmatprep.subr.mxu0 0.0
        %2346 = vmatpush1.msra.mxu0 0.0
        %2347 = vmatprep.subr.mxu0 0.0
        %2348 = vmatpush1.msra.mxu0 0.0
        %2349 = vmatprep.subr.mxu0 0.0
        %2350 = vmatpush1.msra.mxu0 0.0
        %2351 = vmatprep.mubr.f32.mxu0 0.0
        %2352 = vmatmul.mubr.f32.gmra.mrb[0].mxu0 %v2282
        %v2353 = vpop.f32.mrb[0].mxu0
        %v2354 = vadd.f32 %v2279, %v2353
        %v2355 = vpop.f32.mrb[0].mxu0
        %2356 = vmatprep.mubr.f32.mxu0 0.0
        %2357 = vmatmul.mubr.f32.gmra.mrb[0].mxu0 %v2285
        %v2358 = vpop.f32.mrb[0].mxu0
        %v2359 = vadd.f32 %v2279, %v2358
        %v2360 = vpop.f32.mrb[0].mxu0
        %2361 = vdwg.mxu0
        %v2362 = vadd.f32 %v759, %v2354
        %v2363 = vadd.f32 %v760, %v2359
        %v2364 = vld [vmem:[%s726] sm:$0x1]
        %v2365 = vld [vmem:[%s729] sm:$0x1]
        %v2366 = vsel %vm763, %v2362, 0.0
        %2367 = vadd.xlane.f32.xlu0 %v2366
        %v2368 = vpop.xlane.xlu0 %2367
        %v2369 = vsel %vm763, %v2363, 0.0
        %2370 = vadd.xlane.f32.xlu0 %v2369
        %v2371 = vpop.xlane.xlu0 %2370
        %v2372 = vmul.f32 %v2368, %v770
        %v2373 = vmul.f32 %v2371, %v770
        %v2374 = vsub.f32 %v2362, %v2372
        %v2375 = vsub.f32 %v2363, %v2373
        %v2376 = vmul.f32 %v2374, %v2374
        %v2377 = vmul.f32 %v2375, %v2375
        %v2378 = vsel %vm763, %v2376, 0.0
        %2379 = vadd.xlane.f32.xlu0 %v2378
        %v2380 = vpop.xlane.xlu0 %2379
        %v2381 = vsel %vm763, %v2377, 0.0
        %2382 = vadd.xlane.f32.xlu0 %v2381
        %v2383 = vpop.xlane.xlu0 %2382
        %v2384 = vmul.f32 %v2380, %v770
        %v2385 = vmul.f32 %v2383, %v770
        %v2386 = vadd.f32 %v2384, 1e-05
        %v2387 = vadd.f32 %v2385, 1e-05
        %v2388 = vrsqrt.pop %v2386
        %v2389 = vrsqrt.pop %v2387
        %v2390 = vmul.f32 %v2374, %v2388
        %v2391 = vmul.f32 %v2375, %v2389
        %v2393 = vlaneseq
        %v2394 = vshrl.u32 %v2393, 7
        %v2395 = vsub.s32 0, %v2394
        %v2396 = vrot.slane %v2364, %v2395
        %v2398 = vmul.f32 %v2390, %v2396
        %v2399 = vmul.f32 %v2391, %v2396
        %v2401 = vlaneseq
        %v2402 = vshrl.u32 %v2401, 7
        %v2403 = vsub.s32 0, %v2402
        %v2404 = vrot.slane %v2365, %v2403
        %v2406 = vadd.f32 %v2398, %v2404
        %v2407 = vadd.f32 %v2399, %v2404
        %v2408 = vld [vmem:[%s734] sm:$0xff]
        %v2409 = vld [vmem:[%s734 + $0x8] sm:$0xff]
        %v2410 = vld [vmem:[%s734 + $0x10] sm:$0xff]
        %v2411 = vld [vmem:[%s734 + $0x18] sm:$0xff]
        %v2412 = vld [vmem:[%s737] sm:$0x1]
        %v2414 = vlaneseq
        %v2415 = vshrl.u32 %v2414, 7
        %v2416 = vsub.s32 0, %v2415
        %v2417 = vrot.slane %v2412, %v2416
        %v2420 = vsel %vm763, %v2406, 0
        %v2423 = vsel %vm763, %v2407, 0
        %2425 = vmatprep.subr.mxu0 0.0
        %2426 = vmatpush1.msra.mxu0 %v2408
        %2427 = vmatprep.subr.mxu0 0.0
        %2428 = vmatpush1.msra.mxu0 %v2409
        %2429 = vmatprep.subr.mxu0 0.0
        %2430 = vmatpush1.msra.mxu0 %v2410
        %2431 = vmatprep.subr.mxu0 0.0
        %2432 = vmatpush1.msra.mxu0 %v2411
        %2433 = vmatprep.subr.mxu0 0.0
        %2434 = vmatpush1.msra.mxu0 0.0
        %2435 = vmatprep.subr.mxu0 0.0
        %2436 = vmatpush1.msra.mxu0 0.0
        %2437 = vmatprep.subr.mxu0 0.0
        %2438 = vmatpush1.msra.mxu0 0.0
        %2439 = vmatprep.subr.mxu0 0.0
        %2440 = vmatpush1.msra.mxu0 0.0
        %2441 = vmatprep.subr.mxu0 0.0
        %2442 = vmatpush1.msra.mxu0 0.0
        %2443 = vmatprep.subr.mxu0 0.0
        %2444 = vmatpush1.msra.mxu0 0.0
        %2445 = vmatprep.subr.mxu0 0.0
        %2446 = vmatpush1.msra.mxu0 0.0
        %2447 = vmatprep.subr.mxu0 0.0
        %2448 = vmatpush1.msra.mxu0 0.0
        %2449 = vmatprep.subr.mxu0 0.0
        %2450 = vmatpush1.msra.mxu0 0.0
        %2451 = vmatprep.subr.mxu0 0.0
        %2452 = vmatpush1.msra.mxu0 0.0
        %2453 = vmatprep.subr.mxu0 0.0
        %2454 = vmatpush1.msra.mxu0 0.0
        %2455 = vmatprep.subr.mxu0 0.0
        %2456 = vmatpush1.msra.mxu0 0.0
        %2457 = vmatprep.subr.mxu0 0.0
        %2458 = vmatpush1.msra.mxu0 0.0
        %2459 = vmatprep.subr.mxu0 0.0
        %2460 = vmatpush1.msra.mxu0 0.0
        %2461 = vmatprep.subr.mxu0 0.0
        %2462 = vmatpush1.msra.mxu0 0.0
        %2463 = vmatprep.subr.mxu0 0.0
        %2464 = vmatpush1.msra.mxu0 0.0
        %2465 = vmatprep.subr.mxu0 0.0
        %2466 = vmatpush1.msra.mxu0 0.0
        %2467 = vmatprep.subr.mxu0 0.0
        %2468 = vmatpush1.msra.mxu0 0.0
        %2469 = vmatprep.subr.mxu0 0.0
        %2470 = vmatpush1.msra.mxu0 0.0
        %2471 = vmatprep.subr.mxu0 0.0
        %2472 = vmatpush1.msra.mxu0 0.0
        %2473 = vmatprep.subr.mxu0 0.0
        %2474 = vmatpush1.msra.mxu0 0.0
        %2475 = vmatprep.subr.mxu0 0.0
        %2476 = vmatpush1.msra.mxu0 0.0
        %2477 = vmatprep.subr.mxu0 0.0
        %2478 = vmatpush1.msra.mxu0 0.0
        %2479 = vmatprep.subr.mxu0 0.0
        %2480 = vmatpush1.msra.mxu0 0.0
        %2481 = vmatprep.subr.mxu0 0.0
        %2482 = vmatpush1.msra.mxu0 0.0
        %2483 = vmatprep.subr.mxu0 0.0
        %2484 = vmatpush1.msra.mxu0 0.0
        %2485 = vmatprep.subr.mxu0 0.0
        %2486 = vmatpush1.msra.mxu0 0.0
        %2487 = vmatprep.subr.mxu0 0.0
        %2488 = vmatpush1.msra.mxu0 0.0
        %2489 = vmatprep.mubr.f32.mxu0 0.0
        %2490 = vmatmul.mubr.f32.gmra.mrb[0].mxu0 %v2420
        %v2491 = vpop.f32.mrb[0].mxu0
        %v2492 = vadd.f32 %v2417, %v2491
        %v2493 = vpop.f32.mrb[0].mxu0
        %2494 = vmatprep.mubr.f32.mxu0 0.0
        %2495 = vmatmul.mubr.f32.gmra.mrb[0].mxu0 %v2423
        %v2496 = vpop.f32.mrb[0].mxu0
        %v2497 = vadd.f32 %v2417, %v2496
        %v2498 = vpop.f32.mrb[0].mxu0
        %2499 = vdwg.mxu0
        %v2500 = vmax.f32 %v2492, 0.0
        %v2501 = vmax.f32 %v2497, 0.0
        %v2502 = vld [vmem:[%s742] sm:$0xff]
        %v2503 = vld [vmem:[%s742 + $0x8] sm:$0xff]
        %v2504 = vld [vmem:[%s742 + $0x10] sm:$0xff]
        %v2505 = vld [vmem:[%s742 + $0x18] sm:$0xff]
        %v2506 = vld [vmem:[%s742 + $0x20] sm:$0xff]
        %v2507 = vld [vmem:[%s742 + $0x28] sm:$0xff]
        %v2508 = vld [vmem:[%s742 + $0x30] sm:$0xff]
        %v2509 = vld [vmem:[%s742 + $0x38] sm:$0xff]
        %v2510 = vld [vmem:[%s745] sm:$0x1]
        %v2512 = vlaneseq
        %v2513 = vshrl.u32 %v2512, 7
        %v2514 = vsub.s32 0, %v2513
        %v2515 = vrot.slane %v2510, %v2514
        %vm2517 = vcmask 523264
        %v2519 = vsel %vm2517, %v2500, 0
        %v2522 = vsel %vm2517, %v2501, 0
        %2524 = vmatprep.subr.mxu0 0.0
        %2525 = vmatpush1.msra.mxu0 %v2502
        %2526 = vmatprep.subr.mxu0 0.0
        %2527 = vmatpush1.msra.mxu0 %v2503
        %2528 = vmatprep.subr.mxu0 0.0
        %2529 = vmatpush1.msra.mxu0 %v2504
        %2530 = vmatprep.subr.mxu0 0.0
        %2531 = vmatpush1.msra.mxu0 %v2505
        %2532 = vmatprep.subr.mxu0 0.0
        %2533 = vmatpush1.msra.mxu0 %v2506
        %2534 = vmatprep.subr.mxu0 0.0
        %2535 = vmatpush1.msra.mxu0 %v2507
        %2536 = vmatprep.subr.mxu0 0.0
        %2537 = vmatpush1.msra.mxu0 %v2508
        %2538 = vmatprep.subr.mxu0 0.0
        %2539 = vmatpush1.msra.mxu0 %v2509
        %2540 = vmatprep.subr.mxu0 0.0
        %2541 = vmatpush1.msra.mxu0 0.0
        %2542 = vmatprep.subr.mxu0 0.0
        %2543 = vmatpush1.msra.mxu0 0.0
        %2544 = vmatprep.subr.mxu0 0.0
        %2545 = vmatpush1.msra.mxu0 0.0
        %2546 = vmatprep.subr.mxu0 0.0
        %2547 = vmatpush1.msra.mxu0 0.0
        %2548 = vmatprep.subr.mxu0 0.0
        %2549 = vmatpush1.msra.mxu0 0.0
        %2550 = vmatprep.subr.mxu0 0.0
        %2551 = vmatpush1.msra.mxu0 0.0
        %2552 = vmatprep.subr.mxu0 0.0
        %2553 = vmatpush1.msra.mxu0 0.0
        %2554 = vmatprep.subr.mxu0 0.0
        %2555 = vmatpush1.msra.mxu0 0.0
        %2556 = vmatprep.subr.mxu0 0.0
        %2557 = vmatpush1.msra.mxu0 0.0
        %2558 = vmatprep.subr.mxu0 0.0
        %2559 = vmatpush1.msra.mxu0 0.0
        %2560 = vmatprep.subr.mxu0 0.0
        %2561 = vmatpush1.msra.mxu0 0.0
        %2562 = vmatprep.subr.mxu0 0.0
        %2563 = vmatpush1.msra.mxu0 0.0
        %2564 = vmatprep.subr.mxu0 0.0
        %2565 = vmatpush1.msra.mxu0 0.0
        %2566 = vmatprep.subr.mxu0 0.0
        %2567 = vmatpush1.msra.mxu0 0.0
        %2568 = vmatprep.subr.mxu0 0.0
        %2569 = vmatpush1.msra.mxu0 0.0
        %2570 = vmatprep.subr.mxu0 0.0
        %2571 = vmatpush1.msra.mxu0 0.0
        %2572 = vmatprep.subr.mxu0 0.0
        %2573 = vmatpush1.msra.mxu0 0.0
        %2574 = vmatprep.subr.mxu0 0.0
        %2575 = vmatpush1.msra.mxu0 0.0
        %2576 = vmatprep.subr.mxu0 0.0
        %2577 = vmatpush1.msra.mxu0 0.0
        %2578 = vmatprep.subr.mxu0 0.0
        %2579 = vmatpush1.msra.mxu0 0.0
        %2580 = vmatprep.subr.mxu0 0.0
        %2581 = vmatpush1.msra.mxu0 0.0
        %2582 = vmatprep.subr.mxu0 0.0
        %2583 = vmatpush1.msra.mxu0 0.0
        %2584 = vmatprep.subr.mxu0 0.0
        %2585 = vmatpush1.msra.mxu0 0.0
        %2586 = vmatprep.subr.mxu0 0.0
        %2587 = vmatpush1.msra.mxu0 0.0
        %2588 = vmatprep.mubr.f32.mxu0 0.0
        %2589 = vmatmul.mubr.f32.gmra.mrb[0].mxu0 %v2519
        %v2590 = vpop.f32.mrb[0].mxu0
        %v2591 = vadd.f32 %v2515, %v2590
        %v2592 = vpop.f32.mrb[0].mxu0
        %2593 = vmatprep.mubr.f32.mxu0 0.0
        %2594 = vmatmul.mubr.f32.gmra.mrb[0].mxu0 %v2522
        %v2595 = vpop.f32.mrb[0].mxu0
        %v2596 = vadd.f32 %v2515, %v2595
        %v2597 = vpop.f32.mrb[0].mxu0
        %2598 = vdwg.mxu0
        %v2599 = vadd.f32 %v2362, %v2591
        %v2600 = vadd.f32 %v2363, %v2596
        %2601 = vst.msk [vmem:[#allocation2] sm:$0xff] %vm763, %v2599
        %2602 = vst.msk [vmem:[#allocation2 + $0x8] sm:$0xff] %vm763, %v2600
        %p2603 = scmp.eq.s32.totalorder %s35, 1
        // Predicated region
        $region97: #{tpu_custom_call.1} parent=83 // pred_check
          %p2604 = pneg %p2603
        $region98: #{tpu_custom_call.1} parent=83 // pred_check_branch
          %2606 = sbr.rel (%p2604) target = $region100
        $region99: #{tpu_custom_call.1} parent=83 // pred_region
          %v2607 = vld [vmem:[%s14] sm:$0x1]
          %v2608 = vld [vmem:[%s15] sm:$0x1]
          %vm2609 = vcmask 253952
          %v2610 = vsel %vm2609, %v2599, 0.0
          %2611 = vadd.xlane.f32.xlu0 %v2610
          %v2612 = vpop.xlane.xlu0 %2611
          %v2613 = vmul.f32 %v2612, %v770
          %v2614 = vsub.f32 %v2599, %v2613
          %v2615 = vmul.f32 %v2614, %v2614
          %v2616 = vsel %vm2609, %v2615, 0.0
          %2617 = vadd.xlane.f32.xlu0 %v2616
          %v2618 = vpop.xlane.xlu0 %2617
          %v2619 = vmul.f32 %v2618, %v770
          %v2620 = vadd.f32 %v2619, 1e-05
          %v2621 = vrsqrt.pop %v2620
          %v2622 = vmul.f32 %v2614, %v2621
          %v2623 = vmul.f32 %v2622, %v2607
          %v2624 = vadd.f32 %v2623, %v2608
          %2625 = vst.msk [vmem:[#allocation9] sm:$0x1] %vm2609, %v2624
          %v2626 = vld [vmem:[%s14] sm:$0x1]
          %v2627 = vld [vmem:[%s15] sm:$0x1]
          %v2628 = vsel %vm2609, %v2600, 0.0
          %2629 = vadd.xlane.f32.xlu0 %v2628
          %v2630 = vpop.xlane.xlu0 %2629
          %v2631 = vmul.f32 %v2630, %v770
          %v2632 = vsub.f32 %v2600, %v2631
          %v2633 = vmul.f32 %v2632, %v2632
          %v2634 = vsel %vm2609, %v2633, 0.0
          %2635 = vadd.xlane.f32.xlu0 %v2634
          %v2636 = vpop.xlane.xlu0 %2635
          %v2637 = vmul.f32 %v2636, %v770
          %v2638 = vadd.f32 %v2637, 1e-05
          %v2639 = vrsqrt.pop %v2638
          %v2640 = vmul.f32 %v2632, %v2639
          %v2641 = vmul.f32 %v2640, %v2626
          %v2642 = vadd.f32 %v2641, %v2627
          %2643 = vst.msk [vmem:[#allocation9 + $0x1] sm:$0x1] %vm2609, %v2642
        $region100: #{tpu_custom_call.1} parent=83 // pred_fallthru
          _
        %s2644 = sand.u32 %s460, 1
        %s2645 = scalar_lea.sflag [#allocation11], %s2644
        %s2646 = sand.u32 %s460, 1
        %s2647 = smul.addr %s2646, 32
        %s2648 = scalar_lea.vmem [#allocation10], %s2647
        // Predicated region
        $region101: #{tpu_custom_call.1} parent=83 // pred_check
          %p2649 = pneg %p444
        $region102: #{tpu_custom_call.1} parent=83 // pred_check_branch
          %2651 = sbr.rel (%p2649) target = $region104
        $region103: #{tpu_custom_call.1} parent=83 // pred_region
          %s2653 = ssub.s32 32, 32
          %2654 = vsyncadd [#allocation6], %s2653
          %s2656 = sshll.u32 [#allocation9], 4
          %s2657 = int_to_ptr.vmem [resolvable:$true] %s2656
          %2659 = dma.vmem_to_hbm [thread:$0]  %s2657, 32, %s16, [#allocation6]
        $region104: #{tpu_custom_call.1} parent=83 // pred_fallthru
          _
        // Predicated region
        $region105: #{tpu_custom_call.1} parent=83 // pred_check
          %p2660 = pneg %p470
        $region106: #{tpu_custom_call.1} parent=83 // pred_check_branch
          %2662 = sbr.rel (%p2660) target = $region108
        $region107: #{tpu_custom_call.1} parent=83 // pred_region
          %s2664 = ssub.s32 512, 512
          %2665 = vsyncadd %s2645, %s2664
          %s2666 = smul.addr %s35, 4
          %s2667 = smul.addr %s2666, 128
          %s2668 = scalar_lea.hbm %s17, %s2667
          %s2669 = sshll.u32 %s2648, 4
          %s2670 = int_to_ptr.vmem [resolvable:$true] %s2669
          %2675 = dma.vmem_to_hbm [thread:$0]  %s2670, 512, %s2668, %s2645, 128, 128, 8
        $region108: #{tpu_custom_call.1} parent=83 // pred_fallthru
          _
        // Predicated region
        $region109: #{tpu_custom_call.1} parent=83 // pred_check
          %p2676 = pneg %p444
        $region110: #{tpu_custom_call.1} parent=83 // pred_check_branch
          %2678 = sbr.rel (%p2676) target = $region112
        $region111: #{tpu_custom_call.1} parent=83 // pred_region
          %2679 = dma.done [#allocation6], 32
        $region112: #{tpu_custom_call.1} parent=83 // pred_fallthru
          _
      $region84: #{tpu_custom_call.1} parent=5 // pred_fallthru
        _
      %p2680 = scmp.le.s32.totalorder 2, %s30
      // Predicated region
      $region113: #{tpu_custom_call.1} parent=5 // pred_check
        %p2681 = pneg %p2680
      $region114: #{tpu_custom_call.1} parent=5 // pred_check_branch
        %2683 = sbr.rel (%p2681) target = $region116
      $region115: #{tpu_custom_call.1} parent=5 // pred_region
        %s2684 = ssub.s32 %s30, 2
        // Predicated region
        $region117: #{tpu_custom_call.1} parent=115 // pred_check
          %p2685 = pneg %p476
        $region118: #{tpu_custom_call.1} parent=115 // pred_check_branch
          %2687 = sbr.rel (%p2685) target = $region120
        $region119: #{tpu_custom_call.1} parent=115 // pred_region
          %s2688 = sand.u32 %s461, 1
          %s2689 = scalar_lea.sflag [#allocation11], %s2688
          %s2690 = sand.u32 %s461, 1
          %s2691 = smul.addr %s2690, 32
          %s2692 = scalar_lea.vmem [#allocation10], %s2691
          %2693 = dma.done %s2689, 512
        $region120: #{tpu_custom_call.1} parent=115 // pred_fallthru
          _
      $region116: #{tpu_custom_call.1} parent=5 // pred_fallthru
        _
    $region6: #{tpu_custom_call.1} parent=1 // loop_footer
      %s34 = sadd.s32 1, %s30
    $region7: #{tpu_custom_call.1} parent=1 // loop_footer_branch
      %29 = sbr.rel target = $region3
    $region8: #{tpu_custom_call.1} parent=1 // loop_exit
      _
    %2694 = vsyncpa [#allocation5], 1
    %s2695 = scalar_lea.sflag [#allocation5], 1
    %2696 = vsyncpa %s2695, 1
    %2697 = vsyncpa [#allocation8], 1
    %2698 = vsyncpa [#allocation6], 1
    %s2699 = scalar_lea.sflag [#allocation6], 1
    %2700 = vsyncpa %s2699, 1
    %2701 = vsyncpa [#allocation11], 1
    %s2702 = scalar_lea.sflag [#allocation11], 1
    %2703 = vsyncpa %s2702, 1

</llo_original>
